<compile_context>
chip_gen: v7x
topology: tpu7x:2x2x1
jax: 0.10.0
libtpu: 0.0.40
codegen_flags: <defaults>
</compile_context>

<pallas_src>
import jax
import jax.numpy as jnp
from jax.experimental import pallas as pl
from jax.experimental.pallas import tpu as pltpu

VOCAB = 512
HIDDEN = 768          # BERT hidden size -> pooler_output dim
NUM_CLASSES = 4
OUT_PAD = 128         # lane-dense padded logits width
MAX_SEQ = 64


def _round_up(x, m):
    return ((x + m - 1) // m) * m


def validator_kernel(emb_ref, mask_ref,
                     wp_ref, bp_ref,
                     w1_ref, b1_ref,
                     w2_ref, b2_ref,
                     w3_ref, b3_ref,
                     out_ref):
    # emb tile [TB, S, H] bf16 (HBM traffic halved), upcast for the f32 VPU path.
    emb = emb_ref[...].astype(jnp.float32)
    mask = mask_ref[...]                      # [TB, S] f32 (0/1)

    # TODO(synk): the pretrained SciBERT transformer stack itself has no clean
    # in-script equivalent (checkpoint load); its pooled sentence representation
    # is stood in for by an attention-mask-weighted mean over token embeddings.
    masked = emb * mask[:, :, None]                                   # [TB, S, H]
    summed = jnp.sum(masked, axis=1)                                  # [TB, H]
    denom = jnp.maximum(jnp.sum(mask, axis=1, keepdims=True), 1.0)    # [TB, 1]
    seq_repr = summed / denom                                         # [TB, H] f32

    # BERT pooler: dense(768, 768) + tanh  -> pooler_output
    # bf16 x bf16 MXU matmuls with f32 accumulation; biases stay f32.
    pooled = jnp.tanh(
        jnp.dot(seq_repr.astype(jnp.bfloat16), wp_ref[...],
                preferred_element_type=jnp.float32) + bp_ref[...])

    # classifier: 768 -> 512 -> ReLU -> Dropout(0.1, eval: identity)
    #             -> 512 -> 128 -> ReLU -> 128 -> 4 (padded to 128 lanes)
    h1 = jnp.dot(pooled.astype(jnp.bfloat16), w1_ref[...],
                 preferred_element_type=jnp.float32) + b1_ref[...]
    h1 = jnp.maximum(h1, 0.0)
    h2 = jnp.dot(h1.astype(jnp.bfloat16), w2_ref[...],
                 preferred_element_type=jnp.float32) + b2_ref[...]
    h2 = jnp.maximum(h2, 0.0)
    logits = jnp.dot(h2.astype(jnp.bfloat16), w3_ref[...],
                     preferred_element_type=jnp.float32) + b3_ref[...]
    out_ref[...] = logits.astype(out_ref.dtype)      # [TB, 128] lane-dense store


def init_params(key):
    ks = jax.random.split(key, 10)

    def dense(k, fan_in, fan_out):
        w = jax.random.normal(k, (fan_in, fan_out), jnp.float32) * (1.0 / jnp.sqrt(fan_in))
        b = jnp.zeros((1, fan_out), jnp.float32)
        return w, b

    wp, bp = dense(ks[0], HIDDEN, HIDDEN)
    w1, b1 = dense(ks[1], HIDDEN, 512)
    w2, b2 = dense(ks[2], 512, 128)
    w3, b3 = dense(ks[3], 128, NUM_CLASSES)
    word_emb = jax.random.normal(ks[4], (VOCAB, HIDDEN), jnp.float32) * 0.02
    pos_emb = jax.random.normal(ks[5], (MAX_SEQ, HIDDEN), jnp.float32) * 0.02
    return dict(word_emb=word_emb, pos_emb=pos_emb,
                wp=wp, bp=bp, w1=w1, b1=b1, w2=w2, b2=b2, w3=w3, b3=b3)


def science_validator_forward(input_ids, attention_mask, params, *, tb=None):
    B, S = input_ids.shape

    # glue: embedding gather + position embeddings (plain JAX).
    # TODO(synk): could be fused into the kernel via PrefetchScalarGridSpec +
    # pl.Element-indexed word_emb to skip one HBM round-trip of the activations.
    emb = (params["word_emb"][input_ids]
           + params["pos_emb"][None, :S, :]).astype(jnp.bfloat16)     # [B, S, H]
    mask = attention_mask.astype(jnp.float32)                         # [B, S]

    # batch tile: 128 rows max (matches v5e MXU rows; good occupancy on v6e/v7x),
    # padded to a sublane multiple of 8 for small batches.
    if tb is None:
        tb = min(128, _round_up(B, 8))
    b_pad = _round_up(B, tb)
    if b_pad != B:
        emb = jnp.pad(emb, ((0, b_pad - B), (0, 0), (0, 0)))
        mask = jnp.pad(mask, ((0, b_pad - B), (0, 0)))     # padded rows: mask=0

    # bf16 weights (halves weight DMA); f32 biases; pad final layer 4 -> 128 lanes.
    wp = params["wp"].astype(jnp.bfloat16)
    bp = params["bp"]
    w1 = params["w1"].astype(jnp.bfloat16)
    b1 = params["b1"]
    w2 = params["w2"].astype(jnp.bfloat16)
    b2 = params["b2"]
    w3 = jnp.pad(params["w3"], ((0, 0), (0, OUT_PAD - NUM_CLASSES))).astype(jnp.bfloat16)
    b3 = jnp.pad(params["b3"], ((0, 0), (0, OUT_PAD - NUM_CLASSES)))

    def resident(arr):
        # full-array block, same block every grid step -> stays in VMEM.
        return pl.BlockSpec(arr.shape, lambda i: (0, 0))

    in_specs = [
        pl.BlockSpec((tb, S, HIDDEN), lambda i: (i, 0, 0)),   # emb tile (pipelined)
        pl.BlockSpec((tb, S), lambda i: (i, 0)),              # mask tile (pipelined)
        resident(wp), resident(bp),
        resident(w1), resident(b1),
        resident(w2), resident(b2),
        resident(w3), resident(b3),
    ]
    out_specs = pl.BlockSpec((tb, OUT_PAD), lambda i: (i, 0))

    # tight VMEM budget: resident weights + double-buffered activation tiles + slack.
    weight_bytes = 2 * (wp.size + w1.size + w2.size + w3.size) \
        + 4 * (bp.size + b1.size + b2.size + b3.size)
    tile_bytes = 2 * (tb * S * HIDDEN * 2 + tb * S * 4 + tb * OUT_PAD * 4)
    vmem_limit = min(int(weight_bytes + tile_bytes + (8 << 20)), 32 << 20)

    out = pl.pallas_call(
        validator_kernel,
        out_shape=jax.ShapeDtypeStruct((b_pad, OUT_PAD), jnp.float32),
        grid=(b_pad // tb,),
        in_specs=in_specs,
        out_specs=out_specs,
        compiler_params=pltpu.CompilerParams(
            dimension_semantics=("parallel",),      # shard batch tiles over v7x TCs
            vmem_limit_bytes=vmem_limit),
    )(emb, mask, wp, bp, w1, b1, w2, b2, w3, b3)

    return out[:B, :NUM_CLASSES]


if __name__ == "__main__":
    key = jax.random.PRNGKey(0)
    k_params, k_ids = jax.random.split(key)

    B, S = 2, 8
    params = init_params(k_params)
    input_ids = jax.random.randint(k_ids, (B, S), 0, VOCAB, dtype=jnp.int32)
    # second sequence is padded after 5 tokens
    lengths = jnp.array([[S], [5]], dtype=jnp.int32)
    attention_mask = (jnp.arange(S, dtype=jnp.int32)[None, :] < lengths).astype(jnp.int32)

    logits = science_validator_forward(input_ids, attention_mask, params)
    jax.block_until_ready(logits)
    assert logits.shape == (B, NUM_CLASSES) and logits.dtype == jnp.float32
    assert bool(jnp.all(jnp.isfinite(logits)))
    print("KERNEL_OK")
</pallas_src>

<mosaic_0001>
module attributes {stable_mosaic.version = 11 : i64} {
  func.func @validator_kernel(%arg0: i32, %arg1: memref<8x8x768xbf16, #tpu.memory_space<vmem>>, %arg2: memref<8x8xf32, #tpu.memory_space<vmem>>, %arg3: memref<768x768xbf16, #tpu.memory_space<vmem>>, %arg4: memref<1x768xf32, #tpu.memory_space<vmem>>, %arg5: memref<768x512xbf16, #tpu.memory_space<vmem>>, %arg6: memref<1x512xf32, #tpu.memory_space<vmem>>, %arg7: memref<512x128xbf16, #tpu.memory_space<vmem>>, %arg8: memref<1x128xf32, #tpu.memory_space<vmem>>, %arg9: memref<128x128xbf16, #tpu.memory_space<vmem>>, %arg10: memref<1x128xf32, #tpu.memory_space<vmem>>, %arg11: memref<8x128xf32, #tpu.memory_space<vmem>>) attributes {dimension_semantics = [#tpu.dimension_semantics<parallel>], iteration_bounds = array<i64: 1>, scalar_prefetch = 0 : i64, scratch_operands = 0 : i64, tpu.core_type = #tpu.core_type<tc>, window_params = [{transform_indices = @transform_0, window_bounds = array<i64: 8, 8, 768>}, {transform_indices = @transform_1, window_bounds = array<i64: 8, 8>}, {pipeline_mode = #tpu.pipeline_mode<synchronous>, transform_indices = @transform_2, window_bounds = array<i64: 768, 768>}, {pipeline_mode = #tpu.pipeline_mode<synchronous>, transform_indices = @transform_3, window_bounds = array<i64: 1, 768>}, {pipeline_mode = #tpu.pipeline_mode<synchronous>, transform_indices = @transform_4, window_bounds = array<i64: 768, 512>}, {pipeline_mode = #tpu.pipeline_mode<synchronous>, transform_indices = @transform_5, window_bounds = array<i64: 1, 512>}, {pipeline_mode = #tpu.pipeline_mode<synchronous>, transform_indices = @transform_6, window_bounds = array<i64: 512, 128>}, {pipeline_mode = #tpu.pipeline_mode<synchronous>, transform_indices = @transform_7, window_bounds = array<i64: 1, 128>}, {pipeline_mode = #tpu.pipeline_mode<synchronous>, transform_indices = @transform_8, window_bounds = array<i64: 128, 128>}, {pipeline_mode = #tpu.pipeline_mode<synchronous>, transform_indices = @transform_9, window_bounds = array<i64: 1, 128>}, {transform_indices = @transform_10, window_bounds = array<i64: 8, 128>}]} {
    %c0 = arith.constant 0 : index
    %c0_0 = arith.constant 0 : index
    %c0_1 = arith.constant 0 : index
    %0 = vector.load %arg1[%c0, %c0_0, %c0_1] : memref<8x8x768xbf16, #tpu.memory_space<vmem>>, vector<8x8x768xbf16>
    %1 = arith.extf %0 : vector<8x8x768xbf16> to vector<8x8x768xf32>
    %c0_2 = arith.constant 0 : index
    %c0_3 = arith.constant 0 : index
    %2 = vector.load %arg2[%c0_2, %c0_3] : memref<8x8xf32, #tpu.memory_space<vmem>>, vector<8x8xf32>
    %3 = vector.shape_cast %2 : vector<8x8xf32> to vector<8x8x1xf32>
    %4 = vector.broadcast %3 : vector<8x8x1xf32> to vector<8x8x768xf32>
    %5 = arith.mulf %1, %4 : vector<8x8x768xf32>
    %cst = arith.constant dense<0.000000e+00> : vector<8x768xf32>
    %6 = vector.multi_reduction <add>, %5, %cst [1] : vector<8x8x768xf32> to vector<8x768xf32>
    %cst_4 = arith.constant dense<0.000000e+00> : vector<8xf32>
    %7 = vector.multi_reduction <add>, %2, %cst_4 [1] : vector<8x8xf32> to vector<8xf32>
    %8 = vector.shape_cast %7 : vector<8xf32> to vector<8x1xf32>
    %cst_5 = arith.constant 1.000000e+00 : f32
    %9 = vector.broadcast %cst_5 : f32 to vector<8x1xf32>
    %10 = arith.maximumf %8, %9 : vector<8x1xf32>
    %11 = vector.broadcast %10 : vector<8x1xf32> to vector<8x768xf32>
    %12 = arith.divf %6, %11 : vector<8x768xf32>
    %13 = arith.truncf %12 : vector<8x768xf32> to vector<8x768xbf16>
    %c0_6 = arith.constant 0 : index
    %c0_7 = arith.constant 0 : index
    %14 = vector.load %arg3[%c0_6, %c0_7] : memref<768x768xbf16, #tpu.memory_space<vmem>>, vector<768x768xbf16>
    %cst_8 = arith.constant dense<0.000000e+00> : vector<8x768xf32>
    %15 = tpu.matmul %13, %14, %cst_8 {dimension_numbers = #tpu.dot_dimension_numbers<[1], [0], [0], [1], [0, 0, 1, 1], [], []>} : vector<8x768xbf16>, vector<768x768xbf16>, vector<8x768xf32> -> vector<8x768xf32>
    %c0_9 = arith.constant 0 : index
    %c0_10 = arith.constant 0 : index
    %16 = vector.load %arg4[%c0_9, %c0_10] : memref<1x768xf32, #tpu.memory_space<vmem>>, vector<1x768xf32>
    %17 = vector.broadcast %16 : vector<1x768xf32> to vector<8x768xf32>
    %18 = arith.addf %15, %17 : vector<8x768xf32>
    %19 = math.tanh %18 : vector<8x768xf32>
    %20 = arith.truncf %19 : vector<8x768xf32> to vector<8x768xbf16>
    %c0_11 = arith.constant 0 : index
    %c0_12 = arith.constant 0 : index
    %21 = vector.load %arg5[%c0_11, %c0_12] : memref<768x512xbf16, #tpu.memory_space<vmem>>, vector<768x512xbf16>
    %cst_13 = arith.constant dense<0.000000e+00> : vector<8x512xf32>
    %22 = tpu.matmul %20, %21, %cst_13 {dimension_numbers = #tpu.dot_dimension_numbers<[1], [0], [0], [1], [0, 0, 1, 1], [], []>} : vector<8x768xbf16>, vector<768x512xbf16>, vector<8x512xf32> -> vector<8x512xf32>
    %c0_14 = arith.constant 0 : index
    %c0_15 = arith.constant 0 : index
    %23 = vector.load %arg6[%c0_14, %c0_15] : memref<1x512xf32, #tpu.memory_space<vmem>>, vector<1x512xf32>
    %24 = vector.broadcast %23 : vector<1x512xf32> to vector<8x512xf32>
    %25 = arith.addf %22, %24 : vector<8x512xf32>
    %cst_16 = arith.constant 0.000000e+00 : f32
    %26 = vector.broadcast %cst_16 : f32 to vector<8x512xf32>
    %27 = arith.maximumf %25, %26 : vector<8x512xf32>
    %28 = arith.truncf %27 : vector<8x512xf32> to vector<8x512xbf16>
    %c0_17 = arith.constant 0 : index
    %c0_18 = arith.constant 0 : index
    %29 = vector.load %arg7[%c0_17, %c0_18] : memref<512x128xbf16, #tpu.memory_space<vmem>>, vector<512x128xbf16>
    %cst_19 = arith.constant dense<0.000000e+00> : vector<8x128xf32>
    %30 = tpu.matmul %28, %29, %cst_19 {dimension_numbers = #tpu.dot_dimension_numbers<[1], [0], [0], [1], [0, 0, 1, 1], [], []>} : vector<8x512xbf16>, vector<512x128xbf16>, vector<8x128xf32> -> vector<8x128xf32>
    %c0_20 = arith.constant 0 : index
    %c0_21 = arith.constant 0 : index
    %31 = vector.load %arg8[%c0_20, %c0_21] : memref<1x128xf32, #tpu.memory_space<vmem>>, vector<1x128xf32>
    %32 = vector.broadcast %31 : vector<1x128xf32> to vector<8x128xf32>
    %33 = arith.addf %30, %32 : vector<8x128xf32>
    %cst_22 = arith.constant 0.000000e+00 : f32
    %34 = vector.broadcast %cst_22 : f32 to vector<8x128xf32>
    %35 = arith.maximumf %33, %34 : vector<8x128xf32>
    %36 = arith.truncf %35 : vector<8x128xf32> to vector<8x128xbf16>
    %c0_23 = arith.constant 0 : index
    %c0_24 = arith.constant 0 : index
    %37 = vector.load %arg9[%c0_23, %c0_24] : memref<128x128xbf16, #tpu.memory_space<vmem>>, vector<128x128xbf16>
    %cst_25 = arith.constant dense<0.000000e+00> : vector<8x128xf32>
    %38 = tpu.matmul %36, %37, %cst_25 {dimension_numbers = #tpu.dot_dimension_numbers<[1], [0], [0], [1], [0, 0, 1, 1], [], []>} : vector<8x128xbf16>, vector<128x128xbf16>, vector<8x128xf32> -> vector<8x128xf32>
    %c0_26 = arith.constant 0 : index
    %c0_27 = arith.constant 0 : index
    %39 = vector.load %arg10[%c0_26, %c0_27] : memref<1x128xf32, #tpu.memory_space<vmem>>, vector<1x128xf32>
    %40 = vector.broadcast %39 : vector<1x128xf32> to vector<8x128xf32>
    %41 = arith.addf %38, %40 : vector<8x128xf32>
    %c0_28 = arith.constant 0 : index
    %c0_29 = arith.constant 0 : index
    %42 = vector.load %arg11[%c0_28, %c0_29] : memref<8x128xf32, #tpu.memory_space<vmem>>, vector<8x128xf32>
    tpu.vector_store %arg11[%c0_28, %c0_29], %41 {strides = array<i32>} : memref<8x128xf32, #tpu.memory_space<vmem>>, vector<8x128xf32>,
    return
  }
  func.func @transform_0(%arg0: i32) -> (i32, i32, i32) {
    %c0_i32 = arith.constant 0 : i32
    %c0_i32_0 = arith.constant 0 : i32
    %c0_i32_1 = arith.constant 0 : i32
    return %arg0, %c0_i32, %c0_i32_0 : i32, i32, i32
  }
  func.func @transform_1(%arg0: i32) -> (i32, i32) {
    %c0_i32 = arith.constant 0 : i32
    %c0_i32_0 = arith.constant 0 : i32
    return %arg0, %c0_i32 : i32, i32
  }
  func.func @transform_2(%arg0: i32) -> (i32, i32) {
    %c0_i32 = arith.constant 0 : i32
    %c0_i32_0 = arith.constant 0 : i32
    %c0_i32_1 = arith.constant 0 : i32
    return %c0_i32, %c0_i32_0 : i32, i32
  }
  func.func @transform_3(%arg0: i32) -> (i32, i32) {
    %c0_i32 = arith.constant 0 : i32
    %c0_i32_0 = arith.constant 0 : i32
    %c0_i32_1 = arith.constant 0 : i32
    return %c0_i32, %c0_i32_0 : i32, i32
  }
  func.func @transform_4(%arg0: i32) -> (i32, i32) {
    %c0_i32 = arith.constant 0 : i32
    %c0_i32_0 = arith.constant 0 : i32
    %c0_i32_1 = arith.constant 0 : i32
    return %c0_i32, %c0_i32_0 : i32, i32
  }
  func.func @transform_5(%arg0: i32) -> (i32, i32) {
    %c0_i32 = arith.constant 0 : i32
    %c0_i32_0 = arith.constant 0 : i32
    %c0_i32_1 = arith.constant 0 : i32
    return %c0_i32, %c0_i32_0 : i32, i32
  }
  func.func @transform_6(%arg0: i32) -> (i32, i32) {
    %c0_i32 = arith.constant 0 : i32
    %c0_i32_0 = arith.constant 0 : i32
    %c0_i32_1 = arith.constant 0 : i32
    return %c0_i32, %c0_i32_0 : i32, i32
  }
  func.func @transform_7(%arg0: i32) -> (i32, i32) {
    %c0_i32 = arith.constant 0 : i32
    %c0_i32_0 = arith.constant 0 : i32
    %c0_i32_1 = arith.constant 0 : i32
    return %c0_i32, %c0_i32_0 : i32, i32
  }
  func.func @transform_8(%arg0: i32) -> (i32, i32) {
    %c0_i32 = arith.constant 0 : i32
    %c0_i32_0 = arith.constant 0 : i32
    %c0_i32_1 = arith.constant 0 : i32
    return %c0_i32, %c0_i32_0 : i32, i32
  }
  func.func @transform_9(%arg0: i32) -> (i32, i32) {
    %c0_i32 = arith.constant 0 : i32
    %c0_i32_0 = arith.constant 0 : i32
    %c0_i32_1 = arith.constant 0 : i32
    return %c0_i32, %c0_i32_0 : i32, i32
  }
  func.func @transform_10(%arg0: i32) -> (i32, i32) {
    %c0_i32 = arith.constant 0 : i32
    %c0_i32_0 = arith.constant 0 : i32
    return %arg0, %c0_i32 : i32, i32
  }
}

</mosaic_0001>

<llo_original>
// kernel: tpu_custom_call.1
$region0: #{tpu_custom_call.1}
  #allocation0 [shape = 'u32[]', space=smem, size = 0x4, offset = 0x4, fixed_abs, tag = 'smem constant byte address 0x4 - core index']
  #allocation1 [shape = 'u32[144,128]{1,0:T(1,128)}', space=vmem, size = 0x12000, scoped, tag = 'internal scratch']
  %s0 = inlined_call_operand.hbm [shape: bf16[8,8,768], index: 0, kind: input, shape index: {}]
  %s1 = inlined_call_operand.hbm [shape: f32[8,8], index: 1, kind: input, shape index: {}]
  %s2 = inlined_call_operand.hbm [shape: bf16[768,768], index: 2, kind: input, shape index: {}]
  %s3 = inlined_call_operand.hbm [shape: f32[1,768], index: 3, kind: input, shape index: {}]
  %s4 = inlined_call_operand.hbm [shape: bf16[768,512], index: 4, kind: input, shape index: {}]
  %s5 = inlined_call_operand.hbm [shape: f32[1,512], index: 5, kind: input, shape index: {}]
  %s6 = inlined_call_operand.hbm [shape: bf16[512,128], index: 6, kind: input, shape index: {}]
  %s7 = inlined_call_operand.hbm [shape: f32[1,128], index: 7, kind: input, shape index: {}]
  %s8 = inlined_call_operand.hbm [shape: bf16[128,128], index: 8, kind: input, shape index: {}]
  %s9 = inlined_call_operand.hbm [shape: f32[1,128], index: 9, kind: input, shape index: {}]
  %s10 = inlined_call_operand.hbm [shape: f32[8,128], index: 10, kind: output, shape index: {}]
  %s11 = sld [smem:[#allocation0]]
  $region90: #{tpu_custom_call.1} parent=0
    _
  %s13 = ssub.s32 1, %s11
  %s14 = scalar_select 0, %s13, %s11
  $region1: #{tpu_custom_call.1} parent=0
    #allocation2 [shape = 'u8[98304]{0}', space=vmem, size = 0x18000, scoped, tag = 'input window, operand 0, single buffered']
    #allocation3 [shape = 's32[1]{0}', space=sflag, size = 0x4, scoped, tag = 'scoped memory for tpu_custom_call.1']
    #allocation4 [shape = 's32[1]{0}', space=sflag, size = 0x4, scoped, tag = 'scoped memory for tpu_custom_call.1']
    #allocation5 [shape = 'u8[4096]{0}', space=vmem, size = 0x1000, scoped, tag = 'input window, operand 1, single buffered']
    #allocation6 [shape = 's32[1]{0}', space=sflag, size = 0x4, scoped, tag = 'scoped memory for tpu_custom_call.1']
    #allocation7 [shape = 'u8[1179648]{0}', space=vmem, size = 0x120000, scoped, tag = 'input window, operand 2, single buffered']
    #allocation8 [shape = 'u8[3072]{0}', space=vmem, size = 0xc00, scoped, tag = 'input window, operand 3, single buffered']
    #allocation9 [shape = 's32[1]{0}', space=sflag, size = 0x4, scoped, tag = 'scoped memory for tpu_custom_call.1']
    #allocation10 [shape = 'u8[786432]{0}', space=vmem, size = 0xc0000, scoped, tag = 'input window, operand 4, single buffered']
    #allocation11 [shape = 'u8[2048]{0}', space=vmem, size = 0x800, scoped, tag = 'input window, operand 5, single buffered']
    #allocation12 [shape = 's32[1]{0}', space=sflag, size = 0x4, scoped, tag = 'scoped memory for tpu_custom_call.1']
    #allocation13 [shape = 'u8[131072]{0}', space=vmem, size = 0x20000, scoped, tag = 'input window, operand 6, single buffered']
    #allocation14 [shape = 'u8[512]{0}', space=vmem, size = 0x400, scoped, tag = 'input window, operand 7, single buffered']
    #allocation15 [shape = 's32[1]{0}', space=sflag, size = 0x4, scoped, tag = 'scoped memory for tpu_custom_call.1']
    #allocation16 [shape = 'u8[32768]{0}', space=vmem, size = 0x8000, scoped, tag = 'input window, operand 8, single buffered']
    #allocation17 [shape = 'u8[512]{0}', space=vmem, size = 0x400, scoped, tag = 'input window, operand 9, single buffered']
    #allocation18 [shape = 's32[1]{0}', space=sflag, size = 0x4, scoped, tag = 'scoped memory for tpu_custom_call.1']
    #allocation19 [shape = 'u8[4096]{0}', space=vmem, size = 0x1000, scoped, tag = 'output window, operand 0, single buffered']
    %15 = vsyncpa [#allocation3], 0
    %16 = vsyncpa [#allocation6], 0
    %17 = vsyncpa [#allocation9], 0
    %18 = vsyncpa [#allocation12], 0
    %19 = vsyncpa [#allocation15], 0
    %20 = vsyncpa [#allocation18], 0
    %21 = vsyncpa [#allocation4], 0
    // Predicated region
    $region2: #{tpu_custom_call.1} parent=1 // pred_check
      _
    $region3: #{tpu_custom_call.1} parent=1 // pred_check_branch
      %23 = sbr.rel (0) target = $region5
    $region4: #{tpu_custom_call.1} parent=1 // pred_region
      %s25 = ssub.s32 3072, 3072
      %26 = vsyncadd [#allocation3], %s25
      %s27 = sshll.u32 [#allocation2], 4
      %s28 = int_to_ptr.vmem [resolvable:$true] %s27
      %33 = dma.hbm_to_vmem [thread:$0]  %s0, 3072, %s28, [#allocation3], 384, 384, 24
    $region5: #{tpu_custom_call.1} parent=1 // pred_fallthru
      _
    // Predicated region
    $region6: #{tpu_custom_call.1} parent=1 // pred_check
      _
    $region7: #{tpu_custom_call.1} parent=1 // pred_check_branch
      %35 = sbr.rel (0) target = $region9
    $region8: #{tpu_custom_call.1} parent=1 // pred_region
      %s37 = ssub.s32 128, 128
      %38 = vsyncadd [#allocation6], %s37
      %s40 = sshll.u32 [#allocation5], 4
      %s41 = int_to_ptr.vmem [resolvable:$true] %s40
      %43 = dma.hbm_to_vmem [thread:$0]  %s1, 128, %s41, [#allocation6]
    $region9: #{tpu_custom_call.1} parent=1 // pred_fallthru
      _
    // Predicated region
    $region10: #{tpu_custom_call.1} parent=1 // pred_check
      _
    $region11: #{tpu_custom_call.1} parent=1 // pred_check_branch
      %45 = sbr.rel (0) target = $region13
    $region12: #{tpu_custom_call.1} parent=1 // pred_region
      %s47 = ssub.s32 36864, 36864
      %48 = vsyncadd [#allocation6], %s47
      %s49 = sshll.u32 [#allocation7], 4
      %s50 = int_to_ptr.vmem [resolvable:$true] %s49
      %55 = dma.hbm_to_vmem [thread:$0]  %s2, 36864, %s50, [#allocation6], 384, 384, 24
    $region13: #{tpu_custom_call.1} parent=1 // pred_fallthru
      _
    // Predicated region
    $region14: #{tpu_custom_call.1} parent=1 // pred_check
      _
    $region15: #{tpu_custom_call.1} parent=1 // pred_check_branch
      %57 = sbr.rel (0) target = $region17
    $region16: #{tpu_custom_call.1} parent=1 // pred_region
      %s59 = ssub.s32 96, 96
      %60 = vsyncadd [#allocation9], %s59
      %s62 = sshll.u32 [#allocation8], 4
      %s63 = int_to_ptr.vmem [resolvable:$true] %s62
      %65 = dma.hbm_to_vmem [thread:$0]  %s3, 96, %s63, [#allocation9]
    $region17: #{tpu_custom_call.1} parent=1 // pred_fallthru
      _
    // Predicated region
    $region18: #{tpu_custom_call.1} parent=1 // pred_check
      _
    $region19: #{tpu_custom_call.1} parent=1 // pred_check_branch
      %67 = sbr.rel (0) target = $region21
    $region20: #{tpu_custom_call.1} parent=1 // pred_region
      %s69 = ssub.s32 24576, 24576
      %70 = vsyncadd [#allocation9], %s69
      %s71 = sshll.u32 [#allocation10], 4
      %s72 = int_to_ptr.vmem [resolvable:$true] %s71
      %77 = dma.hbm_to_vmem [thread:$0]  %s4, 24576, %s72, [#allocation9], 256, 256, 16
    $region21: #{tpu_custom_call.1} parent=1 // pred_fallthru
      _
    // Predicated region
    $region22: #{tpu_custom_call.1} parent=1 // pred_check
      _
    $region23: #{tpu_custom_call.1} parent=1 // pred_check_branch
      %79 = sbr.rel (0) target = $region25
    $region24: #{tpu_custom_call.1} parent=1 // pred_region
      %s81 = ssub.s32 64, 64
      %82 = vsyncadd [#allocation12], %s81
      %s84 = sshll.u32 [#allocation11], 4
      %s85 = int_to_ptr.vmem [resolvable:$true] %s84
      %87 = dma.hbm_to_vmem [thread:$0]  %s5, 64, %s85, [#allocation12]
    $region25: #{tpu_custom_call.1} parent=1 // pred_fallthru
      _
    // Predicated region
    $region26: #{tpu_custom_call.1} parent=1 // pred_check
      _
    $region27: #{tpu_custom_call.1} parent=1 // pred_check_branch
      %89 = sbr.rel (0) target = $region29
    $region28: #{tpu_custom_call.1} parent=1 // pred_region
      %s91 = ssub.s32 4096, 4096
      %92 = vsyncadd [#allocation12], %s91
      %s93 = sshll.u32 [#allocation13], 4
      %s94 = int_to_ptr.vmem [resolvable:$true] %s93
      %99 = dma.hbm_to_vmem [thread:$0]  %s6, 4096, %s94, [#allocation12], 64, 64, 4
    $region29: #{tpu_custom_call.1} parent=1 // pred_fallthru
      _
    // Predicated region
    $region30: #{tpu_custom_call.1} parent=1 // pred_check
      _
    $region31: #{tpu_custom_call.1} parent=1 // pred_check_branch
      %101 = sbr.rel (0) target = $region33
    $region32: #{tpu_custom_call.1} parent=1 // pred_region
      %s103 = ssub.s32 16, 16
      %104 = vsyncadd [#allocation15], %s103
      %s106 = sshll.u32 [#allocation14], 4
      %s107 = int_to_ptr.vmem [resolvable:$true] %s106
      %109 = dma.hbm_to_vmem [thread:$0]  %s7, 16, %s107, [#allocation15]
    $region33: #{tpu_custom_call.1} parent=1 // pred_fallthru
      _
    // Predicated region
    $region34: #{tpu_custom_call.1} parent=1 // pred_check
      _
    $region35: #{tpu_custom_call.1} parent=1 // pred_check_branch
      %111 = sbr.rel (0) target = $region37
    $region36: #{tpu_custom_call.1} parent=1 // pred_region
      %s113 = ssub.s32 1024, 1024
      %114 = vsyncadd [#allocation15], %s113
      %s115 = sshll.u32 [#allocation16], 4
      %s116 = int_to_ptr.vmem [resolvable:$true] %s115
      %121 = dma.hbm_to_vmem [thread:$0]  %s8, 1024, %s116, [#allocation15], 64, 64, 4
    $region37: #{tpu_custom_call.1} parent=1 // pred_fallthru
      _
    // Predicated region
    $region38: #{tpu_custom_call.1} parent=1 // pred_check
      _
    $region39: #{tpu_custom_call.1} parent=1 // pred_check_branch
      %123 = sbr.rel (0) target = $region41
    $region40: #{tpu_custom_call.1} parent=1 // pred_region
      %s125 = ssub.s32 16, 16
      %126 = vsyncadd [#allocation18], %s125
      %s128 = sshll.u32 [#allocation17], 4
      %s129 = int_to_ptr.vmem [resolvable:$true] %s128
      %131 = dma.hbm_to_vmem [thread:$0]  %s9, 16, %s129, [#allocation18]
    $region41: #{tpu_custom_call.1} parent=1 // pred_fallthru
      _
    // Predicated region
    $region42: #{tpu_custom_call.1} parent=1 // pred_check
      _
    $region43: #{tpu_custom_call.1} parent=1 // pred_check_branch
      %133 = sbr.rel (0) target = $region45
    $region44: #{tpu_custom_call.1} parent=1 // pred_region
      %134 = dma.done [#allocation3], 3072
    $region45: #{tpu_custom_call.1} parent=1 // pred_fallthru
      _
    // Predicated region
    $region46: #{tpu_custom_call.1} parent=1 // pred_check
      _
    $region47: #{tpu_custom_call.1} parent=1 // pred_check_branch
      %136 = sbr.rel (0) target = $region49
    $region48: #{tpu_custom_call.1} parent=1 // pred_region
      %137 = dma.done [#allocation6], 128
    $region49: #{tpu_custom_call.1} parent=1 // pred_fallthru
      _
    // Predicated region
    $region50: #{tpu_custom_call.1} parent=1 // pred_check
      _
    $region51: #{tpu_custom_call.1} parent=1 // pred_check_branch
      %139 = sbr.rel (0) target = $region53
    $region52: #{tpu_custom_call.1} parent=1 // pred_region
      %140 = dma.done [#allocation6], 36864
    $region53: #{tpu_custom_call.1} parent=1 // pred_fallthru
      _
    // Predicated region
    $region54: #{tpu_custom_call.1} parent=1 // pred_check
      _
    $region55: #{tpu_custom_call.1} parent=1 // pred_check_branch
      %142 = sbr.rel (0) target = $region57
    $region56: #{tpu_custom_call.1} parent=1 // pred_region
      %143 = dma.done [#allocation9], 96
    $region57: #{tpu_custom_call.1} parent=1 // pred_fallthru
      _
    // Predicated region
    $region58: #{tpu_custom_call.1} parent=1 // pred_check
      _
    $region59: #{tpu_custom_call.1} parent=1 // pred_check_branch
      %145 = sbr.rel (0) target = $region61
    $region60: #{tpu_custom_call.1} parent=1 // pred_region
      %146 = dma.done [#allocation9], 24576
    $region61: #{tpu_custom_call.1} parent=1 // pred_fallthru
      _
    // Predicated region
    $region62: #{tpu_custom_call.1} parent=1 // pred_check
      _
    $region63: #{tpu_custom_call.1} parent=1 // pred_check_branch
      %148 = sbr.rel (0) target = $region65
    $region64: #{tpu_custom_call.1} parent=1 // pred_region
      %149 = dma.done [#allocation12], 64
    $region65: #{tpu_custom_call.1} parent=1 // pred_fallthru
      _
    // Predicated region
    $region66: #{tpu_custom_call.1} parent=1 // pred_check
      _
    $region67: #{tpu_custom_call.1} parent=1 // pred_check_branch
      %151 = sbr.rel (0) target = $region69
    $region68: #{tpu_custom_call.1} parent=1 // pred_region
      %152 = dma.done [#allocation12], 4096
    $region69: #{tpu_custom_call.1} parent=1 // pred_fallthru
      _
    // Predicated region
    $region70: #{tpu_custom_call.1} parent=1 // pred_check
      _
    $region71: #{tpu_custom_call.1} parent=1 // pred_check_branch
      %154 = sbr.rel (0) target = $region73
    $region72: #{tpu_custom_call.1} parent=1 // pred_region
      %155 = dma.done [#allocation15], 16
    $region73: #{tpu_custom_call.1} parent=1 // pred_fallthru
      _
    // Predicated region
    $region74: #{tpu_custom_call.1} parent=1 // pred_check
      _
    $region75: #{tpu_custom_call.1} parent=1 // pred_check_branch
      %157 = sbr.rel (0) target = $region77
    $region76: #{tpu_custom_call.1} parent=1 // pred_region
      %158 = dma.done [#allocation15], 1024
    $region77: #{tpu_custom_call.1} parent=1 // pred_fallthru
      _
    // Predicated region
    $region78: #{tpu_custom_call.1} parent=1 // pred_check
      _
    $region79: #{tpu_custom_call.1} parent=1 // pred_check_branch
      %160 = sbr.rel (0) target = $region81
    $region80: #{tpu_custom_call.1} parent=1 // pred_region
      %161 = dma.done [#allocation18], 16
    $region81: #{tpu_custom_call.1} parent=1 // pred_fallthru
      _
    %v163 = vld [vmem:[#allocation2] sm:$0xff]
    %v164 = vld [vmem:[#allocation2 + $0x8] sm:$0xff]
    %v165 = vld [vmem:[#allocation2 + $0x10] sm:$0xff]
    %v166 = vld [vmem:[#allocation2 + $0x18] sm:$0xff]
    %v167 = vld [vmem:[#allocation2 + $0x20] sm:$0xff]
    %v168 = vld [vmem:[#allocation2 + $0x28] sm:$0xff]
    %v169 = vld [vmem:[#allocation2 + $0x30] sm:$0xff]
    %v170 = vld [vmem:[#allocation2 + $0x38] sm:$0xff]
    %v171 = vld [vmem:[#allocation2 + $0x40] sm:$0xff]
    %v172 = vld [vmem:[#allocation2 + $0x48] sm:$0xff]
    %v173 = vld [vmem:[#allocation2 + $0x50] sm:$0xff]
    %v174 = vld [vmem:[#allocation2 + $0x58] sm:$0xff]
    %v175 = vld [vmem:[#allocation2 + $0x60] sm:$0xff]
    %v176 = vld [vmem:[#allocation2 + $0x68] sm:$0xff]
    %v177 = vld [vmem:[#allocation2 + $0x70] sm:$0xff]
    %v178 = vld [vmem:[#allocation2 + $0x78] sm:$0xff]
    %v179 = vld [vmem:[#allocation2 + $0x80] sm:$0xff]
    %v180 = vld [vmem:[#allocation2 + $0x88] sm:$0xff]
    %v181 = vld [vmem:[#allocation2 + $0x90] sm:$0xff]
    %v182 = vld [vmem:[#allocation2 + $0x98] sm:$0xff]
    %v183 = vld [vmem:[#allocation2 + $0xa0] sm:$0xff]
    %v184 = vld [vmem:[#allocation2 + $0xa8] sm:$0xff]
    %v185 = vld [vmem:[#allocation2 + $0xb0] sm:$0xff]
    %v186 = vld [vmem:[#allocation2 + $0xb8] sm:$0xff]
    %v187 = vunpack.c.l.bf16 %v163
    %v188 = vunpack.c.h.bf16 %v163
    %v189 = vunpack.c.l.bf16 %v164
    %v190 = vunpack.c.h.bf16 %v164
    %v191 = vunpack.c.l.bf16 %v165
    %v192 = vunpack.c.h.bf16 %v165
    %v193 = vunpack.c.l.bf16 %v166
    %v194 = vunpack.c.h.bf16 %v166
    %v195 = vunpack.c.l.bf16 %v167
    %v196 = vunpack.c.h.bf16 %v167
    %v197 = vunpack.c.l.bf16 %v168
    %v198 = vunpack.c.h.bf16 %v168
    %v199 = vunpack.c.l.bf16 %v169
    %v200 = vunpack.c.h.bf16 %v169
    %v201 = vunpack.c.l.bf16 %v170
    %v202 = vunpack.c.h.bf16 %v170
    %v203 = vunpack.c.l.bf16 %v171
    %v204 = vunpack.c.h.bf16 %v171
    %v205 = vunpack.c.l.bf16 %v172
    %v206 = vunpack.c.h.bf16 %v172
    %v207 = vunpack.c.l.bf16 %v173
    %v208 = vunpack.c.h.bf16 %v173
    %v209 = vunpack.c.l.bf16 %v174
    %v210 = vunpack.c.h.bf16 %v174
    %v211 = vunpack.c.l.bf16 %v175
    %v212 = vunpack.c.h.bf16 %v175
    %v213 = vunpack.c.l.bf16 %v176
    %v214 = vunpack.c.h.bf16 %v176
    %v215 = vunpack.c.l.bf16 %v177
    %v216 = vunpack.c.h.bf16 %v177
    %v217 = vunpack.c.l.bf16 %v178
    %v218 = vunpack.c.h.bf16 %v178
    %v219 = vunpack.c.l.bf16 %v179
    %v220 = vunpack.c.h.bf16 %v179
    %v221 = vunpack.c.l.bf16 %v180
    %v222 = vunpack.c.h.bf16 %v180
    %v223 = vunpack.c.l.bf16 %v181
    %v224 = vunpack.c.h.bf16 %v181
    %v225 = vunpack.c.l.bf16 %v182
    %v226 = vunpack.c.h.bf16 %v182
    %v227 = vunpack.c.l.bf16 %v183
    %v228 = vunpack.c.h.bf16 %v183
    %v229 = vunpack.c.l.bf16 %v184
    %v230 = vunpack.c.h.bf16 %v184
    %v231 = vunpack.c.l.bf16 %v185
    %v232 = vunpack.c.h.bf16 %v185
    %v233 = vunpack.c.l.bf16 %v186
    %v234 = vunpack.c.h.bf16 %v186
    %v235 = vld [vmem:[#allocation5] sm:$0xff]
    %v236 = vlaneseq
    %v237 = vshrl.u32 %v236, 7
    %v238 = vsub.s32 0, %v237
    %v239 = vrot.slane %v235, %v238
    %241 = vbcast.lane.b32.xlu0 %v239, 256
    %v242 = vpop.permute.xlu0 %241
    %v243 = vlaneseq
    %v244 = vshrl.u32 %v243, 7
    %v245 = vsub.s32 1, %v244
    %v246 = vrot.slane %v235, %v245
    %248 = vbcast.lane.b32.xlu0 %v246, 256
    %v249 = vpop.permute.xlu0 %248
    %v250 = vlaneseq
    %v251 = vshrl.u32 %v250, 7
    %v252 = vsub.s32 2, %v251
    %v253 = vrot.slane %v235, %v252
    %255 = vbcast.lane.b32.xlu0 %v253, 256
    %v256 = vpop.permute.xlu0 %255
    %v257 = vlaneseq
    %v258 = vshrl.u32 %v257, 7
    %v259 = vsub.s32 3, %v258
    %v260 = vrot.slane %v235, %v259
    %262 = vbcast.lane.b32.xlu0 %v260, 256
    %v263 = vpop.permute.xlu0 %262
    %v264 = vlaneseq
    %v265 = vshrl.u32 %v264, 7
    %v266 = vsub.s32 4, %v265
    %v267 = vrot.slane %v235, %v266
    %269 = vbcast.lane.b32.xlu0 %v267, 256
    %v270 = vpop.permute.xlu0 %269
    %v271 = vlaneseq
    %v272 = vshrl.u32 %v271, 7
    %v273 = vsub.s32 5, %v272
    %v274 = vrot.slane %v235, %v273
    %276 = vbcast.lane.b32.xlu0 %v274, 256
    %v277 = vpop.permute.xlu0 %276
    %v278 = vlaneseq
    %v279 = vshrl.u32 %v278, 7
    %v280 = vsub.s32 6, %v279
    %v281 = vrot.slane %v235, %v280
    %283 = vbcast.lane.b32.xlu0 %v281, 256
    %v284 = vpop.permute.xlu0 %283
    %v285 = vlaneseq
    %v286 = vshrl.u32 %v285, 7
    %v287 = vsub.s32 7, %v286
    %v288 = vrot.slane %v235, %v287
    %290 = vbcast.lane.b32.xlu0 %v288, 256
    %v291 = vpop.permute.xlu0 %290
    %v292 = vmul.f32 %v187, %v242
    %v293 = vmul.f32 %v188, %v242
    %v294 = vmul.f32 %v189, %v242
    %v295 = vmul.f32 %v190, %v242
    %v296 = vmul.f32 %v191, %v242
    %v297 = vmul.f32 %v192, %v242
    %v298 = vmul.f32 %v193, %v249
    %v299 = vmul.f32 %v194, %v249
    %v300 = vmul.f32 %v195, %v249
    %v301 = vmul.f32 %v196, %v249
    %v302 = vmul.f32 %v197, %v249
    %v303 = vmul.f32 %v198, %v249
    %v304 = vmul.f32 %v199, %v256
    %v305 = vmul.f32 %v200, %v256
    %v306 = vmul.f32 %v201, %v256
    %v307 = vmul.f32 %v202, %v256
    %v308 = vmul.f32 %v203, %v256
    %v309 = vmul.f32 %v204, %v256
    %v310 = vmul.f32 %v205, %v263
    %v311 = vmul.f32 %v206, %v263
    %v312 = vmul.f32 %v207, %v263
    %v313 = vmul.f32 %v208, %v263
    %v314 = vmul.f32 %v209, %v263
    %v315 = vmul.f32 %v210, %v263
    %v316 = vmul.f32 %v211, %v270
    %v317 = vmul.f32 %v212, %v270
    %v318 = vmul.f32 %v213, %v270
    %v319 = vmul.f32 %v214, %v270
    %v320 = vmul.f32 %v215, %v270
    %v321 = vmul.f32 %v216, %v270
    %v322 = vmul.f32 %v217, %v277
    %v323 = vmul.f32 %v218, %v277
    %v324 = vmul.f32 %v219, %v277
    %v325 = vmul.f32 %v220, %v277
    %v326 = vmul.f32 %v221, %v277
    %v327 = vmul.f32 %v222, %v277
    %v328 = vmul.f32 %v223, %v284
    %v329 = vmul.f32 %v224, %v284
    %v330 = vmul.f32 %v225, %v284
    %v331 = vmul.f32 %v226, %v284
    %v332 = vmul.f32 %v227, %v284
    %v333 = vmul.f32 %v228, %v284
    %v334 = vmul.f32 %v229, %v291
    %v335 = vmul.f32 %v230, %v291
    %v336 = vmul.f32 %v231, %v291
    %v337 = vmul.f32 %v232, %v291
    %v338 = vmul.f32 %v233, %v291
    %v339 = vmul.f32 %v234, %v291
    %v340 = vrot.slane %v292, 4
    %v341 = vadd.f32 %v292, %v340
    %v342 = vrot.slane %v341, 2
    %v343 = vadd.f32 %v341, %v342
    %v344 = vrot.slane %v343, 1
    %v345 = vadd.f32 %v343, %v344
    %v346 = vrot.slane %v293, 4
    %v347 = vadd.f32 %v293, %v346
    %v348 = vrot.slane %v347, 2
    %v349 = vadd.f32 %v347, %v348
    %v350 = vrot.slane %v349, 1
    %v351 = vadd.f32 %v349, %v350
    %v352 = vrot.slane %v294, 4
    %v353 = vadd.f32 %v294, %v352
    %v354 = vrot.slane %v353, 2
    %v355 = vadd.f32 %v353, %v354
    %v356 = vrot.slane %v355, 1
    %v357 = vadd.f32 %v355, %v356
    %v358 = vrot.slane %v295, 4
    %v359 = vadd.f32 %v295, %v358
    %v360 = vrot.slane %v359, 2
    %v361 = vadd.f32 %v359, %v360
    %v362 = vrot.slane %v361, 1
    %v363 = vadd.f32 %v361, %v362
    %v364 = vrot.slane %v296, 4
    %v365 = vadd.f32 %v296, %v364
    %v366 = vrot.slane %v365, 2
    %v367 = vadd.f32 %v365, %v366
    %v368 = vrot.slane %v367, 1
    %v369 = vadd.f32 %v367, %v368
    %v370 = vrot.slane %v297, 4
    %v371 = vadd.f32 %v297, %v370
    %v372 = vrot.slane %v371, 2
    %v373 = vadd.f32 %v371, %v372
    %v374 = vrot.slane %v373, 1
    %v375 = vadd.f32 %v373, %v374
    %v376 = vrot.slane %v298, 4
    %v377 = vadd.f32 %v298, %v376
    %v378 = vrot.slane %v377, 2
    %v379 = vadd.f32 %v377, %v378
    %v380 = vrot.slane %v379, 1
    %v381 = vadd.f32 %v379, %v380
    %v382 = vrot.slane %v299, 4
    %v383 = vadd.f32 %v299, %v382
    %v384 = vrot.slane %v383, 2
    %v385 = vadd.f32 %v383, %v384
    %v386 = vrot.slane %v385, 1
    %v387 = vadd.f32 %v385, %v386
    %v388 = vrot.slane %v300, 4
    %v389 = vadd.f32 %v300, %v388
    %v390 = vrot.slane %v389, 2
    %v391 = vadd.f32 %v389, %v390
    %v392 = vrot.slane %v391, 1
    %v393 = vadd.f32 %v391, %v392
    %v394 = vrot.slane %v301, 4
    %v395 = vadd.f32 %v301, %v394
    %v396 = vrot.slane %v395, 2
    %v397 = vadd.f32 %v395, %v396
    %v398 = vrot.slane %v397, 1
    %v399 = vadd.f32 %v397, %v398
    %v400 = vrot.slane %v302, 4
    %v401 = vadd.f32 %v302, %v400
    %v402 = vrot.slane %v401, 2
    %v403 = vadd.f32 %v401, %v402
    %v404 = vrot.slane %v403, 1
    %v405 = vadd.f32 %v403, %v404
    %v406 = vrot.slane %v303, 4
    %v407 = vadd.f32 %v303, %v406
    %v408 = vrot.slane %v407, 2
    %v409 = vadd.f32 %v407, %v408
    %v410 = vrot.slane %v409, 1
    %v411 = vadd.f32 %v409, %v410
    %v412 = vrot.slane %v304, 4
    %v413 = vadd.f32 %v304, %v412
    %v414 = vrot.slane %v413, 2
    %v415 = vadd.f32 %v413, %v414
    %v416 = vrot.slane %v415, 1
    %v417 = vadd.f32 %v415, %v416
    %v418 = vrot.slane %v305, 4
    %v419 = vadd.f32 %v305, %v418
    %v420 = vrot.slane %v419, 2
    %v421 = vadd.f32 %v419, %v420
    %v422 = vrot.slane %v421, 1
    %v423 = vadd.f32 %v421, %v422
    %v424 = vrot.slane %v306, 4
    %v425 = vadd.f32 %v306, %v424
    %v426 = vrot.slane %v425, 2
    %v427 = vadd.f32 %v425, %v426
    %v428 = vrot.slane %v427, 1
    %v429 = vadd.f32 %v427, %v428
    %v430 = vrot.slane %v307, 4
    %v431 = vadd.f32 %v307, %v430
    %v432 = vrot.slane %v431, 2
    %v433 = vadd.f32 %v431, %v432
    %v434 = vrot.slane %v433, 1
    %v435 = vadd.f32 %v433, %v434
    %v436 = vrot.slane %v308, 4
    %v437 = vadd.f32 %v308, %v436
    %v438 = vrot.slane %v437, 2
    %v439 = vadd.f32 %v437, %v438
    %v440 = vrot.slane %v439, 1
    %v441 = vadd.f32 %v439, %v440
    %v442 = vrot.slane %v309, 4
    %v443 = vadd.f32 %v309, %v442
    %v444 = vrot.slane %v443, 2
    %v445 = vadd.f32 %v443, %v444
    %v446 = vrot.slane %v445, 1
    %v447 = vadd.f32 %v445, %v446
    %v448 = vrot.slane %v310, 4
    %v449 = vadd.f32 %v310, %v448
    %v450 = vrot.slane %v449, 2
    %v451 = vadd.f32 %v449, %v450
    %v452 = vrot.slane %v451, 1
    %v453 = vadd.f32 %v451, %v452
    %v454 = vrot.slane %v311, 4
    %v455 = vadd.f32 %v311, %v454
    %v456 = vrot.slane %v455, 2
    %v457 = vadd.f32 %v455, %v456
    %v458 = vrot.slane %v457, 1
    %v459 = vadd.f32 %v457, %v458
    %v460 = vrot.slane %v312, 4
    %v461 = vadd.f32 %v312, %v460
    %v462 = vrot.slane %v461, 2
    %v463 = vadd.f32 %v461, %v462
    %v464 = vrot.slane %v463, 1
    %v465 = vadd.f32 %v463, %v464
    %v466 = vrot.slane %v313, 4
    %v467 = vadd.f32 %v313, %v466
    %v468 = vrot.slane %v467, 2
    %v469 = vadd.f32 %v467, %v468
    %v470 = vrot.slane %v469, 1
    %v471 = vadd.f32 %v469, %v470
    %v472 = vrot.slane %v314, 4
    %v473 = vadd.f32 %v314, %v472
    %v474 = vrot.slane %v473, 2
    %v475 = vadd.f32 %v473, %v474
    %v476 = vrot.slane %v475, 1
    %v477 = vadd.f32 %v475, %v476
    %v478 = vrot.slane %v315, 4
    %v479 = vadd.f32 %v315, %v478
    %v480 = vrot.slane %v479, 2
    %v481 = vadd.f32 %v479, %v480
    %v482 = vrot.slane %v481, 1
    %v483 = vadd.f32 %v481, %v482
    %v484 = vrot.slane %v316, 4
    %v485 = vadd.f32 %v316, %v484
    %v486 = vrot.slane %v485, 2
    %v487 = vadd.f32 %v485, %v486
    %v488 = vrot.slane %v487, 1
    %v489 = vadd.f32 %v487, %v488
    %v490 = vrot.slane %v317, 4
    %v491 = vadd.f32 %v317, %v490
    %v492 = vrot.slane %v491, 2
    %v493 = vadd.f32 %v491, %v492
    %v494 = vrot.slane %v493, 1
    %v495 = vadd.f32 %v493, %v494
    %v496 = vrot.slane %v318, 4
    %v497 = vadd.f32 %v318, %v496
    %v498 = vrot.slane %v497, 2
    %v499 = vadd.f32 %v497, %v498
    %v500 = vrot.slane %v499, 1
    %v501 = vadd.f32 %v499, %v500
    %v502 = vrot.slane %v319, 4
    %v503 = vadd.f32 %v319, %v502
    %v504 = vrot.slane %v503, 2
    %v505 = vadd.f32 %v503, %v504
    %v506 = vrot.slane %v505, 1
    %v507 = vadd.f32 %v505, %v506
    %v508 = vrot.slane %v320, 4
    %v509 = vadd.f32 %v320, %v508
    %v510 = vrot.slane %v509, 2
    %v511 = vadd.f32 %v509, %v510
    %v512 = vrot.slane %v511, 1
    %v513 = vadd.f32 %v511, %v512
    %v514 = vrot.slane %v321, 4
    %v515 = vadd.f32 %v321, %v514
    %v516 = vrot.slane %v515, 2
    %v517 = vadd.f32 %v515, %v516
    %v518 = vrot.slane %v517, 1
    %v519 = vadd.f32 %v517, %v518
    %v520 = vrot.slane %v322, 4
    %v521 = vadd.f32 %v322, %v520
    %v522 = vrot.slane %v521, 2
    %v523 = vadd.f32 %v521, %v522
    %v524 = vrot.slane %v523, 1
    %v525 = vadd.f32 %v523, %v524
    %v526 = vrot.slane %v323, 4
    %v527 = vadd.f32 %v323, %v526
    %v528 = vrot.slane %v527, 2
    %v529 = vadd.f32 %v527, %v528
    %v530 = vrot.slane %v529, 1
    %v531 = vadd.f32 %v529, %v530
    %v532 = vrot.slane %v324, 4
    %v533 = vadd.f32 %v324, %v532
    %v534 = vrot.slane %v533, 2
    %v535 = vadd.f32 %v533, %v534
    %v536 = vrot.slane %v535, 1
    %v537 = vadd.f32 %v535, %v536
    %v538 = vrot.slane %v325, 4
    %v539 = vadd.f32 %v325, %v538
    %v540 = vrot.slane %v539, 2
    %v541 = vadd.f32 %v539, %v540
    %v542 = vrot.slane %v541, 1
    %v543 = vadd.f32 %v541, %v542
    %v544 = vrot.slane %v326, 4
    %v545 = vadd.f32 %v326, %v544
    %v546 = vrot.slane %v545, 2
    %v547 = vadd.f32 %v545, %v546
    %v548 = vrot.slane %v547, 1
    %v549 = vadd.f32 %v547, %v548
    %v550 = vrot.slane %v327, 4
    %v551 = vadd.f32 %v327, %v550
    %v552 = vrot.slane %v551, 2
    %v553 = vadd.f32 %v551, %v552
    %v554 = vrot.slane %v553, 1
    %v555 = vadd.f32 %v553, %v554
    %v556 = vrot.slane %v328, 4
    %v557 = vadd.f32 %v328, %v556
    %v558 = vrot.slane %v557, 2
    %v559 = vadd.f32 %v557, %v558
    %v560 = vrot.slane %v559, 1
    %v561 = vadd.f32 %v559, %v560
    %v562 = vrot.slane %v329, 4
    %v563 = vadd.f32 %v329, %v562
    %v564 = vrot.slane %v563, 2
    %v565 = vadd.f32 %v563, %v564
    %v566 = vrot.slane %v565, 1
    %v567 = vadd.f32 %v565, %v566
    %v568 = vrot.slane %v330, 4
    %v569 = vadd.f32 %v330, %v568
    %v570 = vrot.slane %v569, 2
    %v571 = vadd.f32 %v569, %v570
    %v572 = vrot.slane %v571, 1
    %v573 = vadd.f32 %v571, %v572
    %v574 = vrot.slane %v331, 4
    %v575 = vadd.f32 %v331, %v574
    %v576 = vrot.slane %v575, 2
    %v577 = vadd.f32 %v575, %v576
    %v578 = vrot.slane %v577, 1
    %v579 = vadd.f32 %v577, %v578
    %v580 = vrot.slane %v332, 4
    %v581 = vadd.f32 %v332, %v580
    %v582 = vrot.slane %v581, 2
    %v583 = vadd.f32 %v581, %v582
    %v584 = vrot.slane %v583, 1
    %v585 = vadd.f32 %v583, %v584
    %v586 = vrot.slane %v333, 4
    %v587 = vadd.f32 %v333, %v586
    %v588 = vrot.slane %v587, 2
    %v589 = vadd.f32 %v587, %v588
    %v590 = vrot.slane %v589, 1
    %v591 = vadd.f32 %v589, %v590
    %v592 = vrot.slane %v334, 4
    %v593 = vadd.f32 %v334, %v592
    %v594 = vrot.slane %v593, 2
    %v595 = vadd.f32 %v593, %v594
    %v596 = vrot.slane %v595, 1
    %v597 = vadd.f32 %v595, %v596
    %v598 = vrot.slane %v335, 4
    %v599 = vadd.f32 %v335, %v598
    %v600 = vrot.slane %v599, 2
    %v601 = vadd.f32 %v599, %v600
    %v602 = vrot.slane %v601, 1
    %v603 = vadd.f32 %v601, %v602
    %v604 = vrot.slane %v336, 4
    %v605 = vadd.f32 %v336, %v604
    %v606 = vrot.slane %v605, 2
    %v607 = vadd.f32 %v605, %v606
    %v608 = vrot.slane %v607, 1
    %v609 = vadd.f32 %v607, %v608
    %v610 = vrot.slane %v337, 4
    %v611 = vadd.f32 %v337, %v610
    %v612 = vrot.slane %v611, 2
    %v613 = vadd.f32 %v611, %v612
    %v614 = vrot.slane %v613, 1
    %v615 = vadd.f32 %v613, %v614
    %v616 = vrot.slane %v338, 4
    %v617 = vadd.f32 %v338, %v616
    %v618 = vrot.slane %v617, 2
    %v619 = vadd.f32 %v617, %v618
    %v620 = vrot.slane %v619, 1
    %v621 = vadd.f32 %v619, %v620
    %v622 = vrot.slane %v339, 4
    %v623 = vadd.f32 %v339, %v622
    %v624 = vrot.slane %v623, 2
    %v625 = vadd.f32 %v623, %v624
    %v626 = vrot.slane %v625, 1
    %v627 = vadd.f32 %v625, %v626
    %vm628 = vcmask 64512
    %v629 = vsel %vm628, %v235, 0.0
    %630 = vadd.xlane.f32.xlu0 %v629
    %v631 = vpop.xlane.xlu0 %630
    %v632 = vmax.f32 %v631, 1.0
    %v634 = vrot.slane %v632, 1
    %v635 = vrot.slane %v632, 2
    %v636 = vrot.slane %v632, 3
    %v637 = vrot.slane %v632, 4
    %v638 = vrot.slane %v632, 5
    %v639 = vrot.slane %v632, 6
    %v640 = vrot.slane %v632, 7
    %v649 = vrcp.pop %v632
    %v650 = vmul.f32 %v345, %v649
    %v651 = vmul.f32 %v351, %v649
    %v652 = vmul.f32 %v357, %v649
    %v653 = vmul.f32 %v363, %v649
    %v654 = vmul.f32 %v369, %v649
    %v655 = vmul.f32 %v375, %v649
    %v656 = vrcp.pop %v634
    %v657 = vmul.f32 %v381, %v656
    %v658 = vmul.f32 %v387, %v656
    %v659 = vmul.f32 %v393, %v656
    %v660 = vmul.f32 %v399, %v656
    %v661 = vmul.f32 %v405, %v656
    %v662 = vmul.f32 %v411, %v656
    %v663 = vrcp.pop %v635
    %v664 = vmul.f32 %v417, %v663
    %v665 = vmul.f32 %v423, %v663
    %v666 = vmul.f32 %v429, %v663
    %v667 = vmul.f32 %v435, %v663
    %v668 = vmul.f32 %v441, %v663
    %v669 = vmul.f32 %v447, %v663
    %v670 = vrcp.pop %v636
    %v671 = vmul.f32 %v453, %v670
    %v672 = vmul.f32 %v459, %v670
    %v673 = vmul.f32 %v465, %v670
    %v674 = vmul.f32 %v471, %v670
    %v675 = vmul.f32 %v477, %v670
    %v676 = vmul.f32 %v483, %v670
    %v677 = vrcp.pop %v637
    %v678 = vmul.f32 %v489, %v677
    %v679 = vmul.f32 %v495, %v677
    %v680 = vmul.f32 %v501, %v677
    %v681 = vmul.f32 %v507, %v677
    %v682 = vmul.f32 %v513, %v677
    %v683 = vmul.f32 %v519, %v677
    %v684 = vrcp.pop %v638
    %v685 = vmul.f32 %v525, %v684
    %v686 = vmul.f32 %v531, %v684
    %v687 = vmul.f32 %v537, %v684
    %v688 = vmul.f32 %v543, %v684
    %v689 = vmul.f32 %v549, %v684
    %v690 = vmul.f32 %v555, %v684
    %v691 = vrcp.pop %v639
    %v692 = vmul.f32 %v561, %v691
    %v693 = vmul.f32 %v567, %v691
    %v694 = vmul.f32 %v573, %v691
    %v695 = vmul.f32 %v579, %v691
    %v696 = vmul.f32 %v585, %v691
    %v697 = vmul.f32 %v591, %v691
    %v698 = vrcp.pop %v640
    %v699 = vmul.f32 %v597, %v698
    %v700 = vmul.f32 %v603, %v698
    %v701 = vmul.f32 %v609, %v698
    %v702 = vmul.f32 %v615, %v698
    %v703 = vmul.f32 %v621, %v698
    %v704 = vmul.f32 %v627, %v698
    %v705 = vpack.c.bf16 %v650, %v650
    %v706 = vpack.c.bf16 %v651, %v651
    %v707 = vpack.c.bf16 %v652, %v652
    %v708 = vpack.c.bf16 %v653, %v653
    %v709 = vpack.c.bf16 %v654, %v654
    %v710 = vpack.c.bf16 %v655, %v655
    %v711 = vpack.c.bf16 %v657, %v657
    %v712 = vpack.c.bf16 %v658, %v658
    %v713 = vpack.c.bf16 %v659, %v659
    %v714 = vpack.c.bf16 %v660, %v660
    %v715 = vpack.c.bf16 %v661, %v661
    %v716 = vpack.c.bf16 %v662, %v662
    %v717 = vpack.c.bf16 %v664, %v664
    %v718 = vpack.c.bf16 %v665, %v665
    %v719 = vpack.c.bf16 %v666, %v666
    %v720 = vpack.c.bf16 %v667, %v667
    %v721 = vpack.c.bf16 %v668, %v668
    %v722 = vpack.c.bf16 %v669, %v669
    %v723 = vpack.c.bf16 %v671, %v671
    %v724 = vpack.c.bf16 %v672, %v672
    %v725 = vpack.c.bf16 %v673, %v673
    %v726 = vpack.c.bf16 %v674, %v674
    %v727 = vpack.c.bf16 %v675, %v675
    %v728 = vpack.c.bf16 %v676, %v676
    %v729 = vpack.c.bf16 %v678, %v678
    %v730 = vpack.c.bf16 %v679, %v679
    %v731 = vpack.c.bf16 %v680, %v680
    %v732 = vpack.c.bf16 %v681, %v681
    %v733 = vpack.c.bf16 %v682, %v682
    %v734 = vpack.c.bf16 %v683, %v683
    %v735 = vpack.c.bf16 %v685, %v685
    %v736 = vpack.c.bf16 %v686, %v686
    %v737 = vpack.c.bf16 %v687, %v687
    %v738 = vpack.c.bf16 %v688, %v688
    %v739 = vpack.c.bf16 %v689, %v689
    %v740 = vpack.c.bf16 %v690, %v690
    %v741 = vpack.c.bf16 %v692, %v692
    %v742 = vpack.c.bf16 %v693, %v693
    %v743 = vpack.c.bf16 %v694, %v694
    %v744 = vpack.c.bf16 %v695, %v695
    %v745 = vpack.c.bf16 %v696, %v696
    %v746 = vpack.c.bf16 %v697, %v697
    %v747 = vpack.c.bf16 %v699, %v699
    %v748 = vpack.c.bf16 %v700, %v700
    %v749 = vpack.c.bf16 %v701, %v701
    %v750 = vpack.c.bf16 %v702, %v702
    %v751 = vpack.c.bf16 %v703, %v703
    %v752 = vpack.c.bf16 %v704, %v704
    %v753 = vld [vmem:[#allocation7] sm:$0xff]
    %v754 = vld [vmem:[#allocation7 + $0x8] sm:$0xff]
    %v755 = vld [vmem:[#allocation7 + $0x10] sm:$0xff]
    %v756 = vld [vmem:[#allocation7 + $0x18] sm:$0xff]
    %v757 = vld [vmem:[#allocation7 + $0x20] sm:$0xff]
    %v758 = vld [vmem:[#allocation7 + $0x28] sm:$0xff]
    %v759 = vld [vmem:[#allocation7 + $0x30] sm:$0xff]
    %v760 = vld [vmem:[#allocation7 + $0x38] sm:$0xff]
    %v761 = vld [vmem:[#allocation7 + $0x40] sm:$0xff]
    %v762 = vld [vmem:[#allocation7 + $0x48] sm:$0xff]
    %v763 = vld [vmem:[#allocation7 + $0x50] sm:$0xff]
    %v764 = vld [vmem:[#allocation7 + $0x58] sm:$0xff]
    %v765 = vld [vmem:[#allocation7 + $0x60] sm:$0xff]
    %v766 = vld [vmem:[#allocation7 + $0x68] sm:$0xff]
    %v767 = vld [vmem:[#allocation7 + $0x70] sm:$0xff]
    %v768 = vld [vmem:[#allocation7 + $0x78] sm:$0xff]
    %v769 = vld [vmem:[#allocation7 + $0x80] sm:$0xff]
    %v770 = vld [vmem:[#allocation7 + $0x88] sm:$0xff]
    %v771 = vld [vmem:[#allocation7 + $0x90] sm:$0xff]
    %v772 = vld [vmem:[#allocation7 + $0x98] sm:$0xff]
    %v773 = vld [vmem:[#allocation7 + $0xa0] sm:$0xff]
    %v774 = vld [vmem:[#allocation7 + $0xa8] sm:$0xff]
    %v775 = vld [vmem:[#allocation7 + $0xb0] sm:$0xff]
    %v776 = vld [vmem:[#allocation7 + $0xb8] sm:$0xff]
    %v777 = vld [vmem:[#allocation7 + $0xc0] sm:$0xff]
    %v778 = vld [vmem:[#allocation7 + $0xc8] sm:$0xff]
    %v779 = vld [vmem:[#allocation7 + $0xd0] sm:$0xff]
    %v780 = vld [vmem:[#allocation7 + $0xd8] sm:$0xff]
    %v781 = vld [vmem:[#allocation7 + $0xe0] sm:$0xff]
    %v782 = vld [vmem:[#allocation7 + $0xe8] sm:$0xff]
    %v783 = vld [vmem:[#allocation7 + $0xf0] sm:$0xff]
    %v784 = vld [vmem:[#allocation7 + $0xf8] sm:$0xff]
    %v785 = vld [vmem:[#allocation7 + $0x100] sm:$0xff]
    %v786 = vld [vmem:[#allocation7 + $0x108] sm:$0xff]
    %v787 = vld [vmem:[#allocation7 + $0x110] sm:$0xff]
    %v788 = vld [vmem:[#allocation7 + $0x118] sm:$0xff]
    %v789 = vld [vmem:[#allocation7 + $0x120] sm:$0xff]
    %v790 = vld [vmem:[#allocation7 + $0x128] sm:$0xff]
    %v791 = vld [vmem:[#allocation7 + $0x130] sm:$0xff]
    %v792 = vld [vmem:[#allocation7 + $0x138] sm:$0xff]
    %v793 = vld [vmem:[#allocation7 + $0x140] sm:$0xff]
    %v794 = vld [vmem:[#allocation7 + $0x148] sm:$0xff]
    %v795 = vld [vmem:[#allocation7 + $0x150] sm:$0xff]
    %v796 = vld [vmem:[#allocation7 + $0x158] sm:$0xff]
    %v797 = vld [vmem:[#allocation7 + $0x160] sm:$0xff]
    %v798 = vld [vmem:[#allocation7 + $0x168] sm:$0xff]
    %v799 = vld [vmem:[#allocation7 + $0x170] sm:$0xff]
    %v800 = vld [vmem:[#allocation7 + $0x178] sm:$0xff]
    %v801 = vld [vmem:[#allocation7 + $0x180] sm:$0xff]
    %v802 = vld [vmem:[#allocation7 + $0x188] sm:$0xff]
    %v803 = vld [vmem:[#allocation7 + $0x190] sm:$0xff]
    %v804 = vld [vmem:[#allocation7 + $0x198] sm:$0xff]
    %v805 = vld [vmem:[#allocation7 + $0x1a0] sm:$0xff]
    %v806 = vld [vmem:[#allocation7 + $0x1a8] sm:$0xff]
    %v807 = vld [vmem:[#allocation7 + $0x1b0] sm:$0xff]
    %v808 = vld [vmem:[#allocation7 + $0x1b8] sm:$0xff]
    %v809 = vld [vmem:[#allocation7 + $0x1c0] sm:$0xff]
    %v810 = vld [vmem:[#allocation7 + $0x1c8] sm:$0xff]
    %v811 = vld [vmem:[#allocation7 + $0x1d0] sm:$0xff]
    %v812 = vld [vmem:[#allocation7 + $0x1d8] sm:$0xff]
    %v813 = vld [vmem:[#allocation7 + $0x1e0] sm:$0xff]
    %v814 = vld [vmem:[#allocation7 + $0x1e8] sm:$0xff]
    %v815 = vld [vmem:[#allocation7 + $0x1f0] sm:$0xff]
    %v816 = vld [vmem:[#allocation7 + $0x1f8] sm:$0xff]
    %v817 = vld [vmem:[#allocation7 + $0x200] sm:$0xff]
    %v818 = vld [vmem:[#allocation7 + $0x208] sm:$0xff]
    %v819 = vld [vmem:[#allocation7 + $0x210] sm:$0xff]
    %v820 = vld [vmem:[#allocation7 + $0x218] sm:$0xff]
    %v821 = vld [vmem:[#allocation7 + $0x220] sm:$0xff]
    %v822 = vld [vmem:[#allocation7 + $0x228] sm:$0xff]
    %v823 = vld [vmem:[#allocation7 + $0x230] sm:$0xff]
    %v824 = vld [vmem:[#allocation7 + $0x238] sm:$0xff]
    %v825 = vld [vmem:[#allocation7 + $0x240] sm:$0xff]
    %v826 = vld [vmem:[#allocation7 + $0x248] sm:$0xff]
    %v827 = vld [vmem:[#allocation7 + $0x250] sm:$0xff]
    %v828 = vld [vmem:[#allocation7 + $0x258] sm:$0xff]
    %v829 = vld [vmem:[#allocation7 + $0x260] sm:$0xff]
    %v830 = vld [vmem:[#allocation7 + $0x268] sm:$0xff]
    %v831 = vld [vmem:[#allocation7 + $0x270] sm:$0xff]
    %v832 = vld [vmem:[#allocation7 + $0x278] sm:$0xff]
    %v833 = vld [vmem:[#allocation7 + $0x280] sm:$0xff]
    %v834 = vld [vmem:[#allocation7 + $0x288] sm:$0xff]
    %v835 = vld [vmem:[#allocation7 + $0x290] sm:$0xff]
    %v836 = vld [vmem:[#allocation7 + $0x298] sm:$0xff]
    %v837 = vld [vmem:[#allocation7 + $0x2a0] sm:$0xff]
    %v838 = vld [vmem:[#allocation7 + $0x2a8] sm:$0xff]
    %v839 = vld [vmem:[#allocation7 + $0x2b0] sm:$0xff]
    %v840 = vld [vmem:[#allocation7 + $0x2b8] sm:$0xff]
    %v841 = vld [vmem:[#allocation7 + $0x2c0] sm:$0xff]
    %v842 = vld [vmem:[#allocation7 + $0x2c8] sm:$0xff]
    %v843 = vld [vmem:[#allocation7 + $0x2d0] sm:$0xff]
    %v844 = vld [vmem:[#allocation7 + $0x2d8] sm:$0xff]
    %v845 = vld [vmem:[#allocation7 + $0x2e0] sm:$0xff]
    %v846 = vld [vmem:[#allocation7 + $0x2e8] sm:$0xff]
    %v847 = vld [vmem:[#allocation7 + $0x2f0] sm:$0xff]
    %v848 = vld [vmem:[#allocation7 + $0x2f8] sm:$0xff]
    %v849 = vld [vmem:[#allocation7 + $0x300] sm:$0xff]
    %v850 = vld [vmem:[#allocation7 + $0x308] sm:$0xff]
    %v851 = vld [vmem:[#allocation7 + $0x310] sm:$0xff]
    %v852 = vld [vmem:[#allocation7 + $0x318] sm:$0xff]
    %v853 = vld [vmem:[#allocation7 + $0x320] sm:$0xff]
    %v854 = vld [vmem:[#allocation7 + $0x328] sm:$0xff]
    %v855 = vld [vmem:[#allocation7 + $0x330] sm:$0xff]
    %v856 = vld [vmem:[#allocation7 + $0x338] sm:$0xff]
    %v857 = vld [vmem:[#allocation7 + $0x340] sm:$0xff]
    %v858 = vld [vmem:[#allocation7 + $0x348] sm:$0xff]
    %v859 = vld [vmem:[#allocation7 + $0x350] sm:$0xff]
    %v860 = vld [vmem:[#allocation7 + $0x358] sm:$0xff]
    %v861 = vld [vmem:[#allocation7 + $0x360] sm:$0xff]
    %v862 = vld [vmem:[#allocation7 + $0x368] sm:$0xff]
    %v863 = vld [vmem:[#allocation7 + $0x370] sm:$0xff]
    %v864 = vld [vmem:[#allocation7 + $0x378] sm:$0xff]
    %v865 = vld [vmem:[#allocation7 + $0x380] sm:$0xff]
    %v866 = vld [vmem:[#allocation7 + $0x388] sm:$0xff]
    %v867 = vld [vmem:[#allocation7 + $0x390] sm:$0xff]
    %v868 = vld [vmem:[#allocation7 + $0x398] sm:$0xff]
    %v869 = vld [vmem:[#allocation7 + $0x3a0] sm:$0xff]
    %v870 = vld [vmem:[#allocation7 + $0x3a8] sm:$0xff]
    %v871 = vld [vmem:[#allocation7 + $0x3b0] sm:$0xff]
    %v872 = vld [vmem:[#allocation7 + $0x3b8] sm:$0xff]
    %v873 = vld [vmem:[#allocation7 + $0x3c0] sm:$0xff]
    %v874 = vld [vmem:[#allocation7 + $0x3c8] sm:$0xff]
    %v875 = vld [vmem:[#allocation7 + $0x3d0] sm:$0xff]
    %v876 = vld [vmem:[#allocation7 + $0x3d8] sm:$0xff]
    %v877 = vld [vmem:[#allocation7 + $0x3e0] sm:$0xff]
    %v878 = vld [vmem:[#allocation7 + $0x3e8] sm:$0xff]
    %v879 = vld [vmem:[#allocation7 + $0x3f0] sm:$0xff]
    %v880 = vld [vmem:[#allocation7 + $0x3f8] sm:$0xff]
    %v881 = vld [vmem:[#allocation7 + $0x400] sm:$0xff]
    %v882 = vld [vmem:[#allocation7 + $0x408] sm:$0xff]
    %v883 = vld [vmem:[#allocation7 + $0x410] sm:$0xff]
    %v884 = vld [vmem:[#allocation7 + $0x418] sm:$0xff]
    %v885 = vld [vmem:[#allocation7 + $0x420] sm:$0xff]
    %v886 = vld [vmem:[#allocation7 + $0x428] sm:$0xff]
    %v887 = vld [vmem:[#allocation7 + $0x430] sm:$0xff]
    %v888 = vld [vmem:[#allocation7 + $0x438] sm:$0xff]
    %v889 = vld [vmem:[#allocation7 + $0x440] sm:$0xff]
    %v890 = vld [vmem:[#allocation7 + $0x448] sm:$0xff]
    %v891 = vld [vmem:[#allocation7 + $0x450] sm:$0xff]
    %v892 = vld [vmem:[#allocation7 + $0x458] sm:$0xff]
    %v893 = vld [vmem:[#allocation7 + $0x460] sm:$0xff]
    %v894 = vld [vmem:[#allocation7 + $0x468] sm:$0xff]
    %v895 = vld [vmem:[#allocation7 + $0x470] sm:$0xff]
    %v896 = vld [vmem:[#allocation7 + $0x478] sm:$0xff]
    %v897 = vld [vmem:[#allocation7 + $0x480] sm:$0xff]
    %v898 = vld [vmem:[#allocation7 + $0x488] sm:$0xff]
    %v899 = vld [vmem:[#allocation7 + $0x490] sm:$0xff]
    %v900 = vld [vmem:[#allocation7 + $0x498] sm:$0xff]
    %v901 = vld [vmem:[#allocation7 + $0x4a0] sm:$0xff]
    %v902 = vld [vmem:[#allocation7 + $0x4a8] sm:$0xff]
    %v903 = vld [vmem:[#allocation7 + $0x4b0] sm:$0xff]
    %v904 = vld [vmem:[#allocation7 + $0x4b8] sm:$0xff]
    %v905 = vld [vmem:[#allocation7 + $0x4c0] sm:$0xff]
    %v906 = vld [vmem:[#allocation7 + $0x4c8] sm:$0xff]
    %v907 = vld [vmem:[#allocation7 + $0x4d0] sm:$0xff]
    %v908 = vld [vmem:[#allocation7 + $0x4d8] sm:$0xff]
    %v909 = vld [vmem:[#allocation7 + $0x4e0] sm:$0xff]
    %v910 = vld [vmem:[#allocation7 + $0x4e8] sm:$0xff]
    %v911 = vld [vmem:[#allocation7 + $0x4f0] sm:$0xff]
    %v912 = vld [vmem:[#allocation7 + $0x4f8] sm:$0xff]
    %v913 = vld [vmem:[#allocation7 + $0x500] sm:$0xff]
    %v914 = vld [vmem:[#allocation7 + $0x508] sm:$0xff]
    %v915 = vld [vmem:[#allocation7 + $0x510] sm:$0xff]
    %v916 = vld [vmem:[#allocation7 + $0x518] sm:$0xff]
    %v917 = vld [vmem:[#allocation7 + $0x520] sm:$0xff]
    %v918 = vld [vmem:[#allocation7 + $0x528] sm:$0xff]
    %v919 = vld [vmem:[#allocation7 + $0x530] sm:$0xff]
    %v920 = vld [vmem:[#allocation7 + $0x538] sm:$0xff]
    %v921 = vld [vmem:[#allocation7 + $0x540] sm:$0xff]
    %v922 = vld [vmem:[#allocation7 + $0x548] sm:$0xff]
    %v923 = vld [vmem:[#allocation7 + $0x550] sm:$0xff]
    %v924 = vld [vmem:[#allocation7 + $0x558] sm:$0xff]
    %v925 = vld [vmem:[#allocation7 + $0x560] sm:$0xff]
    %v926 = vld [vmem:[#allocation7 + $0x568] sm:$0xff]
    %v927 = vld [vmem:[#allocation7 + $0x570] sm:$0xff]
    %v928 = vld [vmem:[#allocation7 + $0x578] sm:$0xff]
    %v929 = vld [vmem:[#allocation7 + $0x580] sm:$0xff]
    %v930 = vld [vmem:[#allocation7 + $0x588] sm:$0xff]
    %v931 = vld [vmem:[#allocation7 + $0x590] sm:$0xff]
    %v932 = vld [vmem:[#allocation7 + $0x598] sm:$0xff]
    %v933 = vld [vmem:[#allocation7 + $0x5a0] sm:$0xff]
    %v934 = vld [vmem:[#allocation7 + $0x5a8] sm:$0xff]
    %v935 = vld [vmem:[#allocation7 + $0x5b0] sm:$0xff]
    %v936 = vld [vmem:[#allocation7 + $0x5b8] sm:$0xff]
    %v937 = vld [vmem:[#allocation7 + $0x5c0] sm:$0xff]
    %v938 = vld [vmem:[#allocation7 + $0x5c8] sm:$0xff]
    %v939 = vld [vmem:[#allocation7 + $0x5d0] sm:$0xff]
    %v940 = vld [vmem:[#allocation7 + $0x5d8] sm:$0xff]
    %v941 = vld [vmem:[#allocation7 + $0x5e0] sm:$0xff]
    %v942 = vld [vmem:[#allocation7 + $0x5e8] sm:$0xff]
    %v943 = vld [vmem:[#allocation7 + $0x5f0] sm:$0xff]
    %v944 = vld [vmem:[#allocation7 + $0x5f8] sm:$0xff]
    %v945 = vld [vmem:[#allocation7 + $0x600] sm:$0xff]
    %v946 = vld [vmem:[#allocation7 + $0x608] sm:$0xff]
    %v947 = vld [vmem:[#allocation7 + $0x610] sm:$0xff]
    %v948 = vld [vmem:[#allocation7 + $0x618] sm:$0xff]
    %v949 = vld [vmem:[#allocation7 + $0x620] sm:$0xff]
    %v950 = vld [vmem:[#allocation7 + $0x628] sm:$0xff]
    %v951 = vld [vmem:[#allocation7 + $0x630] sm:$0xff]
    %v952 = vld [vmem:[#allocation7 + $0x638] sm:$0xff]
    %v953 = vld [vmem:[#allocation7 + $0x640] sm:$0xff]
    %v954 = vld [vmem:[#allocation7 + $0x648] sm:$0xff]
    %v955 = vld [vmem:[#allocation7 + $0x650] sm:$0xff]
    %v956 = vld [vmem:[#allocation7 + $0x658] sm:$0xff]
    %v957 = vld [vmem:[#allocation7 + $0x660] sm:$0xff]
    %v958 = vld [vmem:[#allocation7 + $0x668] sm:$0xff]
    %v959 = vld [vmem:[#allocation7 + $0x670] sm:$0xff]
    %v960 = vld [vmem:[#allocation7 + $0x678] sm:$0xff]
    %v961 = vld [vmem:[#allocation7 + $0x680] sm:$0xff]
    %v962 = vld [vmem:[#allocation7 + $0x688] sm:$0xff]
    %v963 = vld [vmem:[#allocation7 + $0x690] sm:$0xff]
    %v964 = vld [vmem:[#allocation7 + $0x698] sm:$0xff]
    %v965 = vld [vmem:[#allocation7 + $0x6a0] sm:$0xff]
    %v966 = vld [vmem:[#allocation7 + $0x6a8] sm:$0xff]
    %v967 = vld [vmem:[#allocation7 + $0x6b0] sm:$0xff]
    %v968 = vld [vmem:[#allocation7 + $0x6b8] sm:$0xff]
    %v969 = vld [vmem:[#allocation7 + $0x6c0] sm:$0xff]
    %v970 = vld [vmem:[#allocation7 + $0x6c8] sm:$0xff]
    %v971 = vld [vmem:[#allocation7 + $0x6d0] sm:$0xff]
    %v972 = vld [vmem:[#allocation7 + $0x6d8] sm:$0xff]
    %v973 = vld [vmem:[#allocation7 + $0x6e0] sm:$0xff]
    %v974 = vld [vmem:[#allocation7 + $0x6e8] sm:$0xff]
    %v975 = vld [vmem:[#allocation7 + $0x6f0] sm:$0xff]
    %v976 = vld [vmem:[#allocation7 + $0x6f8] sm:$0xff]
    %v977 = vld [vmem:[#allocation7 + $0x700] sm:$0xff]
    %v978 = vld [vmem:[#allocation7 + $0x708] sm:$0xff]
    %v979 = vld [vmem:[#allocation7 + $0x710] sm:$0xff]
    %v980 = vld [vmem:[#allocation7 + $0x718] sm:$0xff]
    %v981 = vld [vmem:[#allocation7 + $0x720] sm:$0xff]
    %v982 = vld [vmem:[#allocation7 + $0x728] sm:$0xff]
    %v983 = vld [vmem:[#allocation7 + $0x730] sm:$0xff]
    %v984 = vld [vmem:[#allocation7 + $0x738] sm:$0xff]
    %v985 = vld [vmem:[#allocation7 + $0x740] sm:$0xff]
    %v986 = vld [vmem:[#allocation7 + $0x748] sm:$0xff]
    %v987 = vld [vmem:[#allocation7 + $0x750] sm:$0xff]
    %v988 = vld [vmem:[#allocation7 + $0x758] sm:$0xff]
    %v989 = vld [vmem:[#allocation7 + $0x760] sm:$0xff]
    %v990 = vld [vmem:[#allocation7 + $0x768] sm:$0xff]
    %v991 = vld [vmem:[#allocation7 + $0x770] sm:$0xff]
    %v992 = vld [vmem:[#allocation7 + $0x778] sm:$0xff]
    %v993 = vld [vmem:[#allocation7 + $0x780] sm:$0xff]
    %v994 = vld [vmem:[#allocation7 + $0x788] sm:$0xff]
    %v995 = vld [vmem:[#allocation7 + $0x790] sm:$0xff]
    %v996 = vld [vmem:[#allocation7 + $0x798] sm:$0xff]
    %v997 = vld [vmem:[#allocation7 + $0x7a0] sm:$0xff]
    %v998 = vld [vmem:[#allocation7 + $0x7a8] sm:$0xff]
    %v999 = vld [vmem:[#allocation7 + $0x7b0] sm:$0xff]
    %v1000 = vld [vmem:[#allocation7 + $0x7b8] sm:$0xff]
    %v1001 = vld [vmem:[#allocation7 + $0x7c0] sm:$0xff]
    %v1002 = vld [vmem:[#allocation7 + $0x7c8] sm:$0xff]
    %v1003 = vld [vmem:[#allocation7 + $0x7d0] sm:$0xff]
    %v1004 = vld [vmem:[#allocation7 + $0x7d8] sm:$0xff]
    %v1005 = vld [vmem:[#allocation7 + $0x7e0] sm:$0xff]
    %v1006 = vld [vmem:[#allocation7 + $0x7e8] sm:$0xff]
    %v1007 = vld [vmem:[#allocation7 + $0x7f0] sm:$0xff]
    %v1008 = vld [vmem:[#allocation7 + $0x7f8] sm:$0xff]
    %v1009 = vld [vmem:[#allocation7 + $0x800] sm:$0xff]
    %v1010 = vld [vmem:[#allocation7 + $0x808] sm:$0xff]
    %v1011 = vld [vmem:[#allocation7 + $0x810] sm:$0xff]
    %v1012 = vld [vmem:[#allocation7 + $0x818] sm:$0xff]
    %v1013 = vld [vmem:[#allocation7 + $0x820] sm:$0xff]
    %v1014 = vld [vmem:[#allocation7 + $0x828] sm:$0xff]
    %v1015 = vld [vmem:[#allocation7 + $0x830] sm:$0xff]
    %v1016 = vld [vmem:[#allocation7 + $0x838] sm:$0xff]
    %v1017 = vld [vmem:[#allocation7 + $0x840] sm:$0xff]
    %v1018 = vld [vmem:[#allocation7 + $0x848] sm:$0xff]
    %v1019 = vld [vmem:[#allocation7 + $0x850] sm:$0xff]
    %v1020 = vld [vmem:[#allocation7 + $0x858] sm:$0xff]
    %v1021 = vld [vmem:[#allocation7 + $0x860] sm:$0xff]
    %v1022 = vld [vmem:[#allocation7 + $0x868] sm:$0xff]
    %v1023 = vld [vmem:[#allocation7 + $0x870] sm:$0xff]
    %v1024 = vld [vmem:[#allocation7 + $0x878] sm:$0xff]
    %v1025 = vld [vmem:[#allocation7 + $0x880] sm:$0xff]
    %v1026 = vld [vmem:[#allocation7 + $0x888] sm:$0xff]
    %v1027 = vld [vmem:[#allocation7 + $0x890] sm:$0xff]
    %v1028 = vld [vmem:[#allocation7 + $0x898] sm:$0xff]
    %v1029 = vld [vmem:[#allocation7 + $0x8a0] sm:$0xff]
    %v1030 = vld [vmem:[#allocation7 + $0x8a8] sm:$0xff]
    %v1031 = vld [vmem:[#allocation7 + $0x8b0] sm:$0xff]
    %v1032 = vld [vmem:[#allocation7 + $0x8b8] sm:$0xff]
    %v1033 = vld [vmem:[#allocation7 + $0x8c0] sm:$0xff]
    %v1034 = vld [vmem:[#allocation7 + $0x8c8] sm:$0xff]
    %v1035 = vld [vmem:[#allocation7 + $0x8d0] sm:$0xff]
    %v1036 = vld [vmem:[#allocation7 + $0x8d8] sm:$0xff]
    %v1037 = vld [vmem:[#allocation7 + $0x8e0] sm:$0xff]
    %v1038 = vld [vmem:[#allocation7 + $0x8e8] sm:$0xff]
    %v1039 = vld [vmem:[#allocation7 + $0x8f0] sm:$0xff]
    %v1040 = vld [vmem:[#allocation7 + $0x8f8] sm:$0xff]
    %v1041 = vld [vmem:[#allocation8] sm:$0x3f]
    %v1043 = vlaneseq
    %v1044 = vshrl.u32 %v1043, 7
    %v1045 = vsub.s32 0, %v1044
    %v1046 = vrot.slane %v1041, %v1045
    %v1047 = vlaneseq
    %v1048 = vshrl.u32 %v1047, 7
    %v1049 = vsub.s32 1, %v1048
    %v1050 = vrot.slane %v1041, %v1049
    %v1051 = vlaneseq
    %v1052 = vshrl.u32 %v1051, 7
    %v1053 = vsub.s32 2, %v1052
    %v1054 = vrot.slane %v1041, %v1053
    %v1055 = vlaneseq
    %v1056 = vshrl.u32 %v1055, 7
    %v1057 = vsub.s32 3, %v1056
    %v1058 = vrot.slane %v1041, %v1057
    %v1059 = vlaneseq
    %v1060 = vshrl.u32 %v1059, 7
    %v1061 = vsub.s32 4, %v1060
    %v1062 = vrot.slane %v1041, %v1061
    %v1063 = vlaneseq
    %v1064 = vshrl.u32 %v1063, 7
    %v1065 = vsub.s32 5, %v1064
    %v1066 = vrot.slane %v1041, %v1065
    %v1121 = vunpack.c.l.b16 %v705
    %v1122 = vunpack.c.l.b16 %v706
    %v1123 = vunpack.c.l.b16 %v707
    %v1124 = vunpack.c.l.b16 %v708
    %v1125 = vunpack.c.l.b16 %v709
    %v1126 = vunpack.c.l.b16 %v710
    %v1127 = vunpack.c.l.b16 %v711
    %v1128 = vunpack.c.l.b16 %v712
    %v1129 = vunpack.c.l.b16 %v713
    %v1130 = vunpack.c.l.b16 %v714
    %v1131 = vunpack.c.l.b16 %v715
    %v1132 = vunpack.c.l.b16 %v716
    %v1133 = vunpack.c.l.b16 %v717
    %v1134 = vunpack.c.l.b16 %v718
    %v1135 = vunpack.c.l.b16 %v719
    %v1136 = vunpack.c.l.b16 %v720
    %v1137 = vunpack.c.l.b16 %v721
    %v1138 = vunpack.c.l.b16 %v722
    %v1139 = vunpack.c.l.b16 %v723
    %v1140 = vunpack.c.l.b16 %v724
    %v1141 = vunpack.c.l.b16 %v725
    %v1142 = vunpack.c.l.b16 %v726
    %v1143 = vunpack.c.l.b16 %v727
    %v1144 = vunpack.c.l.b16 %v728
    %v1145 = vunpack.c.l.b16 %v729
    %v1146 = vunpack.c.l.b16 %v730
    %v1147 = vunpack.c.l.b16 %v731
    %v1148 = vunpack.c.l.b16 %v732
    %v1149 = vunpack.c.l.b16 %v733
    %v1150 = vunpack.c.l.b16 %v734
    %v1151 = vunpack.c.l.b16 %v735
    %v1152 = vunpack.c.l.b16 %v736
    %v1153 = vunpack.c.l.b16 %v737
    %v1154 = vunpack.c.l.b16 %v738
    %v1155 = vunpack.c.l.b16 %v739
    %v1156 = vunpack.c.l.b16 %v740
    %v1157 = vunpack.c.l.b16 %v741
    %v1158 = vunpack.c.l.b16 %v742
    %v1159 = vunpack.c.l.b16 %v743
    %v1160 = vunpack.c.l.b16 %v744
    %v1161 = vunpack.c.l.b16 %v745
    %v1162 = vunpack.c.l.b16 %v746
    %v1163 = vunpack.c.l.b16 %v747
    %v1164 = vunpack.c.l.b16 %v748
    %v1165 = vunpack.c.l.b16 %v749
    %v1166 = vunpack.c.l.b16 %v750
    %v1167 = vunpack.c.l.b16 %v751
    %v1168 = vunpack.c.l.b16 %v752
    %v1169 = vrot.slane %v1127, 7
    %vm1170 = vcmask 1041409
    %v1171 = vsel %vm1170, %v1169, %v1121
    %v1172 = vrot.slane %v1133, 6
    %vm1173 = vcmask 1042434
    %v1174 = vsel %vm1173, %v1172, %v1171
    %v1175 = vrot.slane %v1139, 5
    %vm1176 = vcmask 1043459
    %v1177 = vsel %vm1176, %v1175, %v1174
    %v1178 = vrot.slane %v1145, 4
    %vm1179 = vcmask 1044484
    %v1180 = vsel %vm1179, %v1178, %v1177
    %v1181 = vrot.slane %v1151, 3
    %vm1182 = vcmask 1045509
    %v1183 = vsel %vm1182, %v1181, %v1180
    %v1184 = vrot.slane %v1157, 2
    %vm1185 = vcmask 1046534
    %v1186 = vsel %vm1185, %v1184, %v1183
    %v1187 = vrot.slane %v1163, 1
    %vm1188 = vcmask 1047559
    %v1189 = vsel %vm1188, %v1187, %v1186
    %v1190 = vrot.slane %v1128, 7
    %v1191 = vsel %vm1170, %v1190, %v1122
    %v1192 = vrot.slane %v1134, 6
    %v1193 = vsel %vm1173, %v1192, %v1191
    %v1194 = vrot.slane %v1140, 5
    %v1195 = vsel %vm1176, %v1194, %v1193
    %v1196 = vrot.slane %v1146, 4
    %v1197 = vsel %vm1179, %v1196, %v1195
    %v1198 = vrot.slane %v1152, 3
    %v1199 = vsel %vm1182, %v1198, %v1197
    %v1200 = vrot.slane %v1158, 2
    %v1201 = vsel %vm1185, %v1200, %v1199
    %v1202 = vrot.slane %v1164, 1
    %v1203 = vsel %vm1188, %v1202, %v1201
    %v1204 = vrot.slane %v1129, 7
    %v1205 = vsel %vm1170, %v1204, %v1123
    %v1206 = vrot.slane %v1135, 6
    %v1207 = vsel %vm1173, %v1206, %v1205
    %v1208 = vrot.slane %v1141, 5
    %v1209 = vsel %vm1176, %v1208, %v1207
    %v1210 = vrot.slane %v1147, 4
    %v1211 = vsel %vm1179, %v1210, %v1209
    %v1212 = vrot.slane %v1153, 3
    %v1213 = vsel %vm1182, %v1212, %v1211
    %v1214 = vrot.slane %v1159, 2
    %v1215 = vsel %vm1185, %v1214, %v1213
    %v1216 = vrot.slane %v1165, 1
    %v1217 = vsel %vm1188, %v1216, %v1215
    %v1218 = vrot.slane %v1130, 7
    %v1219 = vsel %vm1170, %v1218, %v1124
    %v1220 = vrot.slane %v1136, 6
    %v1221 = vsel %vm1173, %v1220, %v1219
    %v1222 = vrot.slane %v1142, 5
    %v1223 = vsel %vm1176, %v1222, %v1221
    %v1224 = vrot.slane %v1148, 4
    %v1225 = vsel %vm1179, %v1224, %v1223
    %v1226 = vrot.slane %v1154, 3
    %v1227 = vsel %vm1182, %v1226, %v1225
    %v1228 = vrot.slane %v1160, 2
    %v1229 = vsel %vm1185, %v1228, %v1227
    %v1230 = vrot.slane %v1166, 1
    %v1231 = vsel %vm1188, %v1230, %v1229
    %v1232 = vrot.slane %v1131, 7
    %v1233 = vsel %vm1170, %v1232, %v1125
    %v1234 = vrot.slane %v1137, 6
    %v1235 = vsel %vm1173, %v1234, %v1233
    %v1236 = vrot.slane %v1143, 5
    %v1237 = vsel %vm1176, %v1236, %v1235
    %v1238 = vrot.slane %v1149, 4
    %v1239 = vsel %vm1179, %v1238, %v1237
    %v1240 = vrot.slane %v1155, 3
    %v1241 = vsel %vm1182, %v1240, %v1239
    %v1242 = vrot.slane %v1161, 2
    %v1243 = vsel %vm1185, %v1242, %v1241
    %v1244 = vrot.slane %v1167, 1
    %v1245 = vsel %vm1188, %v1244, %v1243
    %v1246 = vrot.slane %v1132, 7
    %v1247 = vsel %vm1170, %v1246, %v1126
    %v1248 = vrot.slane %v1138, 6
    %v1249 = vsel %vm1173, %v1248, %v1247
    %v1250 = vrot.slane %v1144, 5
    %v1251 = vsel %vm1176, %v1250, %v1249
    %v1252 = vrot.slane %v1150, 4
    %v1253 = vsel %vm1179, %v1252, %v1251
    %v1254 = vrot.slane %v1156, 3
    %v1255 = vsel %vm1182, %v1254, %v1253
    %v1256 = vrot.slane %v1162, 2
    %v1257 = vsel %vm1185, %v1256, %v1255
    %v1258 = vrot.slane %v1168, 1
    %v1259 = vsel %vm1188, %v1258, %v1257
    %v1260 = vpack.c.b16 %v1189, %v1189
    %v1261 = vpack.c.b16 %v1203, %v1203
    %v1262 = vpack.c.b16 %v1217, %v1217
    %v1263 = vpack.c.b16 %v1231, %v1231
    %v1264 = vpack.c.b16 %v1245, %v1245
    %v1265 = vpack.c.b16 %v1259, %v1259
    %v1560 = vunpack.c.l.b16 %v753
    %v1561 = vunpack.c.h.b16 %v753
    %v1562 = vunpack.c.l.b16 %v754
    %v1563 = vunpack.c.h.b16 %v754
    %v1564 = vunpack.c.l.b16 %v755
    %v1565 = vunpack.c.h.b16 %v755
    %v1566 = vunpack.c.l.b16 %v756
    %v1567 = vunpack.c.h.b16 %v756
    %v1568 = vunpack.c.l.b16 %v757
    %v1569 = vunpack.c.h.b16 %v757
    %v1570 = vunpack.c.l.b16 %v758
    %v1571 = vunpack.c.h.b16 %v758
    %v1572 = vunpack.c.l.b16 %v759
    %v1573 = vunpack.c.h.b16 %v759
    %v1574 = vunpack.c.l.b16 %v760
    %v1575 = vunpack.c.h.b16 %v760
    %v1576 = vunpack.c.l.b16 %v761
    %v1577 = vunpack.c.h.b16 %v761
    %v1578 = vunpack.c.l.b16 %v762
    %v1579 = vunpack.c.h.b16 %v762
    %v1580 = vunpack.c.l.b16 %v763
    %v1581 = vunpack.c.h.b16 %v763
    %v1582 = vunpack.c.l.b16 %v764
    %v1583 = vunpack.c.h.b16 %v764
    %v1584 = vunpack.c.l.b16 %v765
    %v1585 = vunpack.c.h.b16 %v765
    %v1586 = vunpack.c.l.b16 %v766
    %v1587 = vunpack.c.h.b16 %v766
    %v1588 = vunpack.c.l.b16 %v767
    %v1589 = vunpack.c.h.b16 %v767
    %v1590 = vunpack.c.l.b16 %v768
    %v1591 = vunpack.c.h.b16 %v768
    %v1592 = vunpack.c.l.b16 %v769
    %v1593 = vunpack.c.h.b16 %v769
    %v1594 = vunpack.c.l.b16 %v770
    %v1595 = vunpack.c.h.b16 %v770
    %v1596 = vunpack.c.l.b16 %v771
    %v1597 = vunpack.c.h.b16 %v771
    %v1598 = vunpack.c.l.b16 %v772
    %v1599 = vunpack.c.h.b16 %v772
    %v1600 = vunpack.c.l.b16 %v773
    %v1601 = vunpack.c.h.b16 %v773
    %v1602 = vunpack.c.l.b16 %v774
    %v1603 = vunpack.c.h.b16 %v774
    %v1604 = vunpack.c.l.b16 %v775
    %v1605 = vunpack.c.h.b16 %v775
    %v1606 = vunpack.c.l.b16 %v776
    %v1607 = vunpack.c.h.b16 %v776
    %v1608 = vunpack.c.l.b16 %v777
    %v1609 = vunpack.c.h.b16 %v777
    %v1610 = vunpack.c.l.b16 %v778
    %v1611 = vunpack.c.h.b16 %v778
    %v1612 = vunpack.c.l.b16 %v779
    %v1613 = vunpack.c.h.b16 %v779
    %v1614 = vunpack.c.l.b16 %v780
    %v1615 = vunpack.c.h.b16 %v780
    %v1616 = vunpack.c.l.b16 %v781
    %v1617 = vunpack.c.h.b16 %v781
    %v1618 = vunpack.c.l.b16 %v782
    %v1619 = vunpack.c.h.b16 %v782
    %v1620 = vunpack.c.l.b16 %v783
    %v1621 = vunpack.c.h.b16 %v783
    %v1622 = vunpack.c.l.b16 %v784
    %v1623 = vunpack.c.h.b16 %v784
    %v1624 = vunpack.c.l.b16 %v785
    %v1625 = vunpack.c.h.b16 %v785
    %v1626 = vunpack.c.l.b16 %v786
    %v1627 = vunpack.c.h.b16 %v786
    %v1628 = vunpack.c.l.b16 %v787
    %v1629 = vunpack.c.h.b16 %v787
    %v1630 = vunpack.c.l.b16 %v788
    %v1631 = vunpack.c.h.b16 %v788
    %v1632 = vunpack.c.l.b16 %v789
    %v1633 = vunpack.c.h.b16 %v789
    %v1634 = vunpack.c.l.b16 %v790
    %v1635 = vunpack.c.h.b16 %v790
    %v1636 = vunpack.c.l.b16 %v791
    %v1637 = vunpack.c.h.b16 %v791
    %v1638 = vunpack.c.l.b16 %v792
    %v1639 = vunpack.c.h.b16 %v792
    %v1640 = vunpack.c.l.b16 %v793
    %v1641 = vunpack.c.h.b16 %v793
    %v1642 = vunpack.c.l.b16 %v794
    %v1643 = vunpack.c.h.b16 %v794
    %v1644 = vunpack.c.l.b16 %v795
    %v1645 = vunpack.c.h.b16 %v795
    %v1646 = vunpack.c.l.b16 %v796
    %v1647 = vunpack.c.h.b16 %v796
    %v1648 = vunpack.c.l.b16 %v797
    %v1649 = vunpack.c.h.b16 %v797
    %v1650 = vunpack.c.l.b16 %v798
    %v1651 = vunpack.c.h.b16 %v798
    %v1652 = vunpack.c.l.b16 %v799
    %v1653 = vunpack.c.h.b16 %v799
    %v1654 = vunpack.c.l.b16 %v800
    %v1655 = vunpack.c.h.b16 %v800
    %v1656 = vunpack.c.l.b16 %v801
    %v1657 = vunpack.c.h.b16 %v801
    %v1658 = vunpack.c.l.b16 %v802
    %v1659 = vunpack.c.h.b16 %v802
    %v1660 = vunpack.c.l.b16 %v803
    %v1661 = vunpack.c.h.b16 %v803
    %v1662 = vunpack.c.l.b16 %v804
    %v1663 = vunpack.c.h.b16 %v804
    %v1664 = vunpack.c.l.b16 %v805
    %v1665 = vunpack.c.h.b16 %v805
    %v1666 = vunpack.c.l.b16 %v806
    %v1667 = vunpack.c.h.b16 %v806
    %v1668 = vunpack.c.l.b16 %v807
    %v1669 = vunpack.c.h.b16 %v807
    %v1670 = vunpack.c.l.b16 %v808
    %v1671 = vunpack.c.h.b16 %v808
    %v1672 = vunpack.c.l.b16 %v809
    %v1673 = vunpack.c.h.b16 %v809
    %v1674 = vunpack.c.l.b16 %v810
    %v1675 = vunpack.c.h.b16 %v810
    %v1676 = vunpack.c.l.b16 %v811
    %v1677 = vunpack.c.h.b16 %v811
    %v1678 = vunpack.c.l.b16 %v812
    %v1679 = vunpack.c.h.b16 %v812
    %v1680 = vunpack.c.l.b16 %v813
    %v1681 = vunpack.c.h.b16 %v813
    %v1682 = vunpack.c.l.b16 %v814
    %v1683 = vunpack.c.h.b16 %v814
    %v1684 = vunpack.c.l.b16 %v815
    %v1685 = vunpack.c.h.b16 %v815
    %v1686 = vunpack.c.l.b16 %v816
    %v1687 = vunpack.c.h.b16 %v816
    %v1688 = vunpack.c.l.b16 %v817
    %v1689 = vunpack.c.h.b16 %v817
    %v1690 = vunpack.c.l.b16 %v818
    %v1691 = vunpack.c.h.b16 %v818
    %v1692 = vunpack.c.l.b16 %v819
    %v1693 = vunpack.c.h.b16 %v819
    %v1694 = vunpack.c.l.b16 %v820
    %v1695 = vunpack.c.h.b16 %v820
    %v1696 = vunpack.c.l.b16 %v821
    %v1697 = vunpack.c.h.b16 %v821
    %v1698 = vunpack.c.l.b16 %v822
    %v1699 = vunpack.c.h.b16 %v822
    %v1700 = vunpack.c.l.b16 %v823
    %v1701 = vunpack.c.h.b16 %v823
    %v1702 = vunpack.c.l.b16 %v824
    %v1703 = vunpack.c.h.b16 %v824
    %v1704 = vunpack.c.l.b16 %v825
    %v1705 = vunpack.c.h.b16 %v825
    %v1706 = vunpack.c.l.b16 %v826
    %v1707 = vunpack.c.h.b16 %v826
    %v1708 = vunpack.c.l.b16 %v827
    %v1709 = vunpack.c.h.b16 %v827
    %v1710 = vunpack.c.l.b16 %v828
    %v1711 = vunpack.c.h.b16 %v828
    %v1712 = vunpack.c.l.b16 %v829
    %v1713 = vunpack.c.h.b16 %v829
    %v1714 = vunpack.c.l.b16 %v830
    %v1715 = vunpack.c.h.b16 %v830
    %v1716 = vunpack.c.l.b16 %v831
    %v1717 = vunpack.c.h.b16 %v831
    %v1718 = vunpack.c.l.b16 %v832
    %v1719 = vunpack.c.h.b16 %v832
    %v1720 = vunpack.c.l.b16 %v833
    %v1721 = vunpack.c.h.b16 %v833
    %v1722 = vunpack.c.l.b16 %v834
    %v1723 = vunpack.c.h.b16 %v834
    %v1724 = vunpack.c.l.b16 %v835
    %v1725 = vunpack.c.h.b16 %v835
    %v1726 = vunpack.c.l.b16 %v836
    %v1727 = vunpack.c.h.b16 %v836
    %v1728 = vunpack.c.l.b16 %v837
    %v1729 = vunpack.c.h.b16 %v837
    %v1730 = vunpack.c.l.b16 %v838
    %v1731 = vunpack.c.h.b16 %v838
    %v1732 = vunpack.c.l.b16 %v839
    %v1733 = vunpack.c.h.b16 %v839
    %v1734 = vunpack.c.l.b16 %v840
    %v1735 = vunpack.c.h.b16 %v840
    %v1736 = vunpack.c.l.b16 %v841
    %v1737 = vunpack.c.h.b16 %v841
    %v1738 = vunpack.c.l.b16 %v842
    %v1739 = vunpack.c.h.b16 %v842
    %v1740 = vunpack.c.l.b16 %v843
    %v1741 = vunpack.c.h.b16 %v843
    %v1742 = vunpack.c.l.b16 %v844
    %v1743 = vunpack.c.h.b16 %v844
    %v1744 = vunpack.c.l.b16 %v845
    %v1745 = vunpack.c.h.b16 %v845
    %v1746 = vunpack.c.l.b16 %v846
    %v1747 = vunpack.c.h.b16 %v846
    %v1748 = vunpack.c.l.b16 %v847
    %v1749 = vunpack.c.h.b16 %v847
    %v1750 = vunpack.c.l.b16 %v848
    %v1751 = vunpack.c.h.b16 %v848
    %v1752 = vunpack.c.l.b16 %v849
    %v1753 = vunpack.c.h.b16 %v849
    %v1754 = vunpack.c.l.b16 %v850
    %v1755 = vunpack.c.h.b16 %v850
    %v1756 = vunpack.c.l.b16 %v851
    %v1757 = vunpack.c.h.b16 %v851
    %v1758 = vunpack.c.l.b16 %v852
    %v1759 = vunpack.c.h.b16 %v852
    %v1760 = vunpack.c.l.b16 %v853
    %v1761 = vunpack.c.h.b16 %v853
    %v1762 = vunpack.c.l.b16 %v854
    %v1763 = vunpack.c.h.b16 %v854
    %v1764 = vunpack.c.l.b16 %v855
    %v1765 = vunpack.c.h.b16 %v855
    %v1766 = vunpack.c.l.b16 %v856
    %v1767 = vunpack.c.h.b16 %v856
    %v1768 = vunpack.c.l.b16 %v857
    %v1769 = vunpack.c.h.b16 %v857
    %v1770 = vunpack.c.l.b16 %v858
    %v1771 = vunpack.c.h.b16 %v858
    %v1772 = vunpack.c.l.b16 %v859
    %v1773 = vunpack.c.h.b16 %v859
    %v1774 = vunpack.c.l.b16 %v860
    %v1775 = vunpack.c.h.b16 %v860
    %v1776 = vunpack.c.l.b16 %v861
    %v1777 = vunpack.c.h.b16 %v861
    %v1778 = vunpack.c.l.b16 %v862
    %v1779 = vunpack.c.h.b16 %v862
    %v1780 = vunpack.c.l.b16 %v863
    %v1781 = vunpack.c.h.b16 %v863
    %v1782 = vunpack.c.l.b16 %v864
    %v1783 = vunpack.c.h.b16 %v864
    %v1784 = vunpack.c.l.b16 %v865
    %v1785 = vunpack.c.h.b16 %v865
    %v1786 = vunpack.c.l.b16 %v866
    %v1787 = vunpack.c.h.b16 %v866
    %v1788 = vunpack.c.l.b16 %v867
    %v1789 = vunpack.c.h.b16 %v867
    %v1790 = vunpack.c.l.b16 %v868
    %v1791 = vunpack.c.h.b16 %v868
    %v1792 = vunpack.c.l.b16 %v869
    %v1793 = vunpack.c.h.b16 %v869
    %v1794 = vunpack.c.l.b16 %v870
    %v1795 = vunpack.c.h.b16 %v870
    %v1796 = vunpack.c.l.b16 %v871
    %v1797 = vunpack.c.h.b16 %v871
    %v1798 = vunpack.c.l.b16 %v872
    %v1799 = vunpack.c.h.b16 %v872
    %v1800 = vunpack.c.l.b16 %v873
    %v1801 = vunpack.c.h.b16 %v873
    %v1802 = vunpack.c.l.b16 %v874
    %v1803 = vunpack.c.h.b16 %v874
    %v1804 = vunpack.c.l.b16 %v875
    %v1805 = vunpack.c.h.b16 %v875
    %v1806 = vunpack.c.l.b16 %v876
    %v1807 = vunpack.c.h.b16 %v876
    %v1808 = vunpack.c.l.b16 %v877
    %v1809 = vunpack.c.h.b16 %v877
    %v1810 = vunpack.c.l.b16 %v878
    %v1811 = vunpack.c.h.b16 %v878
    %v1812 = vunpack.c.l.b16 %v879
    %v1813 = vunpack.c.h.b16 %v879
    %v1814 = vunpack.c.l.b16 %v880
    %v1815 = vunpack.c.h.b16 %v880
    %v1816 = vunpack.c.l.b16 %v881
    %v1817 = vunpack.c.h.b16 %v881
    %v1818 = vunpack.c.l.b16 %v882
    %v1819 = vunpack.c.h.b16 %v882
    %v1820 = vunpack.c.l.b16 %v883
    %v1821 = vunpack.c.h.b16 %v883
    %v1822 = vunpack.c.l.b16 %v884
    %v1823 = vunpack.c.h.b16 %v884
    %v1824 = vunpack.c.l.b16 %v885
    %v1825 = vunpack.c.h.b16 %v885
    %v1826 = vunpack.c.l.b16 %v886
    %v1827 = vunpack.c.h.b16 %v886
    %v1828 = vunpack.c.l.b16 %v887
    %v1829 = vunpack.c.h.b16 %v887
    %v1830 = vunpack.c.l.b16 %v888
    %v1831 = vunpack.c.h.b16 %v888
    %v1832 = vunpack.c.l.b16 %v889
    %v1833 = vunpack.c.h.b16 %v889
    %v1834 = vunpack.c.l.b16 %v890
    %v1835 = vunpack.c.h.b16 %v890
    %v1836 = vunpack.c.l.b16 %v891
    %v1837 = vunpack.c.h.b16 %v891
    %v1838 = vunpack.c.l.b16 %v892
    %v1839 = vunpack.c.h.b16 %v892
    %v1840 = vunpack.c.l.b16 %v893
    %v1841 = vunpack.c.h.b16 %v893
    %v1842 = vunpack.c.l.b16 %v894
    %v1843 = vunpack.c.h.b16 %v894
    %v1844 = vunpack.c.l.b16 %v895
    %v1845 = vunpack.c.h.b16 %v895
    %v1846 = vunpack.c.l.b16 %v896
    %v1847 = vunpack.c.h.b16 %v896
    %v1848 = vunpack.c.l.b16 %v897
    %v1849 = vunpack.c.h.b16 %v897
    %v1850 = vunpack.c.l.b16 %v898
    %v1851 = vunpack.c.h.b16 %v898
    %v1852 = vunpack.c.l.b16 %v899
    %v1853 = vunpack.c.h.b16 %v899
    %v1854 = vunpack.c.l.b16 %v900
    %v1855 = vunpack.c.h.b16 %v900
    %v1856 = vunpack.c.l.b16 %v901
    %v1857 = vunpack.c.h.b16 %v901
    %v1858 = vunpack.c.l.b16 %v902
    %v1859 = vunpack.c.h.b16 %v902
    %v1860 = vunpack.c.l.b16 %v903
    %v1861 = vunpack.c.h.b16 %v903
    %v1862 = vunpack.c.l.b16 %v904
    %v1863 = vunpack.c.h.b16 %v904
    %v1864 = vunpack.c.l.b16 %v905
    %v1865 = vunpack.c.h.b16 %v905
    %v1866 = vunpack.c.l.b16 %v906
    %v1867 = vunpack.c.h.b16 %v906
    %v1868 = vunpack.c.l.b16 %v907
    %v1869 = vunpack.c.h.b16 %v907
    %v1870 = vunpack.c.l.b16 %v908
    %v1871 = vunpack.c.h.b16 %v908
    %v1872 = vunpack.c.l.b16 %v909
    %v1873 = vunpack.c.h.b16 %v909
    %v1874 = vunpack.c.l.b16 %v910
    %v1875 = vunpack.c.h.b16 %v910
    %v1876 = vunpack.c.l.b16 %v911
    %v1877 = vunpack.c.h.b16 %v911
    %v1878 = vunpack.c.l.b16 %v912
    %v1879 = vunpack.c.h.b16 %v912
    %v1880 = vunpack.c.l.b16 %v913
    %v1881 = vunpack.c.h.b16 %v913
    %v1882 = vunpack.c.l.b16 %v914
    %v1883 = vunpack.c.h.b16 %v914
    %v1884 = vunpack.c.l.b16 %v915
    %v1885 = vunpack.c.h.b16 %v915
    %v1886 = vunpack.c.l.b16 %v916
    %v1887 = vunpack.c.h.b16 %v916
    %v1888 = vunpack.c.l.b16 %v917
    %v1889 = vunpack.c.h.b16 %v917
    %v1890 = vunpack.c.l.b16 %v918
    %v1891 = vunpack.c.h.b16 %v918
    %v1892 = vunpack.c.l.b16 %v919
    %v1893 = vunpack.c.h.b16 %v919
    %v1894 = vunpack.c.l.b16 %v920
    %v1895 = vunpack.c.h.b16 %v920
    %v1896 = vunpack.c.l.b16 %v921
    %v1897 = vunpack.c.h.b16 %v921
    %v1898 = vunpack.c.l.b16 %v922
    %v1899 = vunpack.c.h.b16 %v922
    %v1900 = vunpack.c.l.b16 %v923
    %v1901 = vunpack.c.h.b16 %v923
    %v1902 = vunpack.c.l.b16 %v924
    %v1903 = vunpack.c.h.b16 %v924
    %v1904 = vunpack.c.l.b16 %v925
    %v1905 = vunpack.c.h.b16 %v925
    %v1906 = vunpack.c.l.b16 %v926
    %v1907 = vunpack.c.h.b16 %v926
    %v1908 = vunpack.c.l.b16 %v927
    %v1909 = vunpack.c.h.b16 %v927
    %v1910 = vunpack.c.l.b16 %v928
    %v1911 = vunpack.c.h.b16 %v928
    %v1912 = vunpack.c.l.b16 %v929
    %v1913 = vunpack.c.h.b16 %v929
    %v1914 = vunpack.c.l.b16 %v930
    %v1915 = vunpack.c.h.b16 %v930
    %v1916 = vunpack.c.l.b16 %v931
    %v1917 = vunpack.c.h.b16 %v931
    %v1918 = vunpack.c.l.b16 %v932
    %v1919 = vunpack.c.h.b16 %v932
    %v1920 = vunpack.c.l.b16 %v933
    %v1921 = vunpack.c.h.b16 %v933
    %v1922 = vunpack.c.l.b16 %v934
    %v1923 = vunpack.c.h.b16 %v934
    %v1924 = vunpack.c.l.b16 %v935
    %v1925 = vunpack.c.h.b16 %v935
    %v1926 = vunpack.c.l.b16 %v936
    %v1927 = vunpack.c.h.b16 %v936
    %v1928 = vunpack.c.l.b16 %v937
    %v1929 = vunpack.c.h.b16 %v937
    %v1930 = vunpack.c.l.b16 %v938
    %v1931 = vunpack.c.h.b16 %v938
    %v1932 = vunpack.c.l.b16 %v939
    %v1933 = vunpack.c.h.b16 %v939
    %v1934 = vunpack.c.l.b16 %v940
    %v1935 = vunpack.c.h.b16 %v940
    %v1936 = vunpack.c.l.b16 %v941
    %v1937 = vunpack.c.h.b16 %v941
    %v1938 = vunpack.c.l.b16 %v942
    %v1939 = vunpack.c.h.b16 %v942
    %v1940 = vunpack.c.l.b16 %v943
    %v1941 = vunpack.c.h.b16 %v943
    %v1942 = vunpack.c.l.b16 %v944
    %v1943 = vunpack.c.h.b16 %v944
    %v1944 = vunpack.c.l.b16 %v945
    %v1945 = vunpack.c.h.b16 %v945
    %v1946 = vunpack.c.l.b16 %v946
    %v1947 = vunpack.c.h.b16 %v946
    %v1948 = vunpack.c.l.b16 %v947
    %v1949 = vunpack.c.h.b16 %v947
    %v1950 = vunpack.c.l.b16 %v948
    %v1951 = vunpack.c.h.b16 %v948
    %v1952 = vunpack.c.l.b16 %v949
    %v1953 = vunpack.c.h.b16 %v949
    %v1954 = vunpack.c.l.b16 %v950
    %v1955 = vunpack.c.h.b16 %v950
    %v1956 = vunpack.c.l.b16 %v951
    %v1957 = vunpack.c.h.b16 %v951
    %v1958 = vunpack.c.l.b16 %v952
    %v1959 = vunpack.c.h.b16 %v952
    %v1960 = vunpack.c.l.b16 %v953
    %v1961 = vunpack.c.h.b16 %v953
    %v1962 = vunpack.c.l.b16 %v954
    %v1963 = vunpack.c.h.b16 %v954
    %v1964 = vunpack.c.l.b16 %v955
    %v1965 = vunpack.c.h.b16 %v955
    %v1966 = vunpack.c.l.b16 %v956
    %v1967 = vunpack.c.h.b16 %v956
    %v1968 = vunpack.c.l.b16 %v957
    %v1969 = vunpack.c.h.b16 %v957
    %v1970 = vunpack.c.l.b16 %v958
    %v1971 = vunpack.c.h.b16 %v958
    %v1972 = vunpack.c.l.b16 %v959
    %v1973 = vunpack.c.h.b16 %v959
    %v1974 = vunpack.c.l.b16 %v960
    %v1975 = vunpack.c.h.b16 %v960
    %v1976 = vunpack.c.l.b16 %v961
    %v1977 = vunpack.c.h.b16 %v961
    %v1978 = vunpack.c.l.b16 %v962
    %v1979 = vunpack.c.h.b16 %v962
    %v1980 = vunpack.c.l.b16 %v963
    %v1981 = vunpack.c.h.b16 %v963
    %v1982 = vunpack.c.l.b16 %v964
    %v1983 = vunpack.c.h.b16 %v964
    %v1984 = vunpack.c.l.b16 %v965
    %v1985 = vunpack.c.h.b16 %v965
    %v1986 = vunpack.c.l.b16 %v966
    %v1987 = vunpack.c.h.b16 %v966
    %v1988 = vunpack.c.l.b16 %v967
    %v1989 = vunpack.c.h.b16 %v967
    %v1990 = vunpack.c.l.b16 %v968
    %v1991 = vunpack.c.h.b16 %v968
    %v1992 = vunpack.c.l.b16 %v969
    %v1993 = vunpack.c.h.b16 %v969
    %v1994 = vunpack.c.l.b16 %v970
    %v1995 = vunpack.c.h.b16 %v970
    %v1996 = vunpack.c.l.b16 %v971
    %v1997 = vunpack.c.h.b16 %v971
    %v1998 = vunpack.c.l.b16 %v972
    %v1999 = vunpack.c.h.b16 %v972
    %v2000 = vunpack.c.l.b16 %v973
    %v2001 = vunpack.c.h.b16 %v973
    %v2002 = vunpack.c.l.b16 %v974
    %v2003 = vunpack.c.h.b16 %v974
    %v2004 = vunpack.c.l.b16 %v975
    %v2005 = vunpack.c.h.b16 %v975
    %v2006 = vunpack.c.l.b16 %v976
    %v2007 = vunpack.c.h.b16 %v976
    %v2008 = vunpack.c.l.b16 %v977
    %v2009 = vunpack.c.h.b16 %v977
    %v2010 = vunpack.c.l.b16 %v978
    %v2011 = vunpack.c.h.b16 %v978
    %v2012 = vunpack.c.l.b16 %v979
    %v2013 = vunpack.c.h.b16 %v979
    %v2014 = vunpack.c.l.b16 %v980
    %v2015 = vunpack.c.h.b16 %v980
    %v2016 = vunpack.c.l.b16 %v981
    %v2017 = vunpack.c.h.b16 %v981
    %v2018 = vunpack.c.l.b16 %v982
    %v2019 = vunpack.c.h.b16 %v982
    %v2020 = vunpack.c.l.b16 %v983
    %v2021 = vunpack.c.h.b16 %v983
    %v2022 = vunpack.c.l.b16 %v984
    %v2023 = vunpack.c.h.b16 %v984
    %v2024 = vunpack.c.l.b16 %v985
    %v2025 = vunpack.c.h.b16 %v985
    %v2026 = vunpack.c.l.b16 %v986
    %v2027 = vunpack.c.h.b16 %v986
    %v2028 = vunpack.c.l.b16 %v987
    %v2029 = vunpack.c.h.b16 %v987
    %v2030 = vunpack.c.l.b16 %v988
    %v2031 = vunpack.c.h.b16 %v988
    %v2032 = vunpack.c.l.b16 %v989
    %v2033 = vunpack.c.h.b16 %v989
    %v2034 = vunpack.c.l.b16 %v990
    %v2035 = vunpack.c.h.b16 %v990
    %v2036 = vunpack.c.l.b16 %v991
    %v2037 = vunpack.c.h.b16 %v991
    %v2038 = vunpack.c.l.b16 %v992
    %v2039 = vunpack.c.h.b16 %v992
    %v2040 = vunpack.c.l.b16 %v993
    %v2041 = vunpack.c.h.b16 %v993
    %v2042 = vunpack.c.l.b16 %v994
    %v2043 = vunpack.c.h.b16 %v994
    %v2044 = vunpack.c.l.b16 %v995
    %v2045 = vunpack.c.h.b16 %v995
    %v2046 = vunpack.c.l.b16 %v996
    %v2047 = vunpack.c.h.b16 %v996
    %v2048 = vunpack.c.l.b16 %v997
    %v2049 = vunpack.c.h.b16 %v997
    %v2050 = vunpack.c.l.b16 %v998
    %v2051 = vunpack.c.h.b16 %v998
    %v2052 = vunpack.c.l.b16 %v999
    %v2053 = vunpack.c.h.b16 %v999
    %v2054 = vunpack.c.l.b16 %v1000
    %v2055 = vunpack.c.h.b16 %v1000
    %v2056 = vunpack.c.l.b16 %v1001
    %v2057 = vunpack.c.h.b16 %v1001
    %v2058 = vunpack.c.l.b16 %v1002
    %v2059 = vunpack.c.h.b16 %v1002
    %v2060 = vunpack.c.l.b16 %v1003
    %v2061 = vunpack.c.h.b16 %v1003
    %v2062 = vunpack.c.l.b16 %v1004
    %v2063 = vunpack.c.h.b16 %v1004
    %v2064 = vunpack.c.l.b16 %v1005
    %v2065 = vunpack.c.h.b16 %v1005
    %v2066 = vunpack.c.l.b16 %v1006
    %v2067 = vunpack.c.h.b16 %v1006
    %v2068 = vunpack.c.l.b16 %v1007
    %v2069 = vunpack.c.h.b16 %v1007
    %v2070 = vunpack.c.l.b16 %v1008
    %v2071 = vunpack.c.h.b16 %v1008
    %v2072 = vunpack.c.l.b16 %v1009
    %v2073 = vunpack.c.h.b16 %v1009
    %v2074 = vunpack.c.l.b16 %v1010
    %v2075 = vunpack.c.h.b16 %v1010
    %v2076 = vunpack.c.l.b16 %v1011
    %v2077 = vunpack.c.h.b16 %v1011
    %v2078 = vunpack.c.l.b16 %v1012
    %v2079 = vunpack.c.h.b16 %v1012
    %v2080 = vunpack.c.l.b16 %v1013
    %v2081 = vunpack.c.h.b16 %v1013
    %v2082 = vunpack.c.l.b16 %v1014
    %v2083 = vunpack.c.h.b16 %v1014
    %v2084 = vunpack.c.l.b16 %v1015
    %v2085 = vunpack.c.h.b16 %v1015
    %v2086 = vunpack.c.l.b16 %v1016
    %v2087 = vunpack.c.h.b16 %v1016
    %v2088 = vunpack.c.l.b16 %v1017
    %v2089 = vunpack.c.h.b16 %v1017
    %v2090 = vunpack.c.l.b16 %v1018
    %v2091 = vunpack.c.h.b16 %v1018
    %v2092 = vunpack.c.l.b16 %v1019
    %v2093 = vunpack.c.h.b16 %v1019
    %v2094 = vunpack.c.l.b16 %v1020
    %v2095 = vunpack.c.h.b16 %v1020
    %v2096 = vunpack.c.l.b16 %v1021
    %v2097 = vunpack.c.h.b16 %v1021
    %v2098 = vunpack.c.l.b16 %v1022
    %v2099 = vunpack.c.h.b16 %v1022
    %v2100 = vunpack.c.l.b16 %v1023
    %v2101 = vunpack.c.h.b16 %v1023
    %v2102 = vunpack.c.l.b16 %v1024
    %v2103 = vunpack.c.h.b16 %v1024
    %v2104 = vunpack.c.l.b16 %v1025
    %v2105 = vunpack.c.h.b16 %v1025
    %v2106 = vunpack.c.l.b16 %v1026
    %v2107 = vunpack.c.h.b16 %v1026
    %v2108 = vunpack.c.l.b16 %v1027
    %v2109 = vunpack.c.h.b16 %v1027
    %v2110 = vunpack.c.l.b16 %v1028
    %v2111 = vunpack.c.h.b16 %v1028
    %v2112 = vunpack.c.l.b16 %v1029
    %v2113 = vunpack.c.h.b16 %v1029
    %v2114 = vunpack.c.l.b16 %v1030
    %v2115 = vunpack.c.h.b16 %v1030
    %v2116 = vunpack.c.l.b16 %v1031
    %v2117 = vunpack.c.h.b16 %v1031
    %v2118 = vunpack.c.l.b16 %v1032
    %v2119 = vunpack.c.h.b16 %v1032
    %v2120 = vunpack.c.l.b16 %v1033
    %v2121 = vunpack.c.h.b16 %v1033
    %v2122 = vunpack.c.l.b16 %v1034
    %v2123 = vunpack.c.h.b16 %v1034
    %v2124 = vunpack.c.l.b16 %v1035
    %v2125 = vunpack.c.h.b16 %v1035
    %v2126 = vunpack.c.l.b16 %v1036
    %v2127 = vunpack.c.h.b16 %v1036
    %v2128 = vunpack.c.l.b16 %v1037
    %v2129 = vunpack.c.h.b16 %v1037
    %v2130 = vunpack.c.l.b16 %v1038
    %v2131 = vunpack.c.h.b16 %v1038
    %v2132 = vunpack.c.l.b16 %v1039
    %v2133 = vunpack.c.h.b16 %v1039
    %v2134 = vunpack.c.l.b16 %v1040
    %v2135 = vunpack.c.h.b16 %v1040
    %v2136 = vpack.c.b16 %v1566, %v1560
    %v2137 = vpack.c.b16 %v1567, %v1561
    %v2138 = vpack.c.b16 %v1568, %v1562
    %v2139 = vpack.c.b16 %v1569, %v1563
    %v2140 = vpack.c.b16 %v1570, %v1564
    %v2141 = vpack.c.b16 %v1571, %v1565
    %v2142 = vpack.c.b16 %v1578, %v1572
    %v2143 = vpack.c.b16 %v1579, %v1573
    %v2144 = vpack.c.b16 %v1580, %v1574
    %v2145 = vpack.c.b16 %v1581, %v1575
    %v2146 = vpack.c.b16 %v1582, %v1576
    %v2147 = vpack.c.b16 %v1583, %v1577
    %v2148 = vpack.c.b16 %v1590, %v1584
    %v2149 = vpack.c.b16 %v1591, %v1585
    %v2150 = vpack.c.b16 %v1592, %v1586
    %v2151 = vpack.c.b16 %v1593, %v1587
    %v2152 = vpack.c.b16 %v1594, %v1588
    %v2153 = vpack.c.b16 %v1595, %v1589
    %v2154 = vpack.c.b16 %v1602, %v1596
    %v2155 = vpack.c.b16 %v1603, %v1597
    %v2156 = vpack.c.b16 %v1604, %v1598
    %v2157 = vpack.c.b16 %v1605, %v1599
    %v2158 = vpack.c.b16 %v1606, %v1600
    %v2159 = vpack.c.b16 %v1607, %v1601
    %v2160 = vpack.c.b16 %v1614, %v1608
    %v2161 = vpack.c.b16 %v1615, %v1609
    %v2162 = vpack.c.b16 %v1616, %v1610
    %v2163 = vpack.c.b16 %v1617, %v1611
    %v2164 = vpack.c.b16 %v1618, %v1612
    %v2165 = vpack.c.b16 %v1619, %v1613
    %v2166 = vpack.c.b16 %v1626, %v1620
    %v2167 = vpack.c.b16 %v1627, %v1621
    %v2168 = vpack.c.b16 %v1628, %v1622
    %v2169 = vpack.c.b16 %v1629, %v1623
    %v2170 = vpack.c.b16 %v1630, %v1624
    %v2171 = vpack.c.b16 %v1631, %v1625
    %v2172 = vpack.c.b16 %v1638, %v1632
    %v2173 = vpack.c.b16 %v1639, %v1633
    %v2174 = vpack.c.b16 %v1640, %v1634
    %v2175 = vpack.c.b16 %v1641, %v1635
    %v2176 = vpack.c.b16 %v1642, %v1636
    %v2177 = vpack.c.b16 %v1643, %v1637
    %v2178 = vpack.c.b16 %v1650, %v1644
    %v2179 = vpack.c.b16 %v1651, %v1645
    %v2180 = vpack.c.b16 %v1652, %v1646
    %v2181 = vpack.c.b16 %v1653, %v1647
    %v2182 = vpack.c.b16 %v1654, %v1648
    %v2183 = vpack.c.b16 %v1655, %v1649
    %v2184 = vpack.c.b16 %v1662, %v1656
    %v2185 = vpack.c.b16 %v1663, %v1657
    %v2186 = vpack.c.b16 %v1664, %v1658
    %v2187 = vpack.c.b16 %v1665, %v1659
    %v2188 = vpack.c.b16 %v1666, %v1660
    %v2189 = vpack.c.b16 %v1667, %v1661
    %v2190 = vpack.c.b16 %v1674, %v1668
    %v2191 = vpack.c.b16 %v1675, %v1669
    %v2192 = vpack.c.b16 %v1676, %v1670
    %v2193 = vpack.c.b16 %v1677, %v1671
    %v2194 = vpack.c.b16 %v1678, %v1672
    %v2195 = vpack.c.b16 %v1679, %v1673
    %v2196 = vpack.c.b16 %v1686, %v1680
    %v2197 = vpack.c.b16 %v1687, %v1681
    %v2198 = vpack.c.b16 %v1688, %v1682
    %v2199 = vpack.c.b16 %v1689, %v1683
    %v2200 = vpack.c.b16 %v1690, %v1684
    %v2201 = vpack.c.b16 %v1691, %v1685
    %v2202 = vpack.c.b16 %v1698, %v1692
    %v2203 = vpack.c.b16 %v1699, %v1693
    %v2204 = vpack.c.b16 %v1700, %v1694
    %v2205 = vpack.c.b16 %v1701, %v1695
    %v2206 = vpack.c.b16 %v1702, %v1696
    %v2207 = vpack.c.b16 %v1703, %v1697
    %v2208 = vpack.c.b16 %v1710, %v1704
    %v2209 = vpack.c.b16 %v1711, %v1705
    %v2210 = vpack.c.b16 %v1712, %v1706
    %v2211 = vpack.c.b16 %v1713, %v1707
    %v2212 = vpack.c.b16 %v1714, %v1708
    %v2213 = vpack.c.b16 %v1715, %v1709
    %v2214 = vpack.c.b16 %v1722, %v1716
    %v2215 = vpack.c.b16 %v1723, %v1717
    %v2216 = vpack.c.b16 %v1724, %v1718
    %v2217 = vpack.c.b16 %v1725, %v1719
    %v2218 = vpack.c.b16 %v1726, %v1720
    %v2219 = vpack.c.b16 %v1727, %v1721
    %v2220 = vpack.c.b16 %v1734, %v1728
    %v2221 = vpack.c.b16 %v1735, %v1729
    %v2222 = vpack.c.b16 %v1736, %v1730
    %v2223 = vpack.c.b16 %v1737, %v1731
    %v2224 = vpack.c.b16 %v1738, %v1732
    %v2225 = vpack.c.b16 %v1739, %v1733
    %v2226 = vpack.c.b16 %v1746, %v1740
    %v2227 = vpack.c.b16 %v1747, %v1741
    %v2228 = vpack.c.b16 %v1748, %v1742
    %v2229 = vpack.c.b16 %v1749, %v1743
    %v2230 = vpack.c.b16 %v1750, %v1744
    %v2231 = vpack.c.b16 %v1751, %v1745
    %v2232 = vpack.c.b16 %v1758, %v1752
    %v2233 = vpack.c.b16 %v1759, %v1753
    %v2234 = vpack.c.b16 %v1760, %v1754
    %v2235 = vpack.c.b16 %v1761, %v1755
    %v2236 = vpack.c.b16 %v1762, %v1756
    %v2237 = vpack.c.b16 %v1763, %v1757
    %v2238 = vpack.c.b16 %v1770, %v1764
    %v2239 = vpack.c.b16 %v1771, %v1765
    %v2240 = vpack.c.b16 %v1772, %v1766
    %v2241 = vpack.c.b16 %v1773, %v1767
    %v2242 = vpack.c.b16 %v1774, %v1768
    %v2243 = vpack.c.b16 %v1775, %v1769
    %v2244 = vpack.c.b16 %v1782, %v1776
    %v2245 = vpack.c.b16 %v1783, %v1777
    %v2246 = vpack.c.b16 %v1784, %v1778
    %v2247 = vpack.c.b16 %v1785, %v1779
    %v2248 = vpack.c.b16 %v1786, %v1780
    %v2249 = vpack.c.b16 %v1787, %v1781
    %v2250 = vpack.c.b16 %v1794, %v1788
    %v2251 = vpack.c.b16 %v1795, %v1789
    %v2252 = vpack.c.b16 %v1796, %v1790
    %v2253 = vpack.c.b16 %v1797, %v1791
    %v2254 = vpack.c.b16 %v1798, %v1792
    %v2255 = vpack.c.b16 %v1799, %v1793
    %v2256 = vpack.c.b16 %v1806, %v1800
    %v2257 = vpack.c.b16 %v1807, %v1801
    %v2258 = vpack.c.b16 %v1808, %v1802
    %v2259 = vpack.c.b16 %v1809, %v1803
    %v2260 = vpack.c.b16 %v1810, %v1804
    %v2261 = vpack.c.b16 %v1811, %v1805
    %v2262 = vpack.c.b16 %v1818, %v1812
    %v2263 = vpack.c.b16 %v1819, %v1813
    %v2264 = vpack.c.b16 %v1820, %v1814
    %v2265 = vpack.c.b16 %v1821, %v1815
    %v2266 = vpack.c.b16 %v1822, %v1816
    %v2267 = vpack.c.b16 %v1823, %v1817
    %v2268 = vpack.c.b16 %v1830, %v1824
    %v2269 = vpack.c.b16 %v1831, %v1825
    %v2270 = vpack.c.b16 %v1832, %v1826
    %v2271 = vpack.c.b16 %v1833, %v1827
    %v2272 = vpack.c.b16 %v1834, %v1828
    %v2273 = vpack.c.b16 %v1835, %v1829
    %v2274 = vpack.c.b16 %v1842, %v1836
    %v2275 = vpack.c.b16 %v1843, %v1837
    %v2276 = vpack.c.b16 %v1844, %v1838
    %v2277 = vpack.c.b16 %v1845, %v1839
    %v2278 = vpack.c.b16 %v1846, %v1840
    %v2279 = vpack.c.b16 %v1847, %v1841
    %v2280 = vpack.c.b16 %v1854, %v1848
    %v2281 = vpack.c.b16 %v1855, %v1849
    %v2282 = vpack.c.b16 %v1856, %v1850
    %v2283 = vpack.c.b16 %v1857, %v1851
    %v2284 = vpack.c.b16 %v1858, %v1852
    %v2285 = vpack.c.b16 %v1859, %v1853
    %v2286 = vpack.c.b16 %v1866, %v1860
    %v2287 = vpack.c.b16 %v1867, %v1861
    %v2288 = vpack.c.b16 %v1868, %v1862
    %v2289 = vpack.c.b16 %v1869, %v1863
    %v2290 = vpack.c.b16 %v1870, %v1864
    %v2291 = vpack.c.b16 %v1871, %v1865
    %v2292 = vpack.c.b16 %v1878, %v1872
    %v2293 = vpack.c.b16 %v1879, %v1873
    %v2294 = vpack.c.b16 %v1880, %v1874
    %v2295 = vpack.c.b16 %v1881, %v1875
    %v2296 = vpack.c.b16 %v1882, %v1876
    %v2297 = vpack.c.b16 %v1883, %v1877
    %v2298 = vpack.c.b16 %v1890, %v1884
    %v2299 = vpack.c.b16 %v1891, %v1885
    %v2300 = vpack.c.b16 %v1892, %v1886
    %v2301 = vpack.c.b16 %v1893, %v1887
    %v2302 = vpack.c.b16 %v1894, %v1888
    %v2303 = vpack.c.b16 %v1895, %v1889
    %v2304 = vpack.c.b16 %v1902, %v1896
    %v2305 = vpack.c.b16 %v1903, %v1897
    %v2306 = vpack.c.b16 %v1904, %v1898
    %v2307 = vpack.c.b16 %v1905, %v1899
    %v2308 = vpack.c.b16 %v1906, %v1900
    %v2309 = vpack.c.b16 %v1907, %v1901
    %v2310 = vpack.c.b16 %v1914, %v1908
    %v2311 = vpack.c.b16 %v1915, %v1909
    %v2312 = vpack.c.b16 %v1916, %v1910
    %v2313 = vpack.c.b16 %v1917, %v1911
    %v2314 = vpack.c.b16 %v1918, %v1912
    %v2315 = vpack.c.b16 %v1919, %v1913
    %v2316 = vpack.c.b16 %v1926, %v1920
    %v2317 = vpack.c.b16 %v1927, %v1921
    %v2318 = vpack.c.b16 %v1928, %v1922
    %v2319 = vpack.c.b16 %v1929, %v1923
    %v2320 = vpack.c.b16 %v1930, %v1924
    %v2321 = vpack.c.b16 %v1931, %v1925
    %v2322 = vpack.c.b16 %v1938, %v1932
    %v2323 = vpack.c.b16 %v1939, %v1933
    %v2324 = vpack.c.b16 %v1940, %v1934
    %v2325 = vpack.c.b16 %v1941, %v1935
    %v2326 = vpack.c.b16 %v1942, %v1936
    %v2327 = vpack.c.b16 %v1943, %v1937
    %v2328 = vpack.c.b16 %v1950, %v1944
    %v2329 = vpack.c.b16 %v1951, %v1945
    %v2330 = vpack.c.b16 %v1952, %v1946
    %v2331 = vpack.c.b16 %v1953, %v1947
    %v2332 = vpack.c.b16 %v1954, %v1948
    %v2333 = vpack.c.b16 %v1955, %v1949
    %v2334 = vpack.c.b16 %v1962, %v1956
    %v2335 = vpack.c.b16 %v1963, %v1957
    %v2336 = vpack.c.b16 %v1964, %v1958
    %v2337 = vpack.c.b16 %v1965, %v1959
    %v2338 = vpack.c.b16 %v1966, %v1960
    %v2339 = vpack.c.b16 %v1967, %v1961
    %v2340 = vpack.c.b16 %v1974, %v1968
    %v2341 = vpack.c.b16 %v1975, %v1969
    %v2342 = vpack.c.b16 %v1976, %v1970
    %v2343 = vpack.c.b16 %v1977, %v1971
    %v2344 = vpack.c.b16 %v1978, %v1972
    %v2345 = vpack.c.b16 %v1979, %v1973
    %v2346 = vpack.c.b16 %v1986, %v1980
    %v2347 = vpack.c.b16 %v1987, %v1981
    %v2348 = vpack.c.b16 %v1988, %v1982
    %v2349 = vpack.c.b16 %v1989, %v1983
    %v2350 = vpack.c.b16 %v1990, %v1984
    %v2351 = vpack.c.b16 %v1991, %v1985
    %v2352 = vpack.c.b16 %v1998, %v1992
    %v2353 = vpack.c.b16 %v1999, %v1993
    %v2354 = vpack.c.b16 %v2000, %v1994
    %v2355 = vpack.c.b16 %v2001, %v1995
    %v2356 = vpack.c.b16 %v2002, %v1996
    %v2357 = vpack.c.b16 %v2003, %v1997
    %v2358 = vpack.c.b16 %v2010, %v2004
    %v2359 = vpack.c.b16 %v2011, %v2005
    %v2360 = vpack.c.b16 %v2012, %v2006
    %v2361 = vpack.c.b16 %v2013, %v2007
    %v2362 = vpack.c.b16 %v2014, %v2008
    %v2363 = vpack.c.b16 %v2015, %v2009
    %v2364 = vpack.c.b16 %v2022, %v2016
    %v2365 = vpack.c.b16 %v2023, %v2017
    %v2366 = vpack.c.b16 %v2024, %v2018
    %v2367 = vpack.c.b16 %v2025, %v2019
    %v2368 = vpack.c.b16 %v2026, %v2020
    %v2369 = vpack.c.b16 %v2027, %v2021
    %v2370 = vpack.c.b16 %v2034, %v2028
    %v2371 = vpack.c.b16 %v2035, %v2029
    %v2372 = vpack.c.b16 %v2036, %v2030
    %v2373 = vpack.c.b16 %v2037, %v2031
    %v2374 = vpack.c.b16 %v2038, %v2032
    %v2375 = vpack.c.b16 %v2039, %v2033
    %v2376 = vpack.c.b16 %v2046, %v2040
    %v2377 = vpack.c.b16 %v2047, %v2041
    %v2378 = vpack.c.b16 %v2048, %v2042
    %v2379 = vpack.c.b16 %v2049, %v2043
    %v2380 = vpack.c.b16 %v2050, %v2044
    %v2381 = vpack.c.b16 %v2051, %v2045
    %v2382 = vpack.c.b16 %v2058, %v2052
    %v2383 = vpack.c.b16 %v2059, %v2053
    %v2384 = vpack.c.b16 %v2060, %v2054
    %v2385 = vpack.c.b16 %v2061, %v2055
    %v2386 = vpack.c.b16 %v2062, %v2056
    %v2387 = vpack.c.b16 %v2063, %v2057
    %v2388 = vpack.c.b16 %v2070, %v2064
    %v2389 = vpack.c.b16 %v2071, %v2065
    %v2390 = vpack.c.b16 %v2072, %v2066
    %v2391 = vpack.c.b16 %v2073, %v2067
    %v2392 = vpack.c.b16 %v2074, %v2068
    %v2393 = vpack.c.b16 %v2075, %v2069
    %v2394 = vpack.c.b16 %v2082, %v2076
    %v2395 = vpack.c.b16 %v2083, %v2077
    %v2396 = vpack.c.b16 %v2084, %v2078
    %v2397 = vpack.c.b16 %v2085, %v2079
    %v2398 = vpack.c.b16 %v2086, %v2080
    %v2399 = vpack.c.b16 %v2087, %v2081
    %v2400 = vpack.c.b16 %v2094, %v2088
    %v2401 = vpack.c.b16 %v2095, %v2089
    %v2402 = vpack.c.b16 %v2096, %v2090
    %v2403 = vpack.c.b16 %v2097, %v2091
    %v2404 = vpack.c.b16 %v2098, %v2092
    %v2405 = vpack.c.b16 %v2099, %v2093
    %v2406 = vpack.c.b16 %v2106, %v2100
    %v2407 = vpack.c.b16 %v2107, %v2101
    %v2408 = vpack.c.b16 %v2108, %v2102
    %v2409 = vpack.c.b16 %v2109, %v2103
    %v2410 = vpack.c.b16 %v2110, %v2104
    %v2411 = vpack.c.b16 %v2111, %v2105
    %v2412 = vpack.c.b16 %v2118, %v2112
    %v2413 = vpack.c.b16 %v2119, %v2113
    %v2414 = vpack.c.b16 %v2120, %v2114
    %v2415 = vpack.c.b16 %v2121, %v2115
    %v2416 = vpack.c.b16 %v2122, %v2116
    %v2417 = vpack.c.b16 %v2123, %v2117
    %v2418 = vpack.c.b16 %v2130, %v2124
    %v2419 = vpack.c.b16 %v2131, %v2125
    %v2420 = vpack.c.b16 %v2132, %v2126
    %v2421 = vpack.c.b16 %v2133, %v2127
    %v2422 = vpack.c.b16 %v2134, %v2128
    %v2423 = vpack.c.b16 %v2135, %v2129
    %2712 = vmatprep.subr.bf16.mxu0 %v2137
    %2713 = vmatpush1.bf16.msra.mxu0 %v2136
    %2714 = vmatprep.subr.bf16.mxu0 %v2143
    %2715 = vmatpush1.bf16.msra.mxu0 %v2142
    %2716 = vmatprep.subr.bf16.mxu0 %v2149
    %2717 = vmatpush1.bf16.msra.mxu0 %v2148
    %2718 = vmatprep.subr.bf16.mxu0 %v2155
    %2719 = vmatpush1.bf16.msra.mxu0 %v2154
    %2720 = vmatprep.subr.bf16.mxu0 %v2161
    %2721 = vmatpush1.bf16.msra.mxu0 %v2160
    %2722 = vmatprep.subr.bf16.mxu0 %v2167
    %2723 = vmatpush1.bf16.msra.mxu0 %v2166
    %2724 = vmatprep.subr.bf16.mxu0 %v2173
    %2725 = vmatpush1.bf16.msra.mxu0 %v2172
    %2726 = vmatprep.subr.bf16.mxu0 %v2179
    %2727 = vmatpush1.bf16.msra.mxu0 %v2178
    %2728 = vmatprep.subr.bf16.mxu0 %v2185
    %2729 = vmatpush1.bf16.msra.mxu0 %v2184
    %2730 = vmatprep.subr.bf16.mxu0 %v2191
    %2731 = vmatpush1.bf16.msra.mxu0 %v2190
    %2732 = vmatprep.subr.bf16.mxu0 %v2197
    %2733 = vmatpush1.bf16.msra.mxu0 %v2196
    %2734 = vmatprep.subr.bf16.mxu0 %v2203
    %2735 = vmatpush1.bf16.msra.mxu0 %v2202
    %2736 = vmatprep.subr.bf16.mxu0 %v2209
    %2737 = vmatpush1.bf16.msra.mxu0 %v2208
    %2738 = vmatprep.subr.bf16.mxu0 %v2215
    %2739 = vmatpush1.bf16.msra.mxu0 %v2214
    %2740 = vmatprep.subr.bf16.mxu0 %v2221
    %2741 = vmatpush1.bf16.msra.mxu0 %v2220
    %2742 = vmatprep.subr.bf16.mxu0 %v2227
    %2743 = vmatpush1.bf16.msra.mxu0 %v2226
    %2744 = vmatprep.mubr.bf16.mxu0 %v1261
    %2745 = vmatmul.mubr.bf16.gmra.mrb[0].mxu0 %v1260
    %v2746 = vpop.f32.mrb[0].mxu0
    %v2747 = vadd.f32 %v1046, %v2746
    %v2748 = vpop.f32.mrb[0].mxu0
    %v2749 = vadd.f32 %v1050, %v2748
    %v2750 = vpop.f32.mrb[0].mxu0
    %v2751 = vpop.f32.mrb[0].mxu0
    %2752 = vdwg.mxu0
    %2753 = vmatprep.subr.bf16.mxu0 %v2233
    %2754 = vmatpush1.bf16.msra.mxu0 %v2232
    %2755 = vmatprep.subr.bf16.mxu0 %v2239
    %2756 = vmatpush1.bf16.msra.mxu0 %v2238
    %2757 = vmatprep.subr.bf16.mxu0 %v2245
    %2758 = vmatpush1.bf16.msra.mxu0 %v2244
    %2759 = vmatprep.subr.bf16.mxu0 %v2251
    %2760 = vmatpush1.bf16.msra.mxu0 %v2250
    %2761 = vmatprep.subr.bf16.mxu0 %v2257
    %2762 = vmatpush1.bf16.msra.mxu0 %v2256
    %2763 = vmatprep.subr.bf16.mxu0 %v2263
    %2764 = vmatpush1.bf16.msra.mxu0 %v2262
    %2765 = vmatprep.subr.bf16.mxu0 %v2269
    %2766 = vmatpush1.bf16.msra.mxu0 %v2268
    %2767 = vmatprep.subr.bf16.mxu0 %v2275
    %2768 = vmatpush1.bf16.msra.mxu0 %v2274
    %2769 = vmatprep.subr.bf16.mxu0 %v2281
    %2770 = vmatpush1.bf16.msra.mxu0 %v2280
    %2771 = vmatprep.subr.bf16.mxu0 %v2287
    %2772 = vmatpush1.bf16.msra.mxu0 %v2286
    %2773 = vmatprep.subr.bf16.mxu0 %v2293
    %2774 = vmatpush1.bf16.msra.mxu0 %v2292
    %2775 = vmatprep.subr.bf16.mxu0 %v2299
    %2776 = vmatpush1.bf16.msra.mxu0 %v2298
    %2777 = vmatprep.subr.bf16.mxu0 %v2305
    %2778 = vmatpush1.bf16.msra.mxu0 %v2304
    %2779 = vmatprep.subr.bf16.mxu0 %v2311
    %2780 = vmatpush1.bf16.msra.mxu0 %v2310
    %2781 = vmatprep.subr.bf16.mxu0 %v2317
    %2782 = vmatpush1.bf16.msra.mxu0 %v2316
    %2783 = vmatprep.subr.bf16.mxu0 %v2323
    %2784 = vmatpush1.bf16.msra.mxu0 %v2322
    %2785 = vmatprep.mubr.bf16.mxu0 %v1263
    %2786 = vmatmul.mubr.bf16.gmra.mrb[0].mxu0 %v1262
    %v2787 = vpop.f32.mrb[0].mxu0
    %v2788 = vadd.f32 %v2747, %v2787
    %v2789 = vpop.f32.mrb[0].mxu0
    %v2790 = vadd.f32 %v2749, %v2789
    %v2791 = vpop.f32.mrb[0].mxu0
    %v2792 = vpop.f32.mrb[0].mxu0
    %2793 = vdwg.mxu0
    %2794 = vmatprep.subr.bf16.mxu0 %v2329
    %2795 = vmatpush1.bf16.msra.mxu0 %v2328
    %2796 = vmatprep.subr.bf16.mxu0 %v2335
    %2797 = vmatpush1.bf16.msra.mxu0 %v2334
    %2798 = vmatprep.subr.bf16.mxu0 %v2341
    %2799 = vmatpush1.bf16.msra.mxu0 %v2340
    %2800 = vmatprep.subr.bf16.mxu0 %v2347
    %2801 = vmatpush1.bf16.msra.mxu0 %v2346
    %2802 = vmatprep.subr.bf16.mxu0 %v2353
    %2803 = vmatpush1.bf16.msra.mxu0 %v2352
    %2804 = vmatprep.subr.bf16.mxu0 %v2359
    %2805 = vmatpush1.bf16.msra.mxu0 %v2358
    %2806 = vmatprep.subr.bf16.mxu0 %v2365
    %2807 = vmatpush1.bf16.msra.mxu0 %v2364
    %2808 = vmatprep.subr.bf16.mxu0 %v2371
    %2809 = vmatpush1.bf16.msra.mxu0 %v2370
    %2810 = vmatprep.subr.bf16.mxu0 %v2377
    %2811 = vmatpush1.bf16.msra.mxu0 %v2376
    %2812 = vmatprep.subr.bf16.mxu0 %v2383
    %2813 = vmatpush1.bf16.msra.mxu0 %v2382
    %2814 = vmatprep.subr.bf16.mxu0 %v2389
    %2815 = vmatpush1.bf16.msra.mxu0 %v2388
    %2816 = vmatprep.subr.bf16.mxu0 %v2395
    %2817 = vmatpush1.bf16.msra.mxu0 %v2394
    %2818 = vmatprep.subr.bf16.mxu0 %v2401
    %2819 = vmatpush1.bf16.msra.mxu0 %v2400
    %2820 = vmatprep.subr.bf16.mxu0 %v2407
    %2821 = vmatpush1.bf16.msra.mxu0 %v2406
    %2822 = vmatprep.subr.bf16.mxu0 %v2413
    %2823 = vmatpush1.bf16.msra.mxu0 %v2412
    %2824 = vmatprep.subr.bf16.mxu0 %v2419
    %2825 = vmatpush1.bf16.msra.mxu0 %v2418
    %2826 = vmatprep.mubr.bf16.mxu0 %v1265
    %2827 = vmatmul.mubr.bf16.gmra.mrb[0].mxu0 %v1264
    %v2828 = vpop.f32.mrb[0].mxu0
    %v2829 = vadd.f32 %v2788, %v2828
    %v2830 = vpop.f32.mrb[0].mxu0
    %v2831 = vadd.f32 %v2790, %v2830
    %v2832 = vpop.f32.mrb[0].mxu0
    %v2833 = vpop.f32.mrb[0].mxu0
    %2834 = vdwg.mxu0
    %2835 = vmatprep.subr.bf16.mxu0 %v2139
    %2836 = vmatpush1.bf16.msra.mxu0 %v2138
    %2837 = vmatprep.subr.bf16.mxu0 %v2145
    %2838 = vmatpush1.bf16.msra.mxu0 %v2144
    %2839 = vmatprep.subr.bf16.mxu0 %v2151
    %2840 = vmatpush1.bf16.msra.mxu0 %v2150
    %2841 = vmatprep.subr.bf16.mxu0 %v2157
    %2842 = vmatpush1.bf16.msra.mxu0 %v2156
    %2843 = vmatprep.subr.bf16.mxu0 %v2163
    %2844 = vmatpush1.bf16.msra.mxu0 %v2162
    %2845 = vmatprep.subr.bf16.mxu0 %v2169
    %2846 = vmatpush1.bf16.msra.mxu0 %v2168
    %2847 = vmatprep.subr.bf16.mxu0 %v2175
    %2848 = vmatpush1.bf16.msra.mxu0 %v2174
    %2849 = vmatprep.subr.bf16.mxu0 %v2181
    %2850 = vmatpush1.bf16.msra.mxu0 %v2180
    %2851 = vmatprep.subr.bf16.mxu0 %v2187
    %2852 = vmatpush1.bf16.msra.mxu0 %v2186
    %2853 = vmatprep.subr.bf16.mxu0 %v2193
    %2854 = vmatpush1.bf16.msra.mxu0 %v2192
    %2855 = vmatprep.subr.bf16.mxu0 %v2199
    %2856 = vmatpush1.bf16.msra.mxu0 %v2198
    %2857 = vmatprep.subr.bf16.mxu0 %v2205
    %2858 = vmatpush1.bf16.msra.mxu0 %v2204
    %2859 = vmatprep.subr.bf16.mxu0 %v2211
    %2860 = vmatpush1.bf16.msra.mxu0 %v2210
    %2861 = vmatprep.subr.bf16.mxu0 %v2217
    %2862 = vmatpush1.bf16.msra.mxu0 %v2216
    %2863 = vmatprep.subr.bf16.mxu0 %v2223
    %2864 = vmatpush1.bf16.msra.mxu0 %v2222
    %2865 = vmatprep.subr.bf16.mxu0 %v2229
    %2866 = vmatpush1.bf16.msra.mxu0 %v2228
    %2867 = vmatprep.mubr.bf16.mxu0 %v1261
    %2868 = vmatmul.mubr.bf16.gmra.mrb[0].mxu0 %v1260
    %v2869 = vpop.f32.mrb[0].mxu0
    %v2870 = vadd.f32 %v1054, %v2869
    %v2871 = vpop.f32.mrb[0].mxu0
    %v2872 = vadd.f32 %v1058, %v2871
    %v2873 = vpop.f32.mrb[0].mxu0
    %v2874 = vpop.f32.mrb[0].mxu0
    %2875 = vdwg.mxu0
    %2876 = vmatprep.subr.bf16.mxu0 %v2235
    %2877 = vmatpush1.bf16.msra.mxu0 %v2234
    %2878 = vmatprep.subr.bf16.mxu0 %v2241
    %2879 = vmatpush1.bf16.msra.mxu0 %v2240
    %2880 = vmatprep.subr.bf16.mxu0 %v2247
    %2881 = vmatpush1.bf16.msra.mxu0 %v2246
    %2882 = vmatprep.subr.bf16.mxu0 %v2253
    %2883 = vmatpush1.bf16.msra.mxu0 %v2252
    %2884 = vmatprep.subr.bf16.mxu0 %v2259
    %2885 = vmatpush1.bf16.msra.mxu0 %v2258
    %2886 = vmatprep.subr.bf16.mxu0 %v2265
    %2887 = vmatpush1.bf16.msra.mxu0 %v2264
    %2888 = vmatprep.subr.bf16.mxu0 %v2271
    %2889 = vmatpush1.bf16.msra.mxu0 %v2270
    %2890 = vmatprep.subr.bf16.mxu0 %v2277
    %2891 = vmatpush1.bf16.msra.mxu0 %v2276
    %2892 = vmatprep.subr.bf16.mxu0 %v2283
    %2893 = vmatpush1.bf16.msra.mxu0 %v2282
    %2894 = vmatprep.subr.bf16.mxu0 %v2289
    %2895 = vmatpush1.bf16.msra.mxu0 %v2288
    %2896 = vmatprep.subr.bf16.mxu0 %v2295
    %2897 = vmatpush1.bf16.msra.mxu0 %v2294
    %2898 = vmatprep.subr.bf16.mxu0 %v2301
    %2899 = vmatpush1.bf16.msra.mxu0 %v2300
    %2900 = vmatprep.subr.bf16.mxu0 %v2307
    %2901 = vmatpush1.bf16.msra.mxu0 %v2306
    %2902 = vmatprep.subr.bf16.mxu0 %v2313
    %2903 = vmatpush1.bf16.msra.mxu0 %v2312
    %2904 = vmatprep.subr.bf16.mxu0 %v2319
    %2905 = vmatpush1.bf16.msra.mxu0 %v2318
    %2906 = vmatprep.subr.bf16.mxu0 %v2325
    %2907 = vmatpush1.bf16.msra.mxu0 %v2324
    %2908 = vmatprep.mubr.bf16.mxu0 %v1263
    %2909 = vmatmul.mubr.bf16.gmra.mrb[0].mxu0 %v1262
    %v2910 = vpop.f32.mrb[0].mxu0
    %v2911 = vadd.f32 %v2870, %v2910
    %v2912 = vpop.f32.mrb[0].mxu0
    %v2913 = vadd.f32 %v2872, %v2912
    %v2914 = vpop.f32.mrb[0].mxu0
    %v2915 = vpop.f32.mrb[0].mxu0
    %2916 = vdwg.mxu0
    %2917 = vmatprep.subr.bf16.mxu0 %v2331
    %2918 = vmatpush1.bf16.msra.mxu0 %v2330
    %2919 = vmatprep.subr.bf16.mxu0 %v2337
    %2920 = vmatpush1.bf16.msra.mxu0 %v2336
    %2921 = vmatprep.subr.bf16.mxu0 %v2343
    %2922 = vmatpush1.bf16.msra.mxu0 %v2342
    %2923 = vmatprep.subr.bf16.mxu0 %v2349
    %2924 = vmatpush1.bf16.msra.mxu0 %v2348
    %2925 = vmatprep.subr.bf16.mxu0 %v2355
    %2926 = vmatpush1.bf16.msra.mxu0 %v2354
    %2927 = vmatprep.subr.bf16.mxu0 %v2361
    %2928 = vmatpush1.bf16.msra.mxu0 %v2360
    %2929 = vmatprep.subr.bf16.mxu0 %v2367
    %2930 = vmatpush1.bf16.msra.mxu0 %v2366
    %2931 = vmatprep.subr.bf16.mxu0 %v2373
    %2932 = vmatpush1.bf16.msra.mxu0 %v2372
    %2933 = vmatprep.subr.bf16.mxu0 %v2379
    %2934 = vmatpush1.bf16.msra.mxu0 %v2378
    %2935 = vmatprep.subr.bf16.mxu0 %v2385
    %2936 = vmatpush1.bf16.msra.mxu0 %v2384
    %2937 = vmatprep.subr.bf16.mxu0 %v2391
    %2938 = vmatpush1.bf16.msra.mxu0 %v2390
    %2939 = vmatprep.subr.bf16.mxu0 %v2397
    %2940 = vmatpush1.bf16.msra.mxu0 %v2396
    %2941 = vmatprep.subr.bf16.mxu0 %v2403
    %2942 = vmatpush1.bf16.msra.mxu0 %v2402
    %2943 = vmatprep.subr.bf16.mxu0 %v2409
    %2944 = vmatpush1.bf16.msra.mxu0 %v2408
    %2945 = vmatprep.subr.bf16.mxu0 %v2415
    %2946 = vmatpush1.bf16.msra.mxu0 %v2414
    %2947 = vmatprep.subr.bf16.mxu0 %v2421
    %2948 = vmatpush1.bf16.msra.mxu0 %v2420
    %2949 = vmatprep.mubr.bf16.mxu0 %v1265
    %2950 = vmatmul.mubr.bf16.gmra.mrb[0].mxu0 %v1264
    %v2951 = vpop.f32.mrb[0].mxu0
    %v2952 = vadd.f32 %v2911, %v2951
    %v2953 = vpop.f32.mrb[0].mxu0
    %v2954 = vadd.f32 %v2913, %v2953
    %v2955 = vpop.f32.mrb[0].mxu0
    %v2956 = vpop.f32.mrb[0].mxu0
    %2957 = vdwg.mxu0
    %2958 = vmatprep.subr.bf16.mxu0 %v2141
    %2959 = vmatpush1.bf16.msra.mxu0 %v2140
    %2960 = vmatprep.subr.bf16.mxu0 %v2147
    %2961 = vmatpush1.bf16.msra.mxu0 %v2146
    %2962 = vmatprep.subr.bf16.mxu0 %v2153
    %2963 = vmatpush1.bf16.msra.mxu0 %v2152
    %2964 = vmatprep.subr.bf16.mxu0 %v2159
    %2965 = vmatpush1.bf16.msra.mxu0 %v2158
    %2966 = vmatprep.subr.bf16.mxu0 %v2165
    %2967 = vmatpush1.bf16.msra.mxu0 %v2164
    %2968 = vmatprep.subr.bf16.mxu0 %v2171
    %2969 = vmatpush1.bf16.msra.mxu0 %v2170
    %2970 = vmatprep.subr.bf16.mxu0 %v2177
    %2971 = vmatpush1.bf16.msra.mxu0 %v2176
    %2972 = vmatprep.subr.bf16.mxu0 %v2183
    %2973 = vmatpush1.bf16.msra.mxu0 %v2182
    %2974 = vmatprep.subr.bf16.mxu0 %v2189
    %2975 = vmatpush1.bf16.msra.mxu0 %v2188
    %2976 = vmatprep.subr.bf16.mxu0 %v2195
    %2977 = vmatpush1.bf16.msra.mxu0 %v2194
    %2978 = vmatprep.subr.bf16.mxu0 %v2201
    %2979 = vmatpush1.bf16.msra.mxu0 %v2200
    %2980 = vmatprep.subr.bf16.mxu0 %v2207
    %2981 = vmatpush1.bf16.msra.mxu0 %v2206
    %2982 = vmatprep.subr.bf16.mxu0 %v2213
    %2983 = vmatpush1.bf16.msra.mxu0 %v2212
    %2984 = vmatprep.subr.bf16.mxu0 %v2219
    %2985 = vmatpush1.bf16.msra.mxu0 %v2218
    %2986 = vmatprep.subr.bf16.mxu0 %v2225
    %2987 = vmatpush1.bf16.msra.mxu0 %v2224
    %2988 = vmatprep.subr.bf16.mxu0 %v2231
    %2989 = vmatpush1.bf16.msra.mxu0 %v2230
    %2990 = vmatprep.mubr.bf16.mxu0 %v1261
    %2991 = vmatmul.mubr.bf16.gmra.mrb[0].mxu0 %v1260
    %v2992 = vpop.f32.mrb[0].mxu0
    %v2993 = vadd.f32 %v1062, %v2992
    %v2994 = vpop.f32.mrb[0].mxu0
    %v2995 = vadd.f32 %v1066, %v2994
    %v2996 = vpop.f32.mrb[0].mxu0
    %v2997 = vpop.f32.mrb[0].mxu0
    %2998 = vdwg.mxu0
    %2999 = vmatprep.subr.bf16.mxu0 %v2237
    %3000 = vmatpush1.bf16.msra.mxu0 %v2236
    %3001 = vmatprep.subr.bf16.mxu0 %v2243
    %3002 = vmatpush1.bf16.msra.mxu0 %v2242
    %3003 = vmatprep.subr.bf16.mxu0 %v2249
    %3004 = vmatpush1.bf16.msra.mxu0 %v2248
    %3005 = vmatprep.subr.bf16.mxu0 %v2255
    %3006 = vmatpush1.bf16.msra.mxu0 %v2254
    %3007 = vmatprep.subr.bf16.mxu0 %v2261
    %3008 = vmatpush1.bf16.msra.mxu0 %v2260
    %3009 = vmatprep.subr.bf16.mxu0 %v2267
    %3010 = vmatpush1.bf16.msra.mxu0 %v2266
    %3011 = vmatprep.subr.bf16.mxu0 %v2273
    %3012 = vmatpush1.bf16.msra.mxu0 %v2272
    %3013 = vmatprep.subr.bf16.mxu0 %v2279
    %3014 = vmatpush1.bf16.msra.mxu0 %v2278
    %3015 = vmatprep.subr.bf16.mxu0 %v2285
    %3016 = vmatpush1.bf16.msra.mxu0 %v2284
    %3017 = vmatprep.subr.bf16.mxu0 %v2291
    %3018 = vmatpush1.bf16.msra.mxu0 %v2290
    %3019 = vmatprep.subr.bf16.mxu0 %v2297
    %3020 = vmatpush1.bf16.msra.mxu0 %v2296
    %3021 = vmatprep.subr.bf16.mxu0 %v2303
    %3022 = vmatpush1.bf16.msra.mxu0 %v2302
    %3023 = vmatprep.subr.bf16.mxu0 %v2309
    %3024 = vmatpush1.bf16.msra.mxu0 %v2308
    %3025 = vmatprep.subr.bf16.mxu0 %v2315
    %3026 = vmatpush1.bf16.msra.mxu0 %v2314
    %3027 = vmatprep.subr.bf16.mxu0 %v2321
    %3028 = vmatpush1.bf16.msra.mxu0 %v2320
    %3029 = vmatprep.subr.bf16.mxu0 %v2327
    %3030 = vmatpush1.bf16.msra.mxu0 %v2326
    %3031 = vmatprep.mubr.bf16.mxu0 %v1263
    %3032 = vmatmul.mubr.bf16.gmra.mrb[0].mxu0 %v1262
    %v3033 = vpop.f32.mrb[0].mxu0
    %v3034 = vadd.f32 %v2993, %v3033
    %v3035 = vpop.f32.mrb[0].mxu0
    %v3036 = vadd.f32 %v2995, %v3035
    %v3037 = vpop.f32.mrb[0].mxu0
    %v3038 = vpop.f32.mrb[0].mxu0
    %3039 = vdwg.mxu0
    %3040 = vmatprep.subr.bf16.mxu0 %v2333
    %3041 = vmatpush1.bf16.msra.mxu0 %v2332
    %3042 = vmatprep.subr.bf16.mxu0 %v2339
    %3043 = vmatpush1.bf16.msra.mxu0 %v2338
    %3044 = vmatprep.subr.bf16.mxu0 %v2345
    %3045 = vmatpush1.bf16.msra.mxu0 %v2344
    %3046 = vmatprep.subr.bf16.mxu0 %v2351
    %3047 = vmatpush1.bf16.msra.mxu0 %v2350
    %3048 = vmatprep.subr.bf16.mxu0 %v2357
    %3049 = vmatpush1.bf16.msra.mxu0 %v2356
    %3050 = vmatprep.subr.bf16.mxu0 %v2363
    %3051 = vmatpush1.bf16.msra.mxu0 %v2362
    %3052 = vmatprep.subr.bf16.mxu0 %v2369
    %3053 = vmatpush1.bf16.msra.mxu0 %v2368
    %3054 = vmatprep.subr.bf16.mxu0 %v2375
    %3055 = vmatpush1.bf16.msra.mxu0 %v2374
    %3056 = vmatprep.subr.bf16.mxu0 %v2381
    %3057 = vmatpush1.bf16.msra.mxu0 %v2380
    %3058 = vmatprep.subr.bf16.mxu0 %v2387
    %3059 = vmatpush1.bf16.msra.mxu0 %v2386
    %3060 = vmatprep.subr.bf16.mxu0 %v2393
    %3061 = vmatpush1.bf16.msra.mxu0 %v2392
    %3062 = vmatprep.subr.bf16.mxu0 %v2399
    %3063 = vmatpush1.bf16.msra.mxu0 %v2398
    %3064 = vmatprep.subr.bf16.mxu0 %v2405
    %3065 = vmatpush1.bf16.msra.mxu0 %v2404
    %3066 = vmatprep.subr.bf16.mxu0 %v2411
    %3067 = vmatpush1.bf16.msra.mxu0 %v2410
    %3068 = vmatprep.subr.bf16.mxu0 %v2417
    %3069 = vmatpush1.bf16.msra.mxu0 %v2416
    %3070 = vmatprep.subr.bf16.mxu0 %v2423
    %3071 = vmatpush1.bf16.msra.mxu0 %v2422
    %3072 = vmatprep.mubr.bf16.mxu0 %v1265
    %3073 = vmatmul.mubr.bf16.gmra.mrb[0].mxu0 %v1264
    %v3074 = vpop.f32.mrb[0].mxu0
    %v3075 = vadd.f32 %v3034, %v3074
    %v3076 = vpop.f32.mrb[0].mxu0
    %v3077 = vadd.f32 %v3036, %v3076
    %v3078 = vpop.f32.mrb[0].mxu0
    %v3079 = vpop.f32.mrb[0].mxu0
    %3080 = vdwg.mxu0
    %v3081 = vtanh.pop %v2829
    %v3082 = vtanh.pop %v2831
    %v3083 = vtanh.pop %v2952
    %v3084 = vtanh.pop %v2954
    %v3085 = vtanh.pop %v3075
    %v3086 = vtanh.pop %v3077
    %v3087 = vpack.c.bf16 %v3081, %v3081
    %v3088 = vpack.c.bf16 %v3082, %v3082
    %v3089 = vpack.c.bf16 %v3083, %v3083
    %v3090 = vpack.c.bf16 %v3084, %v3084
    %v3091 = vpack.c.bf16 %v3085, %v3085
    %v3092 = vpack.c.bf16 %v3086, %v3086
    %v3093 = vld [vmem:[#allocation10] sm:$0xff]
    %v3094 = vld [vmem:[#allocation10 + $0x8] sm:$0xff]
    %v3095 = vld [vmem:[#allocation10 + $0x10] sm:$0xff]
    %v3096 = vld [vmem:[#allocation10 + $0x18] sm:$0xff]
    %v3097 = vld [vmem:[#allocation10 + $0x20] sm:$0xff]
    %v3098 = vld [vmem:[#allocation10 + $0x28] sm:$0xff]
    %v3099 = vld [vmem:[#allocation10 + $0x30] sm:$0xff]
    %v3100 = vld [vmem:[#allocation10 + $0x38] sm:$0xff]
    %v3101 = vld [vmem:[#allocation10 + $0x40] sm:$0xff]
    %v3102 = vld [vmem:[#allocation10 + $0x48] sm:$0xff]
    %v3103 = vld [vmem:[#allocation10 + $0x50] sm:$0xff]
    %v3104 = vld [vmem:[#allocation10 + $0x58] sm:$0xff]
    %v3105 = vld [vmem:[#allocation10 + $0x60] sm:$0xff]
    %v3106 = vld [vmem:[#allocation10 + $0x68] sm:$0xff]
    %v3107 = vld [vmem:[#allocation10 + $0x70] sm:$0xff]
    %v3108 = vld [vmem:[#allocation10 + $0x78] sm:$0xff]
    %v3109 = vld [vmem:[#allocation10 + $0x80] sm:$0xff]
    %v3110 = vld [vmem:[#allocation10 + $0x88] sm:$0xff]
    %v3111 = vld [vmem:[#allocation10 + $0x90] sm:$0xff]
    %v3112 = vld [vmem:[#allocation10 + $0x98] sm:$0xff]
    %v3113 = vld [vmem:[#allocation10 + $0xa0] sm:$0xff]
    %v3114 = vld [vmem:[#allocation10 + $0xa8] sm:$0xff]
    %v3115 = vld [vmem:[#allocation10 + $0xb0] sm:$0xff]
    %v3116 = vld [vmem:[#allocation10 + $0xb8] sm:$0xff]
    %v3117 = vld [vmem:[#allocation10 + $0xc0] sm:$0xff]
    %v3118 = vld [vmem:[#allocation10 + $0xc8] sm:$0xff]
    %v3119 = vld [vmem:[#allocation10 + $0xd0] sm:$0xff]
    %v3120 = vld [vmem:[#allocation10 + $0xd8] sm:$0xff]
    %v3121 = vld [vmem:[#allocation10 + $0xe0] sm:$0xff]
    %v3122 = vld [vmem:[#allocation10 + $0xe8] sm:$0xff]
    %v3123 = vld [vmem:[#allocation10 + $0xf0] sm:$0xff]
    %v3124 = vld [vmem:[#allocation10 + $0xf8] sm:$0xff]
    %v3125 = vld [vmem:[#allocation10 + $0x100] sm:$0xff]
    %v3126 = vld [vmem:[#allocation10 + $0x108] sm:$0xff]
    %v3127 = vld [vmem:[#allocation10 + $0x110] sm:$0xff]
    %v3128 = vld [vmem:[#allocation10 + $0x118] sm:$0xff]
    %v3129 = vld [vmem:[#allocation10 + $0x120] sm:$0xff]
    %v3130 = vld [vmem:[#allocation10 + $0x128] sm:$0xff]
    %v3131 = vld [vmem:[#allocation10 + $0x130] sm:$0xff]
    %v3132 = vld [vmem:[#allocation10 + $0x138] sm:$0xff]
    %v3133 = vld [vmem:[#allocation10 + $0x140] sm:$0xff]
    %v3134 = vld [vmem:[#allocation10 + $0x148] sm:$0xff]
    %v3135 = vld [vmem:[#allocation10 + $0x150] sm:$0xff]
    %v3136 = vld [vmem:[#allocation10 + $0x158] sm:$0xff]
    %v3137 = vld [vmem:[#allocation10 + $0x160] sm:$0xff]
    %v3138 = vld [vmem:[#allocation10 + $0x168] sm:$0xff]
    %v3139 = vld [vmem:[#allocation10 + $0x170] sm:$0xff]
    %v3140 = vld [vmem:[#allocation10 + $0x178] sm:$0xff]
    %v3141 = vld [vmem:[#allocation10 + $0x180] sm:$0xff]
    %v3142 = vld [vmem:[#allocation10 + $0x188] sm:$0xff]
    %v3143 = vld [vmem:[#allocation10 + $0x190] sm:$0xff]
    %v3144 = vld [vmem:[#allocation10 + $0x198] sm:$0xff]
    %v3145 = vld [vmem:[#allocation10 + $0x1a0] sm:$0xff]
    %v3146 = vld [vmem:[#allocation10 + $0x1a8] sm:$0xff]
    %v3147 = vld [vmem:[#allocation10 + $0x1b0] sm:$0xff]
    %v3148 = vld [vmem:[#allocation10 + $0x1b8] sm:$0xff]
    %v3149 = vld [vmem:[#allocation10 + $0x1c0] sm:$0xff]
    %v3150 = vld [vmem:[#allocation10 + $0x1c8] sm:$0xff]
    %v3151 = vld [vmem:[#allocation10 + $0x1d0] sm:$0xff]
    %v3152 = vld [vmem:[#allocation10 + $0x1d8] sm:$0xff]
    %v3153 = vld [vmem:[#allocation10 + $0x1e0] sm:$0xff]
    %v3154 = vld [vmem:[#allocation10 + $0x1e8] sm:$0xff]
    %v3155 = vld [vmem:[#allocation10 + $0x1f0] sm:$0xff]
    %v3156 = vld [vmem:[#allocation10 + $0x1f8] sm:$0xff]
    %v3157 = vld [vmem:[#allocation10 + $0x200] sm:$0xff]
    %v3158 = vld [vmem:[#allocation10 + $0x208] sm:$0xff]
    %v3159 = vld [vmem:[#allocation10 + $0x210] sm:$0xff]
    %v3160 = vld [vmem:[#allocation10 + $0x218] sm:$0xff]
    %v3161 = vld [vmem:[#allocation10 + $0x220] sm:$0xff]
    %v3162 = vld [vmem:[#allocation10 + $0x228] sm:$0xff]
    %v3163 = vld [vmem:[#allocation10 + $0x230] sm:$0xff]
    %v3164 = vld [vmem:[#allocation10 + $0x238] sm:$0xff]
    %v3165 = vld [vmem:[#allocation10 + $0x240] sm:$0xff]
    %v3166 = vld [vmem:[#allocation10 + $0x248] sm:$0xff]
    %v3167 = vld [vmem:[#allocation10 + $0x250] sm:$0xff]
    %v3168 = vld [vmem:[#allocation10 + $0x258] sm:$0xff]
    %v3169 = vld [vmem:[#allocation10 + $0x260] sm:$0xff]
    %v3170 = vld [vmem:[#allocation10 + $0x268] sm:$0xff]
    %v3171 = vld [vmem:[#allocation10 + $0x270] sm:$0xff]
    %v3172 = vld [vmem:[#allocation10 + $0x278] sm:$0xff]
    %v3173 = vld [vmem:[#allocation10 + $0x280] sm:$0xff]
    %v3174 = vld [vmem:[#allocation10 + $0x288] sm:$0xff]
    %v3175 = vld [vmem:[#allocation10 + $0x290] sm:$0xff]
    %v3176 = vld [vmem:[#allocation10 + $0x298] sm:$0xff]
    %v3177 = vld [vmem:[#allocation10 + $0x2a0] sm:$0xff]
    %v3178 = vld [vmem:[#allocation10 + $0x2a8] sm:$0xff]
    %v3179 = vld [vmem:[#allocation10 + $0x2b0] sm:$0xff]
    %v3180 = vld [vmem:[#allocation10 + $0x2b8] sm:$0xff]
    %v3181 = vld [vmem:[#allocation10 + $0x2c0] sm:$0xff]
    %v3182 = vld [vmem:[#allocation10 + $0x2c8] sm:$0xff]
    %v3183 = vld [vmem:[#allocation10 + $0x2d0] sm:$0xff]
    %v3184 = vld [vmem:[#allocation10 + $0x2d8] sm:$0xff]
    %v3185 = vld [vmem:[#allocation10 + $0x2e0] sm:$0xff]
    %v3186 = vld [vmem:[#allocation10 + $0x2e8] sm:$0xff]
    %v3187 = vld [vmem:[#allocation10 + $0x2f0] sm:$0xff]
    %v3188 = vld [vmem:[#allocation10 + $0x2f8] sm:$0xff]
    %v3189 = vld [vmem:[#allocation10 + $0x300] sm:$0xff]
    %v3190 = vld [vmem:[#allocation10 + $0x308] sm:$0xff]
    %v3191 = vld [vmem:[#allocation10 + $0x310] sm:$0xff]
    %v3192 = vld [vmem:[#allocation10 + $0x318] sm:$0xff]
    %v3193 = vld [vmem:[#allocation10 + $0x320] sm:$0xff]
    %v3194 = vld [vmem:[#allocation10 + $0x328] sm:$0xff]
    %v3195 = vld [vmem:[#allocation10 + $0x330] sm:$0xff]
    %v3196 = vld [vmem:[#allocation10 + $0x338] sm:$0xff]
    %v3197 = vld [vmem:[#allocation10 + $0x340] sm:$0xff]
    %v3198 = vld [vmem:[#allocation10 + $0x348] sm:$0xff]
    %v3199 = vld [vmem:[#allocation10 + $0x350] sm:$0xff]
    %v3200 = vld [vmem:[#allocation10 + $0x358] sm:$0xff]
    %v3201 = vld [vmem:[#allocation10 + $0x360] sm:$0xff]
    %v3202 = vld [vmem:[#allocation10 + $0x368] sm:$0xff]
    %v3203 = vld [vmem:[#allocation10 + $0x370] sm:$0xff]
    %v3204 = vld [vmem:[#allocation10 + $0x378] sm:$0xff]
    %v3205 = vld [vmem:[#allocation10 + $0x380] sm:$0xff]
    %v3206 = vld [vmem:[#allocation10 + $0x388] sm:$0xff]
    %v3207 = vld [vmem:[#allocation10 + $0x390] sm:$0xff]
    %v3208 = vld [vmem:[#allocation10 + $0x398] sm:$0xff]
    %v3209 = vld [vmem:[#allocation10 + $0x3a0] sm:$0xff]
    %v3210 = vld [vmem:[#allocation10 + $0x3a8] sm:$0xff]
    %v3211 = vld [vmem:[#allocation10 + $0x3b0] sm:$0xff]
    %v3212 = vld [vmem:[#allocation10 + $0x3b8] sm:$0xff]
    %v3213 = vld [vmem:[#allocation10 + $0x3c0] sm:$0xff]
    %v3214 = vld [vmem:[#allocation10 + $0x3c8] sm:$0xff]
    %v3215 = vld [vmem:[#allocation10 + $0x3d0] sm:$0xff]
    %v3216 = vld [vmem:[#allocation10 + $0x3d8] sm:$0xff]
    %v3217 = vld [vmem:[#allocation10 + $0x3e0] sm:$0xff]
    %v3218 = vld [vmem:[#allocation10 + $0x3e8] sm:$0xff]
    %v3219 = vld [vmem:[#allocation10 + $0x3f0] sm:$0xff]
    %v3220 = vld [vmem:[#allocation10 + $0x3f8] sm:$0xff]
    %v3221 = vld [vmem:[#allocation10 + $0x400] sm:$0xff]
    %v3222 = vld [vmem:[#allocation10 + $0x408] sm:$0xff]
    %v3223 = vld [vmem:[#allocation10 + $0x410] sm:$0xff]
    %v3224 = vld [vmem:[#allocation10 + $0x418] sm:$0xff]
    %v3225 = vld [vmem:[#allocation10 + $0x420] sm:$0xff]
    %v3226 = vld [vmem:[#allocation10 + $0x428] sm:$0xff]
    %v3227 = vld [vmem:[#allocation10 + $0x430] sm:$0xff]
    %v3228 = vld [vmem:[#allocation10 + $0x438] sm:$0xff]
    %v3229 = vld [vmem:[#allocation10 + $0x440] sm:$0xff]
    %v3230 = vld [vmem:[#allocation10 + $0x448] sm:$0xff]
    %v3231 = vld [vmem:[#allocation10 + $0x450] sm:$0xff]
    %v3232 = vld [vmem:[#allocation10 + $0x458] sm:$0xff]
    %v3233 = vld [vmem:[#allocation10 + $0x460] sm:$0xff]
    %v3234 = vld [vmem:[#allocation10 + $0x468] sm:$0xff]
    %v3235 = vld [vmem:[#allocation10 + $0x470] sm:$0xff]
    %v3236 = vld [vmem:[#allocation10 + $0x478] sm:$0xff]
    %v3237 = vld [vmem:[#allocation10 + $0x480] sm:$0xff]
    %v3238 = vld [vmem:[#allocation10 + $0x488] sm:$0xff]
    %v3239 = vld [vmem:[#allocation10 + $0x490] sm:$0xff]
    %v3240 = vld [vmem:[#allocation10 + $0x498] sm:$0xff]
    %v3241 = vld [vmem:[#allocation10 + $0x4a0] sm:$0xff]
    %v3242 = vld [vmem:[#allocation10 + $0x4a8] sm:$0xff]
    %v3243 = vld [vmem:[#allocation10 + $0x4b0] sm:$0xff]
    %v3244 = vld [vmem:[#allocation10 + $0x4b8] sm:$0xff]
    %v3245 = vld [vmem:[#allocation10 + $0x4c0] sm:$0xff]
    %v3246 = vld [vmem:[#allocation10 + $0x4c8] sm:$0xff]
    %v3247 = vld [vmem:[#allocation10 + $0x4d0] sm:$0xff]
    %v3248 = vld [vmem:[#allocation10 + $0x4d8] sm:$0xff]
    %v3249 = vld [vmem:[#allocation10 + $0x4e0] sm:$0xff]
    %v3250 = vld [vmem:[#allocation10 + $0x4e8] sm:$0xff]
    %v3251 = vld [vmem:[#allocation10 + $0x4f0] sm:$0xff]
    %v3252 = vld [vmem:[#allocation10 + $0x4f8] sm:$0xff]
    %v3253 = vld [vmem:[#allocation10 + $0x500] sm:$0xff]
    %v3254 = vld [vmem:[#allocation10 + $0x508] sm:$0xff]
    %v3255 = vld [vmem:[#allocation10 + $0x510] sm:$0xff]
    %v3256 = vld [vmem:[#allocation10 + $0x518] sm:$0xff]
    %v3257 = vld [vmem:[#allocation10 + $0x520] sm:$0xff]
    %v3258 = vld [vmem:[#allocation10 + $0x528] sm:$0xff]
    %v3259 = vld [vmem:[#allocation10 + $0x530] sm:$0xff]
    %v3260 = vld [vmem:[#allocation10 + $0x538] sm:$0xff]
    %v3261 = vld [vmem:[#allocation10 + $0x540] sm:$0xff]
    %v3262 = vld [vmem:[#allocation10 + $0x548] sm:$0xff]
    %v3263 = vld [vmem:[#allocation10 + $0x550] sm:$0xff]
    %v3264 = vld [vmem:[#allocation10 + $0x558] sm:$0xff]
    %v3265 = vld [vmem:[#allocation10 + $0x560] sm:$0xff]
    %v3266 = vld [vmem:[#allocation10 + $0x568] sm:$0xff]
    %v3267 = vld [vmem:[#allocation10 + $0x570] sm:$0xff]
    %v3268 = vld [vmem:[#allocation10 + $0x578] sm:$0xff]
    %v3269 = vld [vmem:[#allocation10 + $0x580] sm:$0xff]
    %v3270 = vld [vmem:[#allocation10 + $0x588] sm:$0xff]
    %v3271 = vld [vmem:[#allocation10 + $0x590] sm:$0xff]
    %v3272 = vld [vmem:[#allocation10 + $0x598] sm:$0xff]
    %v3273 = vld [vmem:[#allocation10 + $0x5a0] sm:$0xff]
    %v3274 = vld [vmem:[#allocation10 + $0x5a8] sm:$0xff]
    %v3275 = vld [vmem:[#allocation10 + $0x5b0] sm:$0xff]
    %v3276 = vld [vmem:[#allocation10 + $0x5b8] sm:$0xff]
    %v3277 = vld [vmem:[#allocation10 + $0x5c0] sm:$0xff]
    %v3278 = vld [vmem:[#allocation10 + $0x5c8] sm:$0xff]
    %v3279 = vld [vmem:[#allocation10 + $0x5d0] sm:$0xff]
    %v3280 = vld [vmem:[#allocation10 + $0x5d8] sm:$0xff]
    %v3281 = vld [vmem:[#allocation10 + $0x5e0] sm:$0xff]
    %v3282 = vld [vmem:[#allocation10 + $0x5e8] sm:$0xff]
    %v3283 = vld [vmem:[#allocation10 + $0x5f0] sm:$0xff]
    %v3284 = vld [vmem:[#allocation10 + $0x5f8] sm:$0xff]
    %v3285 = vld [vmem:[#allocation11] sm:$0xf]
    %v3287 = vlaneseq
    %v3288 = vshrl.u32 %v3287, 7
    %v3289 = vsub.s32 0, %v3288
    %v3290 = vrot.slane %v3285, %v3289
    %v3291 = vlaneseq
    %v3292 = vshrl.u32 %v3291, 7
    %v3293 = vsub.s32 1, %v3292
    %v3294 = vrot.slane %v3285, %v3293
    %v3295 = vlaneseq
    %v3296 = vshrl.u32 %v3295, 7
    %v3297 = vsub.s32 2, %v3296
    %v3298 = vrot.slane %v3285, %v3297
    %v3299 = vlaneseq
    %v3300 = vshrl.u32 %v3299, 7
    %v3301 = vsub.s32 3, %v3300
    %v3302 = vrot.slane %v3285, %v3301
    %v3499 = vunpack.c.l.b16 %v3093
    %v3500 = vunpack.c.h.b16 %v3093
    %v3501 = vunpack.c.l.b16 %v3094
    %v3502 = vunpack.c.h.b16 %v3094
    %v3503 = vunpack.c.l.b16 %v3095
    %v3504 = vunpack.c.h.b16 %v3095
    %v3505 = vunpack.c.l.b16 %v3096
    %v3506 = vunpack.c.h.b16 %v3096
    %v3507 = vunpack.c.l.b16 %v3097
    %v3508 = vunpack.c.h.b16 %v3097
    %v3509 = vunpack.c.l.b16 %v3098
    %v3510 = vunpack.c.h.b16 %v3098
    %v3511 = vunpack.c.l.b16 %v3099
    %v3512 = vunpack.c.h.b16 %v3099
    %v3513 = vunpack.c.l.b16 %v3100
    %v3514 = vunpack.c.h.b16 %v3100
    %v3515 = vunpack.c.l.b16 %v3101
    %v3516 = vunpack.c.h.b16 %v3101
    %v3517 = vunpack.c.l.b16 %v3102
    %v3518 = vunpack.c.h.b16 %v3102
    %v3519 = vunpack.c.l.b16 %v3103
    %v3520 = vunpack.c.h.b16 %v3103
    %v3521 = vunpack.c.l.b16 %v3104
    %v3522 = vunpack.c.h.b16 %v3104
    %v3523 = vunpack.c.l.b16 %v3105
    %v3524 = vunpack.c.h.b16 %v3105
    %v3525 = vunpack.c.l.b16 %v3106
    %v3526 = vunpack.c.h.b16 %v3106
    %v3527 = vunpack.c.l.b16 %v3107
    %v3528 = vunpack.c.h.b16 %v3107
    %v3529 = vunpack.c.l.b16 %v3108
    %v3530 = vunpack.c.h.b16 %v3108
    %v3531 = vunpack.c.l.b16 %v3109
    %v3532 = vunpack.c.h.b16 %v3109
    %v3533 = vunpack.c.l.b16 %v3110
    %v3534 = vunpack.c.h.b16 %v3110
    %v3535 = vunpack.c.l.b16 %v3111
    %v3536 = vunpack.c.h.b16 %v3111
    %v3537 = vunpack.c.l.b16 %v3112
    %v3538 = vunpack.c.h.b16 %v3112
    %v3539 = vunpack.c.l.b16 %v3113
    %v3540 = vunpack.c.h.b16 %v3113
    %v3541 = vunpack.c.l.b16 %v3114
    %v3542 = vunpack.c.h.b16 %v3114
    %v3543 = vunpack.c.l.b16 %v3115
    %v3544 = vunpack.c.h.b16 %v3115
    %v3545 = vunpack.c.l.b16 %v3116
    %v3546 = vunpack.c.h.b16 %v3116
    %v3547 = vunpack.c.l.b16 %v3117
    %v3548 = vunpack.c.h.b16 %v3117
    %v3549 = vunpack.c.l.b16 %v3118
    %v3550 = vunpack.c.h.b16 %v3118
    %v3551 = vunpack.c.l.b16 %v3119
    %v3552 = vunpack.c.h.b16 %v3119
    %v3553 = vunpack.c.l.b16 %v3120
    %v3554 = vunpack.c.h.b16 %v3120
    %v3555 = vunpack.c.l.b16 %v3121
    %v3556 = vunpack.c.h.b16 %v3121
    %v3557 = vunpack.c.l.b16 %v3122
    %v3558 = vunpack.c.h.b16 %v3122
    %v3559 = vunpack.c.l.b16 %v3123
    %v3560 = vunpack.c.h.b16 %v3123
    %v3561 = vunpack.c.l.b16 %v3124
    %v3562 = vunpack.c.h.b16 %v3124
    %v3563 = vunpack.c.l.b16 %v3125
    %v3564 = vunpack.c.h.b16 %v3125
    %v3565 = vunpack.c.l.b16 %v3126
    %v3566 = vunpack.c.h.b16 %v3126
    %v3567 = vunpack.c.l.b16 %v3127
    %v3568 = vunpack.c.h.b16 %v3127
    %v3569 = vunpack.c.l.b16 %v3128
    %v3570 = vunpack.c.h.b16 %v3128
    %v3571 = vunpack.c.l.b16 %v3129
    %v3572 = vunpack.c.h.b16 %v3129
    %v3573 = vunpack.c.l.b16 %v3130
    %v3574 = vunpack.c.h.b16 %v3130
    %v3575 = vunpack.c.l.b16 %v3131
    %v3576 = vunpack.c.h.b16 %v3131
    %v3577 = vunpack.c.l.b16 %v3132
    %v3578 = vunpack.c.h.b16 %v3132
    %v3579 = vunpack.c.l.b16 %v3133
    %v3580 = vunpack.c.h.b16 %v3133
    %v3581 = vunpack.c.l.b16 %v3134
    %v3582 = vunpack.c.h.b16 %v3134
    %v3583 = vunpack.c.l.b16 %v3135
    %v3584 = vunpack.c.h.b16 %v3135
    %v3585 = vunpack.c.l.b16 %v3136
    %v3586 = vunpack.c.h.b16 %v3136
    %v3587 = vunpack.c.l.b16 %v3137
    %v3588 = vunpack.c.h.b16 %v3137
    %v3589 = vunpack.c.l.b16 %v3138
    %v3590 = vunpack.c.h.b16 %v3138
    %v3591 = vunpack.c.l.b16 %v3139
    %v3592 = vunpack.c.h.b16 %v3139
    %v3593 = vunpack.c.l.b16 %v3140
    %v3594 = vunpack.c.h.b16 %v3140
    %v3595 = vunpack.c.l.b16 %v3141
    %v3596 = vunpack.c.h.b16 %v3141
    %v3597 = vunpack.c.l.b16 %v3142
    %v3598 = vunpack.c.h.b16 %v3142
    %v3599 = vunpack.c.l.b16 %v3143
    %v3600 = vunpack.c.h.b16 %v3143
    %v3601 = vunpack.c.l.b16 %v3144
    %v3602 = vunpack.c.h.b16 %v3144
    %v3603 = vunpack.c.l.b16 %v3145
    %v3604 = vunpack.c.h.b16 %v3145
    %v3605 = vunpack.c.l.b16 %v3146
    %v3606 = vunpack.c.h.b16 %v3146
    %v3607 = vunpack.c.l.b16 %v3147
    %v3608 = vunpack.c.h.b16 %v3147
    %v3609 = vunpack.c.l.b16 %v3148
    %v3610 = vunpack.c.h.b16 %v3148
    %v3611 = vunpack.c.l.b16 %v3149
    %v3612 = vunpack.c.h.b16 %v3149
    %v3613 = vunpack.c.l.b16 %v3150
    %v3614 = vunpack.c.h.b16 %v3150
    %v3615 = vunpack.c.l.b16 %v3151
    %v3616 = vunpack.c.h.b16 %v3151
    %v3617 = vunpack.c.l.b16 %v3152
    %v3618 = vunpack.c.h.b16 %v3152
    %v3619 = vunpack.c.l.b16 %v3153
    %v3620 = vunpack.c.h.b16 %v3153
    %v3621 = vunpack.c.l.b16 %v3154
    %v3622 = vunpack.c.h.b16 %v3154
    %v3623 = vunpack.c.l.b16 %v3155
    %v3624 = vunpack.c.h.b16 %v3155
    %v3625 = vunpack.c.l.b16 %v3156
    %v3626 = vunpack.c.h.b16 %v3156
    %v3627 = vunpack.c.l.b16 %v3157
    %v3628 = vunpack.c.h.b16 %v3157
    %v3629 = vunpack.c.l.b16 %v3158
    %v3630 = vunpack.c.h.b16 %v3158
    %v3631 = vunpack.c.l.b16 %v3159
    %v3632 = vunpack.c.h.b16 %v3159
    %v3633 = vunpack.c.l.b16 %v3160
    %v3634 = vunpack.c.h.b16 %v3160
    %v3635 = vunpack.c.l.b16 %v3161
    %v3636 = vunpack.c.h.b16 %v3161
    %v3637 = vunpack.c.l.b16 %v3162
    %v3638 = vunpack.c.h.b16 %v3162
    %v3639 = vunpack.c.l.b16 %v3163
    %v3640 = vunpack.c.h.b16 %v3163
    %v3641 = vunpack.c.l.b16 %v3164
    %v3642 = vunpack.c.h.b16 %v3164
    %v3643 = vunpack.c.l.b16 %v3165
    %v3644 = vunpack.c.h.b16 %v3165
    %v3645 = vunpack.c.l.b16 %v3166
    %v3646 = vunpack.c.h.b16 %v3166
    %v3647 = vunpack.c.l.b16 %v3167
    %v3648 = vunpack.c.h.b16 %v3167
    %v3649 = vunpack.c.l.b16 %v3168
    %v3650 = vunpack.c.h.b16 %v3168
    %v3651 = vunpack.c.l.b16 %v3169
    %v3652 = vunpack.c.h.b16 %v3169
    %v3653 = vunpack.c.l.b16 %v3170
    %v3654 = vunpack.c.h.b16 %v3170
    %v3655 = vunpack.c.l.b16 %v3171
    %v3656 = vunpack.c.h.b16 %v3171
    %v3657 = vunpack.c.l.b16 %v3172
    %v3658 = vunpack.c.h.b16 %v3172
    %v3659 = vunpack.c.l.b16 %v3173
    %v3660 = vunpack.c.h.b16 %v3173
    %v3661 = vunpack.c.l.b16 %v3174
    %v3662 = vunpack.c.h.b16 %v3174
    %v3663 = vunpack.c.l.b16 %v3175
    %v3664 = vunpack.c.h.b16 %v3175
    %v3665 = vunpack.c.l.b16 %v3176
    %v3666 = vunpack.c.h.b16 %v3176
    %v3667 = vunpack.c.l.b16 %v3177
    %v3668 = vunpack.c.h.b16 %v3177
    %v3669 = vunpack.c.l.b16 %v3178
    %v3670 = vunpack.c.h.b16 %v3178
    %v3671 = vunpack.c.l.b16 %v3179
    %v3672 = vunpack.c.h.b16 %v3179
    %v3673 = vunpack.c.l.b16 %v3180
    %v3674 = vunpack.c.h.b16 %v3180
    %v3675 = vunpack.c.l.b16 %v3181
    %v3676 = vunpack.c.h.b16 %v3181
    %v3677 = vunpack.c.l.b16 %v3182
    %v3678 = vunpack.c.h.b16 %v3182
    %v3679 = vunpack.c.l.b16 %v3183
    %v3680 = vunpack.c.h.b16 %v3183
    %v3681 = vunpack.c.l.b16 %v3184
    %v3682 = vunpack.c.h.b16 %v3184
    %v3683 = vunpack.c.l.b16 %v3185
    %v3684 = vunpack.c.h.b16 %v3185
    %v3685 = vunpack.c.l.b16 %v3186
    %v3686 = vunpack.c.h.b16 %v3186
    %v3687 = vunpack.c.l.b16 %v3187
    %v3688 = vunpack.c.h.b16 %v3187
    %v3689 = vunpack.c.l.b16 %v3188
    %v3690 = vunpack.c.h.b16 %v3188
    %v3691 = vunpack.c.l.b16 %v3189
    %v3692 = vunpack.c.h.b16 %v3189
    %v3693 = vunpack.c.l.b16 %v3190
    %v3694 = vunpack.c.h.b16 %v3190
    %v3695 = vunpack.c.l.b16 %v3191
    %v3696 = vunpack.c.h.b16 %v3191
    %v3697 = vunpack.c.l.b16 %v3192
    %v3698 = vunpack.c.h.b16 %v3192
    %v3699 = vunpack.c.l.b16 %v3193
    %v3700 = vunpack.c.h.b16 %v3193
    %v3701 = vunpack.c.l.b16 %v3194
    %v3702 = vunpack.c.h.b16 %v3194
    %v3703 = vunpack.c.l.b16 %v3195
    %v3704 = vunpack.c.h.b16 %v3195
    %v3705 = vunpack.c.l.b16 %v3196
    %v3706 = vunpack.c.h.b16 %v3196
    %v3707 = vunpack.c.l.b16 %v3197
    %v3708 = vunpack.c.h.b16 %v3197
    %v3709 = vunpack.c.l.b16 %v3198
    %v3710 = vunpack.c.h.b16 %v3198
    %v3711 = vunpack.c.l.b16 %v3199
    %v3712 = vunpack.c.h.b16 %v3199
    %v3713 = vunpack.c.l.b16 %v3200
    %v3714 = vunpack.c.h.b16 %v3200
    %v3715 = vunpack.c.l.b16 %v3201
    %v3716 = vunpack.c.h.b16 %v3201
    %v3717 = vunpack.c.l.b16 %v3202
    %v3718 = vunpack.c.h.b16 %v3202
    %v3719 = vunpack.c.l.b16 %v3203
    %v3720 = vunpack.c.h.b16 %v3203
    %v3721 = vunpack.c.l.b16 %v3204
    %v3722 = vunpack.c.h.b16 %v3204
    %v3723 = vunpack.c.l.b16 %v3205
    %v3724 = vunpack.c.h.b16 %v3205
    %v3725 = vunpack.c.l.b16 %v3206
    %v3726 = vunpack.c.h.b16 %v3206
    %v3727 = vunpack.c.l.b16 %v3207
    %v3728 = vunpack.c.h.b16 %v3207
    %v3729 = vunpack.c.l.b16 %v3208
    %v3730 = vunpack.c.h.b16 %v3208
    %v3731 = vunpack.c.l.b16 %v3209
    %v3732 = vunpack.c.h.b16 %v3209
    %v3733 = vunpack.c.l.b16 %v3210
    %v3734 = vunpack.c.h.b16 %v3210
    %v3735 = vunpack.c.l.b16 %v3211
    %v3736 = vunpack.c.h.b16 %v3211
    %v3737 = vunpack.c.l.b16 %v3212
    %v3738 = vunpack.c.h.b16 %v3212
    %v3739 = vunpack.c.l.b16 %v3213
    %v3740 = vunpack.c.h.b16 %v3213
    %v3741 = vunpack.c.l.b16 %v3214
    %v3742 = vunpack.c.h.b16 %v3214
    %v3743 = vunpack.c.l.b16 %v3215
    %v3744 = vunpack.c.h.b16 %v3215
    %v3745 = vunpack.c.l.b16 %v3216
    %v3746 = vunpack.c.h.b16 %v3216
    %v3747 = vunpack.c.l.b16 %v3217
    %v3748 = vunpack.c.h.b16 %v3217
    %v3749 = vunpack.c.l.b16 %v3218
    %v3750 = vunpack.c.h.b16 %v3218
    %v3751 = vunpack.c.l.b16 %v3219
    %v3752 = vunpack.c.h.b16 %v3219
    %v3753 = vunpack.c.l.b16 %v3220
    %v3754 = vunpack.c.h.b16 %v3220
    %v3755 = vunpack.c.l.b16 %v3221
    %v3756 = vunpack.c.h.b16 %v3221
    %v3757 = vunpack.c.l.b16 %v3222
    %v3758 = vunpack.c.h.b16 %v3222
    %v3759 = vunpack.c.l.b16 %v3223
    %v3760 = vunpack.c.h.b16 %v3223
    %v3761 = vunpack.c.l.b16 %v3224
    %v3762 = vunpack.c.h.b16 %v3224
    %v3763 = vunpack.c.l.b16 %v3225
    %v3764 = vunpack.c.h.b16 %v3225
    %v3765 = vunpack.c.l.b16 %v3226
    %v3766 = vunpack.c.h.b16 %v3226
    %v3767 = vunpack.c.l.b16 %v3227
    %v3768 = vunpack.c.h.b16 %v3227
    %v3769 = vunpack.c.l.b16 %v3228
    %v3770 = vunpack.c.h.b16 %v3228
    %v3771 = vunpack.c.l.b16 %v3229
    %v3772 = vunpack.c.h.b16 %v3229
    %v3773 = vunpack.c.l.b16 %v3230
    %v3774 = vunpack.c.h.b16 %v3230
    %v3775 = vunpack.c.l.b16 %v3231
    %v3776 = vunpack.c.h.b16 %v3231
    %v3777 = vunpack.c.l.b16 %v3232
    %v3778 = vunpack.c.h.b16 %v3232
    %v3779 = vunpack.c.l.b16 %v3233
    %v3780 = vunpack.c.h.b16 %v3233
    %v3781 = vunpack.c.l.b16 %v3234
    %v3782 = vunpack.c.h.b16 %v3234
    %v3783 = vunpack.c.l.b16 %v3235
    %v3784 = vunpack.c.h.b16 %v3235
    %v3785 = vunpack.c.l.b16 %v3236
    %v3786 = vunpack.c.h.b16 %v3236
    %v3787 = vunpack.c.l.b16 %v3237
    %v3788 = vunpack.c.h.b16 %v3237
    %v3789 = vunpack.c.l.b16 %v3238
    %v3790 = vunpack.c.h.b16 %v3238
    %v3791 = vunpack.c.l.b16 %v3239
    %v3792 = vunpack.c.h.b16 %v3239
    %v3793 = vunpack.c.l.b16 %v3240
    %v3794 = vunpack.c.h.b16 %v3240
    %v3795 = vunpack.c.l.b16 %v3241
    %v3796 = vunpack.c.h.b16 %v3241
    %v3797 = vunpack.c.l.b16 %v3242
    %v3798 = vunpack.c.h.b16 %v3242
    %v3799 = vunpack.c.l.b16 %v3243
    %v3800 = vunpack.c.h.b16 %v3243
    %v3801 = vunpack.c.l.b16 %v3244
    %v3802 = vunpack.c.h.b16 %v3244
    %v3803 = vunpack.c.l.b16 %v3245
    %v3804 = vunpack.c.h.b16 %v3245
    %v3805 = vunpack.c.l.b16 %v3246
    %v3806 = vunpack.c.h.b16 %v3246
    %v3807 = vunpack.c.l.b16 %v3247
    %v3808 = vunpack.c.h.b16 %v3247
    %v3809 = vunpack.c.l.b16 %v3248
    %v3810 = vunpack.c.h.b16 %v3248
    %v3811 = vunpack.c.l.b16 %v3249
    %v3812 = vunpack.c.h.b16 %v3249
    %v3813 = vunpack.c.l.b16 %v3250
    %v3814 = vunpack.c.h.b16 %v3250
    %v3815 = vunpack.c.l.b16 %v3251
    %v3816 = vunpack.c.h.b16 %v3251
    %v3817 = vunpack.c.l.b16 %v3252
    %v3818 = vunpack.c.h.b16 %v3252
    %v3819 = vunpack.c.l.b16 %v3253
    %v3820 = vunpack.c.h.b16 %v3253
    %v3821 = vunpack.c.l.b16 %v3254
    %v3822 = vunpack.c.h.b16 %v3254
    %v3823 = vunpack.c.l.b16 %v3255
    %v3824 = vunpack.c.h.b16 %v3255
    %v3825 = vunpack.c.l.b16 %v3256
    %v3826 = vunpack.c.h.b16 %v3256
    %v3827 = vunpack.c.l.b16 %v3257
    %v3828 = vunpack.c.h.b16 %v3257
    %v3829 = vunpack.c.l.b16 %v3258
    %v3830 = vunpack.c.h.b16 %v3258
    %v3831 = vunpack.c.l.b16 %v3259
    %v3832 = vunpack.c.h.b16 %v3259
    %v3833 = vunpack.c.l.b16 %v3260
    %v3834 = vunpack.c.h.b16 %v3260
    %v3835 = vunpack.c.l.b16 %v3261
    %v3836 = vunpack.c.h.b16 %v3261
    %v3837 = vunpack.c.l.b16 %v3262
    %v3838 = vunpack.c.h.b16 %v3262
    %v3839 = vunpack.c.l.b16 %v3263
    %v3840 = vunpack.c.h.b16 %v3263
    %v3841 = vunpack.c.l.b16 %v3264
    %v3842 = vunpack.c.h.b16 %v3264
    %v3843 = vunpack.c.l.b16 %v3265
    %v3844 = vunpack.c.h.b16 %v3265
    %v3845 = vunpack.c.l.b16 %v3266
    %v3846 = vunpack.c.h.b16 %v3266
    %v3847 = vunpack.c.l.b16 %v3267
    %v3848 = vunpack.c.h.b16 %v3267
    %v3849 = vunpack.c.l.b16 %v3268
    %v3850 = vunpack.c.h.b16 %v3268
    %v3851 = vunpack.c.l.b16 %v3269
    %v3852 = vunpack.c.h.b16 %v3269
    %v3853 = vunpack.c.l.b16 %v3270
    %v3854 = vunpack.c.h.b16 %v3270
    %v3855 = vunpack.c.l.b16 %v3271
    %v3856 = vunpack.c.h.b16 %v3271
    %v3857 = vunpack.c.l.b16 %v3272
    %v3858 = vunpack.c.h.b16 %v3272
    %v3859 = vunpack.c.l.b16 %v3273
    %v3860 = vunpack.c.h.b16 %v3273
    %v3861 = vunpack.c.l.b16 %v3274
    %v3862 = vunpack.c.h.b16 %v3274
    %v3863 = vunpack.c.l.b16 %v3275
    %v3864 = vunpack.c.h.b16 %v3275
    %v3865 = vunpack.c.l.b16 %v3276
    %v3866 = vunpack.c.h.b16 %v3276
    %v3867 = vunpack.c.l.b16 %v3277
    %v3868 = vunpack.c.h.b16 %v3277
    %v3869 = vunpack.c.l.b16 %v3278
    %v3870 = vunpack.c.h.b16 %v3278
    %v3871 = vunpack.c.l.b16 %v3279
    %v3872 = vunpack.c.h.b16 %v3279
    %v3873 = vunpack.c.l.b16 %v3280
    %v3874 = vunpack.c.h.b16 %v3280
    %v3875 = vunpack.c.l.b16 %v3281
    %v3876 = vunpack.c.h.b16 %v3281
    %v3877 = vunpack.c.l.b16 %v3282
    %v3878 = vunpack.c.h.b16 %v3282
    %v3879 = vunpack.c.l.b16 %v3283
    %v3880 = vunpack.c.h.b16 %v3283
    %v3881 = vunpack.c.l.b16 %v3284
    %v3882 = vunpack.c.h.b16 %v3284
    %v3883 = vpack.c.b16 %v3503, %v3499
    %v3884 = vpack.c.b16 %v3504, %v3500
    %v3885 = vpack.c.b16 %v3505, %v3501
    %v3886 = vpack.c.b16 %v3506, %v3502
    %v3887 = vpack.c.b16 %v3511, %v3507
    %v3888 = vpack.c.b16 %v3512, %v3508
    %v3889 = vpack.c.b16 %v3513, %v3509
    %v3890 = vpack.c.b16 %v3514, %v3510
    %v3891 = vpack.c.b16 %v3519, %v3515
    %v3892 = vpack.c.b16 %v3520, %v3516
    %v3893 = vpack.c.b16 %v3521, %v3517
    %v3894 = vpack.c.b16 %v3522, %v3518
    %v3895 = vpack.c.b16 %v3527, %v3523
    %v3896 = vpack.c.b16 %v3528, %v3524
    %v3897 = vpack.c.b16 %v3529, %v3525
    %v3898 = vpack.c.b16 %v3530, %v3526
    %v3899 = vpack.c.b16 %v3535, %v3531
    %v3900 = vpack.c.b16 %v3536, %v3532
    %v3901 = vpack.c.b16 %v3537, %v3533
    %v3902 = vpack.c.b16 %v3538, %v3534
    %v3903 = vpack.c.b16 %v3543, %v3539
    %v3904 = vpack.c.b16 %v3544, %v3540
    %v3905 = vpack.c.b16 %v3545, %v3541
    %v3906 = vpack.c.b16 %v3546, %v3542
    %v3907 = vpack.c.b16 %v3551, %v3547
    %v3908 = vpack.c.b16 %v3552, %v3548
    %v3909 = vpack.c.b16 %v3553, %v3549
    %v3910 = vpack.c.b16 %v3554, %v3550
    %v3911 = vpack.c.b16 %v3559, %v3555
    %v3912 = vpack.c.b16 %v3560, %v3556
    %v3913 = vpack.c.b16 %v3561, %v3557
    %v3914 = vpack.c.b16 %v3562, %v3558
    %v3915 = vpack.c.b16 %v3567, %v3563
    %v3916 = vpack.c.b16 %v3568, %v3564
    %v3917 = vpack.c.b16 %v3569, %v3565
    %v3918 = vpack.c.b16 %v3570, %v3566
    %v3919 = vpack.c.b16 %v3575, %v3571
    %v3920 = vpack.c.b16 %v3576, %v3572
    %v3921 = vpack.c.b16 %v3577, %v3573
    %v3922 = vpack.c.b16 %v3578, %v3574
    %v3923 = vpack.c.b16 %v3583, %v3579
    %v3924 = vpack.c.b16 %v3584, %v3580
    %v3925 = vpack.c.b16 %v3585, %v3581
    %v3926 = vpack.c.b16 %v3586, %v3582
    %v3927 = vpack.c.b16 %v3591, %v3587
    %v3928 = vpack.c.b16 %v3592, %v3588
    %v3929 = vpack.c.b16 %v3593, %v3589
    %v3930 = vpack.c.b16 %v3594, %v3590
    %v3931 = vpack.c.b16 %v3599, %v3595
    %v3932 = vpack.c.b16 %v3600, %v3596
    %v3933 = vpack.c.b16 %v3601, %v3597
    %v3934 = vpack.c.b16 %v3602, %v3598
    %v3935 = vpack.c.b16 %v3607, %v3603
    %v3936 = vpack.c.b16 %v3608, %v3604
    %v3937 = vpack.c.b16 %v3609, %v3605
    %v3938 = vpack.c.b16 %v3610, %v3606
    %v3939 = vpack.c.b16 %v3615, %v3611
    %v3940 = vpack.c.b16 %v3616, %v3612
    %v3941 = vpack.c.b16 %v3617, %v3613
    %v3942 = vpack.c.b16 %v3618, %v3614
    %v3943 = vpack.c.b16 %v3623, %v3619
    %v3944 = vpack.c.b16 %v3624, %v3620
    %v3945 = vpack.c.b16 %v3625, %v3621
    %v3946 = vpack.c.b16 %v3626, %v3622
    %v3947 = vpack.c.b16 %v3631, %v3627
    %v3948 = vpack.c.b16 %v3632, %v3628
    %v3949 = vpack.c.b16 %v3633, %v3629
    %v3950 = vpack.c.b16 %v3634, %v3630
    %v3951 = vpack.c.b16 %v3639, %v3635
    %v3952 = vpack.c.b16 %v3640, %v3636
    %v3953 = vpack.c.b16 %v3641, %v3637
    %v3954 = vpack.c.b16 %v3642, %v3638
    %v3955 = vpack.c.b16 %v3647, %v3643
    %v3956 = vpack.c.b16 %v3648, %v3644
    %v3957 = vpack.c.b16 %v3649, %v3645
    %v3958 = vpack.c.b16 %v3650, %v3646
    %v3959 = vpack.c.b16 %v3655, %v3651
    %v3960 = vpack.c.b16 %v3656, %v3652
    %v3961 = vpack.c.b16 %v3657, %v3653
    %v3962 = vpack.c.b16 %v3658, %v3654
    %v3963 = vpack.c.b16 %v3663, %v3659
    %v3964 = vpack.c.b16 %v3664, %v3660
    %v3965 = vpack.c.b16 %v3665, %v3661
    %v3966 = vpack.c.b16 %v3666, %v3662
    %v3967 = vpack.c.b16 %v3671, %v3667
    %v3968 = vpack.c.b16 %v3672, %v3668
    %v3969 = vpack.c.b16 %v3673, %v3669
    %v3970 = vpack.c.b16 %v3674, %v3670
    %v3971 = vpack.c.b16 %v3679, %v3675
    %v3972 = vpack.c.b16 %v3680, %v3676
    %v3973 = vpack.c.b16 %v3681, %v3677
    %v3974 = vpack.c.b16 %v3682, %v3678
    %v3975 = vpack.c.b16 %v3687, %v3683
    %v3976 = vpack.c.b16 %v3688, %v3684
    %v3977 = vpack.c.b16 %v3689, %v3685
    %v3978 = vpack.c.b16 %v3690, %v3686
    %v3979 = vpack.c.b16 %v3695, %v3691
    %v3980 = vpack.c.b16 %v3696, %v3692
    %v3981 = vpack.c.b16 %v3697, %v3693
    %v3982 = vpack.c.b16 %v3698, %v3694
    %v3983 = vpack.c.b16 %v3703, %v3699
    %v3984 = vpack.c.b16 %v3704, %v3700
    %v3985 = vpack.c.b16 %v3705, %v3701
    %v3986 = vpack.c.b16 %v3706, %v3702
    %v3987 = vpack.c.b16 %v3711, %v3707
    %v3988 = vpack.c.b16 %v3712, %v3708
    %v3989 = vpack.c.b16 %v3713, %v3709
    %v3990 = vpack.c.b16 %v3714, %v3710
    %v3991 = vpack.c.b16 %v3719, %v3715
    %v3992 = vpack.c.b16 %v3720, %v3716
    %v3993 = vpack.c.b16 %v3721, %v3717
    %v3994 = vpack.c.b16 %v3722, %v3718
    %v3995 = vpack.c.b16 %v3727, %v3723
    %v3996 = vpack.c.b16 %v3728, %v3724
    %v3997 = vpack.c.b16 %v3729, %v3725
    %v3998 = vpack.c.b16 %v3730, %v3726
    %v3999 = vpack.c.b16 %v3735, %v3731
    %v4000 = vpack.c.b16 %v3736, %v3732
    %v4001 = vpack.c.b16 %v3737, %v3733
    %v4002 = vpack.c.b16 %v3738, %v3734
    %v4003 = vpack.c.b16 %v3743, %v3739
    %v4004 = vpack.c.b16 %v3744, %v3740
    %v4005 = vpack.c.b16 %v3745, %v3741
    %v4006 = vpack.c.b16 %v3746, %v3742
    %v4007 = vpack.c.b16 %v3751, %v3747
    %v4008 = vpack.c.b16 %v3752, %v3748
    %v4009 = vpack.c.b16 %v3753, %v3749
    %v4010 = vpack.c.b16 %v3754, %v3750
    %v4011 = vpack.c.b16 %v3759, %v3755
    %v4012 = vpack.c.b16 %v3760, %v3756
    %v4013 = vpack.c.b16 %v3761, %v3757
    %v4014 = vpack.c.b16 %v3762, %v3758
    %v4015 = vpack.c.b16 %v3767, %v3763
    %v4016 = vpack.c.b16 %v3768, %v3764
    %v4017 = vpack.c.b16 %v3769, %v3765
    %v4018 = vpack.c.b16 %v3770, %v3766
    %v4019 = vpack.c.b16 %v3775, %v3771
    %v4020 = vpack.c.b16 %v3776, %v3772
    %v4021 = vpack.c.b16 %v3777, %v3773
    %v4022 = vpack.c.b16 %v3778, %v3774
    %v4023 = vpack.c.b16 %v3783, %v3779
    %v4024 = vpack.c.b16 %v3784, %v3780
    %v4025 = vpack.c.b16 %v3785, %v3781
    %v4026 = vpack.c.b16 %v3786, %v3782
    %v4027 = vpack.c.b16 %v3791, %v3787
    %v4028 = vpack.c.b16 %v3792, %v3788
    %v4029 = vpack.c.b16 %v3793, %v3789
    %v4030 = vpack.c.b16 %v3794, %v3790
    %v4031 = vpack.c.b16 %v3799, %v3795
    %v4032 = vpack.c.b16 %v3800, %v3796
    %v4033 = vpack.c.b16 %v3801, %v3797
    %v4034 = vpack.c.b16 %v3802, %v3798
    %v4035 = vpack.c.b16 %v3807, %v3803
    %v4036 = vpack.c.b16 %v3808, %v3804
    %v4037 = vpack.c.b16 %v3809, %v3805
    %v4038 = vpack.c.b16 %v3810, %v3806
    %v4039 = vpack.c.b16 %v3815, %v3811
    %v4040 = vpack.c.b16 %v3816, %v3812
    %v4041 = vpack.c.b16 %v3817, %v3813
    %v4042 = vpack.c.b16 %v3818, %v3814
    %v4043 = vpack.c.b16 %v3823, %v3819
    %v4044 = vpack.c.b16 %v3824, %v3820
    %v4045 = vpack.c.b16 %v3825, %v3821
    %v4046 = vpack.c.b16 %v3826, %v3822
    %v4047 = vpack.c.b16 %v3831, %v3827
    %v4048 = vpack.c.b16 %v3832, %v3828
    %v4049 = vpack.c.b16 %v3833, %v3829
    %v4050 = vpack.c.b16 %v3834, %v3830
    %v4051 = vpack.c.b16 %v3839, %v3835
    %v4052 = vpack.c.b16 %v3840, %v3836
    %v4053 = vpack.c.b16 %v3841, %v3837
    %v4054 = vpack.c.b16 %v3842, %v3838
    %v4055 = vpack.c.b16 %v3847, %v3843
    %v4056 = vpack.c.b16 %v3848, %v3844
    %v4057 = vpack.c.b16 %v3849, %v3845
    %v4058 = vpack.c.b16 %v3850, %v3846
    %v4059 = vpack.c.b16 %v3855, %v3851
    %v4060 = vpack.c.b16 %v3856, %v3852
    %v4061 = vpack.c.b16 %v3857, %v3853
    %v4062 = vpack.c.b16 %v3858, %v3854
    %v4063 = vpack.c.b16 %v3863, %v3859
    %v4064 = vpack.c.b16 %v3864, %v3860
    %v4065 = vpack.c.b16 %v3865, %v3861
    %v4066 = vpack.c.b16 %v3866, %v3862
    %v4067 = vpack.c.b16 %v3871, %v3867
    %v4068 = vpack.c.b16 %v3872, %v3868
    %v4069 = vpack.c.b16 %v3873, %v3869
    %v4070 = vpack.c.b16 %v3874, %v3870
    %v4071 = vpack.c.b16 %v3879, %v3875
    %v4072 = vpack.c.b16 %v3880, %v3876
    %v4073 = vpack.c.b16 %v3881, %v3877
    %v4074 = vpack.c.b16 %v3882, %v3878
    %4267 = vmatprep.subr.bf16.mxu0 %v3884
    %4268 = vmatpush1.bf16.msra.mxu0 %v3883
    %4269 = vmatprep.subr.bf16.mxu0 %v3888
    %4270 = vmatpush1.bf16.msra.mxu0 %v3887
    %4271 = vmatprep.subr.bf16.mxu0 %v3892
    %4272 = vmatpush1.bf16.msra.mxu0 %v3891
    %4273 = vmatprep.subr.bf16.mxu0 %v3896
    %4274 = vmatpush1.bf16.msra.mxu0 %v3895
    %4275 = vmatprep.subr.bf16.mxu0 %v3900
    %4276 = vmatpush1.bf16.msra.mxu0 %v3899
    %4277 = vmatprep.subr.bf16.mxu0 %v3904
    %4278 = vmatpush1.bf16.msra.mxu0 %v3903
    %4279 = vmatprep.subr.bf16.mxu0 %v3908
    %4280 = vmatpush1.bf16.msra.mxu0 %v3907
    %4281 = vmatprep.subr.bf16.mxu0 %v3912
    %4282 = vmatpush1.bf16.msra.mxu0 %v3911
    %4283 = vmatprep.subr.bf16.mxu0 %v3916
    %4284 = vmatpush1.bf16.msra.mxu0 %v3915
    %4285 = vmatprep.subr.bf16.mxu0 %v3920
    %4286 = vmatpush1.bf16.msra.mxu0 %v3919
    %4287 = vmatprep.subr.bf16.mxu0 %v3924
    %4288 = vmatpush1.bf16.msra.mxu0 %v3923
    %4289 = vmatprep.subr.bf16.mxu0 %v3928
    %4290 = vmatpush1.bf16.msra.mxu0 %v3927
    %4291 = vmatprep.subr.bf16.mxu0 %v3932
    %4292 = vmatpush1.bf16.msra.mxu0 %v3931
    %4293 = vmatprep.subr.bf16.mxu0 %v3936
    %4294 = vmatpush1.bf16.msra.mxu0 %v3935
    %4295 = vmatprep.subr.bf16.mxu0 %v3940
    %4296 = vmatpush1.bf16.msra.mxu0 %v3939
    %4297 = vmatprep.subr.bf16.mxu0 %v3944
    %4298 = vmatpush1.bf16.msra.mxu0 %v3943
    %4299 = vmatprep.mubr.bf16.mxu0 %v3088
    %4300 = vmatmul.mubr.bf16.gmra.mrb[0].mxu0 %v3087
    %v4301 = vpop.f32.mrb[0].mxu0
    %v4302 = vadd.f32 %v3290, %v4301
    %v4303 = vpop.f32.mrb[0].mxu0
    %v4304 = vadd.f32 %v3294, %v4303
    %v4305 = vpop.f32.mrb[0].mxu0
    %v4306 = vpop.f32.mrb[0].mxu0
    %4307 = vdwg.mxu0
    %4308 = vmatprep.subr.bf16.mxu0 %v3948
    %4309 = vmatpush1.bf16.msra.mxu0 %v3947
    %4310 = vmatprep.subr.bf16.mxu0 %v3952
    %4311 = vmatpush1.bf16.msra.mxu0 %v3951
    %4312 = vmatprep.subr.bf16.mxu0 %v3956
    %4313 = vmatpush1.bf16.msra.mxu0 %v3955
    %4314 = vmatprep.subr.bf16.mxu0 %v3960
    %4315 = vmatpush1.bf16.msra.mxu0 %v3959
    %4316 = vmatprep.subr.bf16.mxu0 %v3964
    %4317 = vmatpush1.bf16.msra.mxu0 %v3963
    %4318 = vmatprep.subr.bf16.mxu0 %v3968
    %4319 = vmatpush1.bf16.msra.mxu0 %v3967
    %4320 = vmatprep.subr.bf16.mxu0 %v3972
    %4321 = vmatpush1.bf16.msra.mxu0 %v3971
    %4322 = vmatprep.subr.bf16.mxu0 %v3976
    %4323 = vmatpush1.bf16.msra.mxu0 %v3975
    %4324 = vmatprep.subr.bf16.mxu0 %v3980
    %4325 = vmatpush1.bf16.msra.mxu0 %v3979
    %4326 = vmatprep.subr.bf16.mxu0 %v3984
    %4327 = vmatpush1.bf16.msra.mxu0 %v3983
    %4328 = vmatprep.subr.bf16.mxu0 %v3988
    %4329 = vmatpush1.bf16.msra.mxu0 %v3987
    %4330 = vmatprep.subr.bf16.mxu0 %v3992
    %4331 = vmatpush1.bf16.msra.mxu0 %v3991
    %4332 = vmatprep.subr.bf16.mxu0 %v3996
    %4333 = vmatpush1.bf16.msra.mxu0 %v3995
    %4334 = vmatprep.subr.bf16.mxu0 %v4000
    %4335 = vmatpush1.bf16.msra.mxu0 %v3999
    %4336 = vmatprep.subr.bf16.mxu0 %v4004
    %4337 = vmatpush1.bf16.msra.mxu0 %v4003
    %4338 = vmatprep.subr.bf16.mxu0 %v4008
    %4339 = vmatpush1.bf16.msra.mxu0 %v4007
    %4340 = vmatprep.mubr.bf16.mxu0 %v3090
    %4341 = vmatmul.mubr.bf16.gmra.mrb[0].mxu0 %v3089
    %v4342 = vpop.f32.mrb[0].mxu0
    %v4343 = vadd.f32 %v4302, %v4342
    %v4344 = vpop.f32.mrb[0].mxu0
    %v4345 = vadd.f32 %v4304, %v4344
    %v4346 = vpop.f32.mrb[0].mxu0
    %v4347 = vpop.f32.mrb[0].mxu0
    %4348 = vdwg.mxu0
    %4349 = vmatprep.subr.bf16.mxu0 %v4012
    %4350 = vmatpush1.bf16.msra.mxu0 %v4011
    %4351 = vmatprep.subr.bf16.mxu0 %v4016
    %4352 = vmatpush1.bf16.msra.mxu0 %v4015
    %4353 = vmatprep.subr.bf16.mxu0 %v4020
    %4354 = vmatpush1.bf16.msra.mxu0 %v4019
    %4355 = vmatprep.subr.bf16.mxu0 %v4024
    %4356 = vmatpush1.bf16.msra.mxu0 %v4023
    %4357 = vmatprep.subr.bf16.mxu0 %v4028
    %4358 = vmatpush1.bf16.msra.mxu0 %v4027
    %4359 = vmatprep.subr.bf16.mxu0 %v4032
    %4360 = vmatpush1.bf16.msra.mxu0 %v4031
    %4361 = vmatprep.subr.bf16.mxu0 %v4036
    %4362 = vmatpush1.bf16.msra.mxu0 %v4035
    %4363 = vmatprep.subr.bf16.mxu0 %v4040
    %4364 = vmatpush1.bf16.msra.mxu0 %v4039
    %4365 = vmatprep.subr.bf16.mxu0 %v4044
    %4366 = vmatpush1.bf16.msra.mxu0 %v4043
    %4367 = vmatprep.subr.bf16.mxu0 %v4048
    %4368 = vmatpush1.bf16.msra.mxu0 %v4047
    %4369 = vmatprep.subr.bf16.mxu0 %v4052
    %4370 = vmatpush1.bf16.msra.mxu0 %v4051
    %4371 = vmatprep.subr.bf16.mxu0 %v4056
    %4372 = vmatpush1.bf16.msra.mxu0 %v4055
    %4373 = vmatprep.subr.bf16.mxu0 %v4060
    %4374 = vmatpush1.bf16.msra.mxu0 %v4059
    %4375 = vmatprep.subr.bf16.mxu0 %v4064
    %4376 = vmatpush1.bf16.msra.mxu0 %v4063
    %4377 = vmatprep.subr.bf16.mxu0 %v4068
    %4378 = vmatpush1.bf16.msra.mxu0 %v4067
    %4379 = vmatprep.subr.bf16.mxu0 %v4072
    %4380 = vmatpush1.bf16.msra.mxu0 %v4071
    %4381 = vmatprep.mubr.bf16.mxu0 %v3092
    %4382 = vmatmul.mubr.bf16.gmra.mrb[0].mxu0 %v3091
    %v4383 = vpop.f32.mrb[0].mxu0
    %v4384 = vadd.f32 %v4343, %v4383
    %v4385 = vpop.f32.mrb[0].mxu0
    %v4386 = vadd.f32 %v4345, %v4385
    %v4387 = vpop.f32.mrb[0].mxu0
    %v4388 = vpop.f32.mrb[0].mxu0
    %4389 = vdwg.mxu0
    %4390 = vmatprep.subr.bf16.mxu0 %v3886
    %4391 = vmatpush1.bf16.msra.mxu0 %v3885
    %4392 = vmatprep.subr.bf16.mxu0 %v3890
    %4393 = vmatpush1.bf16.msra.mxu0 %v3889
    %4394 = vmatprep.subr.bf16.mxu0 %v3894
    %4395 = vmatpush1.bf16.msra.mxu0 %v3893
    %4396 = vmatprep.subr.bf16.mxu0 %v3898
    %4397 = vmatpush1.bf16.msra.mxu0 %v3897
    %4398 = vmatprep.subr.bf16.mxu0 %v3902
    %4399 = vmatpush1.bf16.msra.mxu0 %v3901
    %4400 = vmatprep.subr.bf16.mxu0 %v3906
    %4401 = vmatpush1.bf16.msra.mxu0 %v3905
    %4402 = vmatprep.subr.bf16.mxu0 %v3910
    %4403 = vmatpush1.bf16.msra.mxu0 %v3909
    %4404 = vmatprep.subr.bf16.mxu0 %v3914
    %4405 = vmatpush1.bf16.msra.mxu0 %v3913
    %4406 = vmatprep.subr.bf16.mxu0 %v3918
    %4407 = vmatpush1.bf16.msra.mxu0 %v3917
    %4408 = vmatprep.subr.bf16.mxu0 %v3922
    %4409 = vmatpush1.bf16.msra.mxu0 %v3921
    %4410 = vmatprep.subr.bf16.mxu0 %v3926
    %4411 = vmatpush1.bf16.msra.mxu0 %v3925
    %4412 = vmatprep.subr.bf16.mxu0 %v3930
    %4413 = vmatpush1.bf16.msra.mxu0 %v3929
    %4414 = vmatprep.subr.bf16.mxu0 %v3934
    %4415 = vmatpush1.bf16.msra.mxu0 %v3933
    %4416 = vmatprep.subr.bf16.mxu0 %v3938
    %4417 = vmatpush1.bf16.msra.mxu0 %v3937
    %4418 = vmatprep.subr.bf16.mxu0 %v3942
    %4419 = vmatpush1.bf16.msra.mxu0 %v3941
    %4420 = vmatprep.subr.bf16.mxu0 %v3946
    %4421 = vmatpush1.bf16.msra.mxu0 %v3945
    %4422 = vmatprep.mubr.bf16.mxu0 %v3088
    %4423 = vmatmul.mubr.bf16.gmra.mrb[0].mxu0 %v3087
    %v4424 = vpop.f32.mrb[0].mxu0
    %v4425 = vadd.f32 %v3298, %v4424
    %v4426 = vpop.f32.mrb[0].mxu0
    %v4427 = vadd.f32 %v3302, %v4426
    %v4428 = vpop.f32.mrb[0].mxu0
    %v4429 = vpop.f32.mrb[0].mxu0
    %4430 = vdwg.mxu0
    %4431 = vmatprep.subr.bf16.mxu0 %v3950
    %4432 = vmatpush1.bf16.msra.mxu0 %v3949
    %4433 = vmatprep.subr.bf16.mxu0 %v3954
    %4434 = vmatpush1.bf16.msra.mxu0 %v3953
    %4435 = vmatprep.subr.bf16.mxu0 %v3958
    %4436 = vmatpush1.bf16.msra.mxu0 %v3957
    %4437 = vmatprep.subr.bf16.mxu0 %v3962
    %4438 = vmatpush1.bf16.msra.mxu0 %v3961
    %4439 = vmatprep.subr.bf16.mxu0 %v3966
    %4440 = vmatpush1.bf16.msra.mxu0 %v3965
    %4441 = vmatprep.subr.bf16.mxu0 %v3970
    %4442 = vmatpush1.bf16.msra.mxu0 %v3969
    %4443 = vmatprep.subr.bf16.mxu0 %v3974
    %4444 = vmatpush1.bf16.msra.mxu0 %v3973
    %4445 = vmatprep.subr.bf16.mxu0 %v3978
    %4446 = vmatpush1.bf16.msra.mxu0 %v3977
    %4447 = vmatprep.subr.bf16.mxu0 %v3982
    %4448 = vmatpush1.bf16.msra.mxu0 %v3981
    %4449 = vmatprep.subr.bf16.mxu0 %v3986
    %4450 = vmatpush1.bf16.msra.mxu0 %v3985
    %4451 = vmatprep.subr.bf16.mxu0 %v3990
    %4452 = vmatpush1.bf16.msra.mxu0 %v3989
    %4453 = vmatprep.subr.bf16.mxu0 %v3994
    %4454 = vmatpush1.bf16.msra.mxu0 %v3993
    %4455 = vmatprep.subr.bf16.mxu0 %v3998
    %4456 = vmatpush1.bf16.msra.mxu0 %v3997
    %4457 = vmatprep.subr.bf16.mxu0 %v4002
    %4458 = vmatpush1.bf16.msra.mxu0 %v4001
    %4459 = vmatprep.subr.bf16.mxu0 %v4006
    %4460 = vmatpush1.bf16.msra.mxu0 %v4005
    %4461 = vmatprep.subr.bf16.mxu0 %v4010
    %4462 = vmatpush1.bf16.msra.mxu0 %v4009
    %4463 = vmatprep.mubr.bf16.mxu0 %v3090
    %4464 = vmatmul.mubr.bf16.gmra.mrb[0].mxu0 %v3089
    %v4465 = vpop.f32.mrb[0].mxu0
    %v4466 = vadd.f32 %v4425, %v4465
    %v4467 = vpop.f32.mrb[0].mxu0
    %v4468 = vadd.f32 %v4427, %v4467
    %v4469 = vpop.f32.mrb[0].mxu0
    %v4470 = vpop.f32.mrb[0].mxu0
    %4471 = vdwg.mxu0
    %4472 = vmatprep.subr.bf16.mxu0 %v4014
    %4473 = vmatpush1.bf16.msra.mxu0 %v4013
    %4474 = vmatprep.subr.bf16.mxu0 %v4018
    %4475 = vmatpush1.bf16.msra.mxu0 %v4017
    %4476 = vmatprep.subr.bf16.mxu0 %v4022
    %4477 = vmatpush1.bf16.msra.mxu0 %v4021
    %4478 = vmatprep.subr.bf16.mxu0 %v4026
    %4479 = vmatpush1.bf16.msra.mxu0 %v4025
    %4480 = vmatprep.subr.bf16.mxu0 %v4030
    %4481 = vmatpush1.bf16.msra.mxu0 %v4029
    %4482 = vmatprep.subr.bf16.mxu0 %v4034
    %4483 = vmatpush1.bf16.msra.mxu0 %v4033
    %4484 = vmatprep.subr.bf16.mxu0 %v4038
    %4485 = vmatpush1.bf16.msra.mxu0 %v4037
    %4486 = vmatprep.subr.bf16.mxu0 %v4042
    %4487 = vmatpush1.bf16.msra.mxu0 %v4041
    %4488 = vmatprep.subr.bf16.mxu0 %v4046
    %4489 = vmatpush1.bf16.msra.mxu0 %v4045
    %4490 = vmatprep.subr.bf16.mxu0 %v4050
    %4491 = vmatpush1.bf16.msra.mxu0 %v4049
    %4492 = vmatprep.subr.bf16.mxu0 %v4054
    %4493 = vmatpush1.bf16.msra.mxu0 %v4053
    %4494 = vmatprep.subr.bf16.mxu0 %v4058
    %4495 = vmatpush1.bf16.msra.mxu0 %v4057
    %4496 = vmatprep.subr.bf16.mxu0 %v4062
    %4497 = vmatpush1.bf16.msra.mxu0 %v4061
    %4498 = vmatprep.subr.bf16.mxu0 %v4066
    %4499 = vmatpush1.bf16.msra.mxu0 %v4065
    %4500 = vmatprep.subr.bf16.mxu0 %v4070
    %4501 = vmatpush1.bf16.msra.mxu0 %v4069
    %4502 = vmatprep.subr.bf16.mxu0 %v4074
    %4503 = vmatpush1.bf16.msra.mxu0 %v4073
    %4504 = vmatprep.mubr.bf16.mxu0 %v3092
    %4505 = vmatmul.mubr.bf16.gmra.mrb[0].mxu0 %v3091
    %v4506 = vpop.f32.mrb[0].mxu0
    %v4507 = vadd.f32 %v4466, %v4506
    %v4508 = vpop.f32.mrb[0].mxu0
    %v4509 = vadd.f32 %v4468, %v4508
    %v4510 = vpop.f32.mrb[0].mxu0
    %v4511 = vpop.f32.mrb[0].mxu0
    %4512 = vdwg.mxu0
    %v4513 = vmax.f32 %v4384, 0.0
    %v4514 = vmax.f32 %v4386, 0.0
    %v4515 = vmax.f32 %v4507, 0.0
    %v4516 = vmax.f32 %v4509, 0.0
    %v4517 = vpack.c.bf16 %v4513, %v4513
    %v4518 = vpack.c.bf16 %v4514, %v4514
    %v4519 = vpack.c.bf16 %v4515, %v4515
    %v4520 = vpack.c.bf16 %v4516, %v4516
    %v4521 = vld [vmem:[#allocation13] sm:$0xf]
    %v4522 = vld [vmem:[#allocation13 + $0x4] sm:$0xf]
    %v4523 = vld [vmem:[#allocation13 + $0x8] sm:$0xf]
    %v4524 = vld [vmem:[#allocation13 + $0xc] sm:$0xf]
    %v4525 = vld [vmem:[#allocation13 + $0x10] sm:$0xf]
    %v4526 = vld [vmem:[#allocation13 + $0x14] sm:$0xf]
    %v4527 = vld [vmem:[#allocation13 + $0x18] sm:$0xf]
    %v4528 = vld [vmem:[#allocation13 + $0x1c] sm:$0xf]
    %v4529 = vld [vmem:[#allocation13 + $0x20] sm:$0xf]
    %v4530 = vld [vmem:[#allocation13 + $0x24] sm:$0xf]
    %v4531 = vld [vmem:[#allocation13 + $0x28] sm:$0xf]
    %v4532 = vld [vmem:[#allocation13 + $0x2c] sm:$0xf]
    %v4533 = vld [vmem:[#allocation13 + $0x30] sm:$0xf]
    %v4534 = vld [vmem:[#allocation13 + $0x34] sm:$0xf]
    %v4535 = vld [vmem:[#allocation13 + $0x38] sm:$0xf]
    %v4536 = vld [vmem:[#allocation13 + $0x3c] sm:$0xf]
    %v4537 = vld [vmem:[#allocation13 + $0x40] sm:$0xf]
    %v4538 = vld [vmem:[#allocation13 + $0x44] sm:$0xf]
    %v4539 = vld [vmem:[#allocation13 + $0x48] sm:$0xf]
    %v4540 = vld [vmem:[#allocation13 + $0x4c] sm:$0xf]
    %v4541 = vld [vmem:[#allocation13 + $0x50] sm:$0xf]
    %v4542 = vld [vmem:[#allocation13 + $0x54] sm:$0xf]
    %v4543 = vld [vmem:[#allocation13 + $0x58] sm:$0xf]
    %v4544 = vld [vmem:[#allocation13 + $0x5c] sm:$0xf]
    %v4545 = vld [vmem:[#allocation13 + $0x60] sm:$0xf]
    %v4546 = vld [vmem:[#allocation13 + $0x64] sm:$0xf]
    %v4547 = vld [vmem:[#allocation13 + $0x68] sm:$0xf]
    %v4548 = vld [vmem:[#allocation13 + $0x6c] sm:$0xf]
    %v4549 = vld [vmem:[#allocation13 + $0x70] sm:$0xf]
    %v4550 = vld [vmem:[#allocation13 + $0x74] sm:$0xf]
    %v4551 = vld [vmem:[#allocation13 + $0x78] sm:$0xf]
    %v4552 = vld [vmem:[#allocation13 + $0x7c] sm:$0xf]
    %v4553 = vld [vmem:[#allocation13 + $0x80] sm:$0xf]
    %v4554 = vld [vmem:[#allocation13 + $0x84] sm:$0xf]
    %v4555 = vld [vmem:[#allocation13 + $0x88] sm:$0xf]
    %v4556 = vld [vmem:[#allocation13 + $0x8c] sm:$0xf]
    %v4557 = vld [vmem:[#allocation13 + $0x90] sm:$0xf]
    %v4558 = vld [vmem:[#allocation13 + $0x94] sm:$0xf]
    %v4559 = vld [vmem:[#allocation13 + $0x98] sm:$0xf]
    %v4560 = vld [vmem:[#allocation13 + $0x9c] sm:$0xf]
    %v4561 = vld [vmem:[#allocation13 + $0xa0] sm:$0xf]
    %v4562 = vld [vmem:[#allocation13 + $0xa4] sm:$0xf]
    %v4563 = vld [vmem:[#allocation13 + $0xa8] sm:$0xf]
    %v4564 = vld [vmem:[#allocation13 + $0xac] sm:$0xf]
    %v4565 = vld [vmem:[#allocation13 + $0xb0] sm:$0xf]
    %v4566 = vld [vmem:[#allocation13 + $0xb4] sm:$0xf]
    %v4567 = vld [vmem:[#allocation13 + $0xb8] sm:$0xf]
    %v4568 = vld [vmem:[#allocation13 + $0xbc] sm:$0xf]
    %v4569 = vld [vmem:[#allocation13 + $0xc0] sm:$0xf]
    %v4570 = vld [vmem:[#allocation13 + $0xc4] sm:$0xf]
    %v4571 = vld [vmem:[#allocation13 + $0xc8] sm:$0xf]
    %v4572 = vld [vmem:[#allocation13 + $0xcc] sm:$0xf]
    %v4573 = vld [vmem:[#allocation13 + $0xd0] sm:$0xf]
    %v4574 = vld [vmem:[#allocation13 + $0xd4] sm:$0xf]
    %v4575 = vld [vmem:[#allocation13 + $0xd8] sm:$0xf]
    %v4576 = vld [vmem:[#allocation13 + $0xdc] sm:$0xf]
    %v4577 = vld [vmem:[#allocation13 + $0xe0] sm:$0xf]
    %v4578 = vld [vmem:[#allocation13 + $0xe4] sm:$0xf]
    %v4579 = vld [vmem:[#allocation13 + $0xe8] sm:$0xf]
    %v4580 = vld [vmem:[#allocation13 + $0xec] sm:$0xf]
    %v4581 = vld [vmem:[#allocation13 + $0xf0] sm:$0xf]
    %v4582 = vld [vmem:[#allocation13 + $0xf4] sm:$0xf]
    %v4583 = vld [vmem:[#allocation13 + $0xf8] sm:$0xf]
    %v4584 = vld [vmem:[#allocation13 + $0xfc] sm:$0xf]
    %v4585 = vld [vmem:[#allocation14] sm:$0x1]
    %v4587 = vlaneseq
    %v4588 = vshrl.u32 %v4587, 7
    %v4589 = vsub.s32 0, %v4588
    %v4590 = vrot.slane %v4585, %v4589
    %v4656 = vunpack.c.l.b16 %v4521
    %v4657 = vunpack.c.l.b16 %v4522
    %v4658 = vunpack.c.l.b16 %v4523
    %v4659 = vunpack.c.l.b16 %v4524
    %v4660 = vunpack.c.l.b16 %v4525
    %v4661 = vunpack.c.l.b16 %v4526
    %v4662 = vunpack.c.l.b16 %v4527
    %v4663 = vunpack.c.l.b16 %v4528
    %v4664 = vunpack.c.l.b16 %v4529
    %v4665 = vunpack.c.l.b16 %v4530
    %v4666 = vunpack.c.l.b16 %v4531
    %v4667 = vunpack.c.l.b16 %v4532
    %v4668 = vunpack.c.l.b16 %v4533
    %v4669 = vunpack.c.l.b16 %v4534
    %v4670 = vunpack.c.l.b16 %v4535
    %v4671 = vunpack.c.l.b16 %v4536
    %v4672 = vunpack.c.l.b16 %v4537
    %v4673 = vunpack.c.l.b16 %v4538
    %v4674 = vunpack.c.l.b16 %v4539
    %v4675 = vunpack.c.l.b16 %v4540
    %v4676 = vunpack.c.l.b16 %v4541
    %v4677 = vunpack.c.l.b16 %v4542
    %v4678 = vunpack.c.l.b16 %v4543
    %v4679 = vunpack.c.l.b16 %v4544
    %v4680 = vunpack.c.l.b16 %v4545
    %v4681 = vunpack.c.l.b16 %v4546
    %v4682 = vunpack.c.l.b16 %v4547
    %v4683 = vunpack.c.l.b16 %v4548
    %v4684 = vunpack.c.l.b16 %v4549
    %v4685 = vunpack.c.l.b16 %v4550
    %v4686 = vunpack.c.l.b16 %v4551
    %v4687 = vunpack.c.l.b16 %v4552
    %v4688 = vunpack.c.l.b16 %v4553
    %v4689 = vunpack.c.l.b16 %v4554
    %v4690 = vunpack.c.l.b16 %v4555
    %v4691 = vunpack.c.l.b16 %v4556
    %v4692 = vunpack.c.l.b16 %v4557
    %v4693 = vunpack.c.l.b16 %v4558
    %v4694 = vunpack.c.l.b16 %v4559
    %v4695 = vunpack.c.l.b16 %v4560
    %v4696 = vunpack.c.l.b16 %v4561
    %v4697 = vunpack.c.l.b16 %v4562
    %v4698 = vunpack.c.l.b16 %v4563
    %v4699 = vunpack.c.l.b16 %v4564
    %v4700 = vunpack.c.l.b16 %v4565
    %v4701 = vunpack.c.l.b16 %v4566
    %v4702 = vunpack.c.l.b16 %v4567
    %v4703 = vunpack.c.l.b16 %v4568
    %v4704 = vunpack.c.l.b16 %v4569
    %v4705 = vunpack.c.l.b16 %v4570
    %v4706 = vunpack.c.l.b16 %v4571
    %v4707 = vunpack.c.l.b16 %v4572
    %v4708 = vunpack.c.l.b16 %v4573
    %v4709 = vunpack.c.l.b16 %v4574
    %v4710 = vunpack.c.l.b16 %v4575
    %v4711 = vunpack.c.l.b16 %v4576
    %v4712 = vunpack.c.l.b16 %v4577
    %v4713 = vunpack.c.l.b16 %v4578
    %v4714 = vunpack.c.l.b16 %v4579
    %v4715 = vunpack.c.l.b16 %v4580
    %v4716 = vunpack.c.l.b16 %v4581
    %v4717 = vunpack.c.l.b16 %v4582
    %v4718 = vunpack.c.l.b16 %v4583
    %v4719 = vunpack.c.l.b16 %v4584
    %v4720 = vpack.c.b16 %v4657, %v4656
    %v4721 = vpack.c.b16 %v4659, %v4658
    %v4722 = vpack.c.b16 %v4661, %v4660
    %v4723 = vpack.c.b16 %v4663, %v4662
    %v4724 = vpack.c.b16 %v4665, %v4664
    %v4725 = vpack.c.b16 %v4667, %v4666
    %v4726 = vpack.c.b16 %v4669, %v4668
    %v4727 = vpack.c.b16 %v4671, %v4670
    %v4728 = vpack.c.b16 %v4673, %v4672
    %v4729 = vpack.c.b16 %v4675, %v4674
    %v4730 = vpack.c.b16 %v4677, %v4676
    %v4731 = vpack.c.b16 %v4679, %v4678
    %v4732 = vpack.c.b16 %v4681, %v4680
    %v4733 = vpack.c.b16 %v4683, %v4682
    %v4734 = vpack.c.b16 %v4685, %v4684
    %v4735 = vpack.c.b16 %v4687, %v4686
    %v4736 = vpack.c.b16 %v4689, %v4688
    %v4737 = vpack.c.b16 %v4691, %v4690
    %v4738 = vpack.c.b16 %v4693, %v4692
    %v4739 = vpack.c.b16 %v4695, %v4694
    %v4740 = vpack.c.b16 %v4697, %v4696
    %v4741 = vpack.c.b16 %v4699, %v4698
    %v4742 = vpack.c.b16 %v4701, %v4700
    %v4743 = vpack.c.b16 %v4703, %v4702
    %v4744 = vpack.c.b16 %v4705, %v4704
    %v4745 = vpack.c.b16 %v4707, %v4706
    %v4746 = vpack.c.b16 %v4709, %v4708
    %v4747 = vpack.c.b16 %v4711, %v4710
    %v4748 = vpack.c.b16 %v4713, %v4712
    %v4749 = vpack.c.b16 %v4715, %v4714
    %v4750 = vpack.c.b16 %v4717, %v4716
    %v4751 = vpack.c.b16 %v4719, %v4718
    %4784 = vmatprep.subr.bf16.mxu0 0
    %4785 = vmatpush1.bf16.msra.mxu0 %v4720
    %4786 = vmatprep.subr.bf16.mxu0 0
    %4787 = vmatpush1.bf16.msra.mxu0 %v4721
    %4788 = vmatprep.subr.bf16.mxu0 0
    %4789 = vmatpush1.bf16.msra.mxu0 %v4722
    %4790 = vmatprep.subr.bf16.mxu0 0
    %4791 = vmatpush1.bf16.msra.mxu0 %v4723
    %4792 = vmatprep.subr.bf16.mxu0 0
    %4793 = vmatpush1.bf16.msra.mxu0 %v4724
    %4794 = vmatprep.subr.bf16.mxu0 0
    %4795 = vmatpush1.bf16.msra.mxu0 %v4725
    %4796 = vmatprep.subr.bf16.mxu0 0
    %4797 = vmatpush1.bf16.msra.mxu0 %v4726
    %4798 = vmatprep.subr.bf16.mxu0 0
    %4799 = vmatpush1.bf16.msra.mxu0 %v4727
    %4800 = vmatprep.subr.bf16.mxu0 0
    %4801 = vmatpush1.bf16.msra.mxu0 %v4728
    %4802 = vmatprep.subr.bf16.mxu0 0
    %4803 = vmatpush1.bf16.msra.mxu0 %v4729
    %4804 = vmatprep.subr.bf16.mxu0 0
    %4805 = vmatpush1.bf16.msra.mxu0 %v4730
    %4806 = vmatprep.subr.bf16.mxu0 0
    %4807 = vmatpush1.bf16.msra.mxu0 %v4731
    %4808 = vmatprep.subr.bf16.mxu0 0
    %4809 = vmatpush1.bf16.msra.mxu0 %v4732
    %4810 = vmatprep.subr.bf16.mxu0 0
    %4811 = vmatpush1.bf16.msra.mxu0 %v4733
    %4812 = vmatprep.subr.bf16.mxu0 0
    %4813 = vmatpush1.bf16.msra.mxu0 %v4734
    %4814 = vmatprep.subr.bf16.mxu0 0
    %4815 = vmatpush1.bf16.msra.mxu0 %v4735
    %4816 = vmatprep.mubr.bf16.mxu0 %v4518
    %4817 = vmatmul.mubr.bf16.gmra.mrb[0].mxu0 %v4517
    %v4818 = vpop.f32.mrb[0].mxu0
    %v4819 = vadd.f32 %v4590, %v4818
    %v4820 = vpop.f32.mrb[0].mxu0
    %v4821 = vpop.f32.mrb[0].mxu0
    %v4822 = vpop.f32.mrb[0].mxu0
    %4823 = vdwg.mxu0
    %4824 = vmatprep.subr.bf16.mxu0 0
    %4825 = vmatpush1.bf16.msra.mxu0 %v4736
    %4826 = vmatprep.subr.bf16.mxu0 0
    %4827 = vmatpush1.bf16.msra.mxu0 %v4737
    %4828 = vmatprep.subr.bf16.mxu0 0
    %4829 = vmatpush1.bf16.msra.mxu0 %v4738
    %4830 = vmatprep.subr.bf16.mxu0 0
    %4831 = vmatpush1.bf16.msra.mxu0 %v4739
    %4832 = vmatprep.subr.bf16.mxu0 0
    %4833 = vmatpush1.bf16.msra.mxu0 %v4740
    %4834 = vmatprep.subr.bf16.mxu0 0
    %4835 = vmatpush1.bf16.msra.mxu0 %v4741
    %4836 = vmatprep.subr.bf16.mxu0 0
    %4837 = vmatpush1.bf16.msra.mxu0 %v4742
    %4838 = vmatprep.subr.bf16.mxu0 0
    %4839 = vmatpush1.bf16.msra.mxu0 %v4743
    %4840 = vmatprep.subr.bf16.mxu0 0
    %4841 = vmatpush1.bf16.msra.mxu0 %v4744
    %4842 = vmatprep.subr.bf16.mxu0 0
    %4843 = vmatpush1.bf16.msra.mxu0 %v4745
    %4844 = vmatprep.subr.bf16.mxu0 0
    %4845 = vmatpush1.bf16.msra.mxu0 %v4746
    %4846 = vmatprep.subr.bf16.mxu0 0
    %4847 = vmatpush1.bf16.msra.mxu0 %v4747
    %4848 = vmatprep.subr.bf16.mxu0 0
    %4849 = vmatpush1.bf16.msra.mxu0 %v4748
    %4850 = vmatprep.subr.bf16.mxu0 0
    %4851 = vmatpush1.bf16.msra.mxu0 %v4749
    %4852 = vmatprep.subr.bf16.mxu0 0
    %4853 = vmatpush1.bf16.msra.mxu0 %v4750
    %4854 = vmatprep.subr.bf16.mxu0 0
    %4855 = vmatpush1.bf16.msra.mxu0 %v4751
    %4856 = vmatprep.mubr.bf16.mxu0 %v4520
    %4857 = vmatmul.mubr.bf16.gmra.mrb[0].mxu0 %v4519
    %v4858 = vpop.f32.mrb[0].mxu0
    %v4859 = vadd.f32 %v4819, %v4858
    %v4860 = vpop.f32.mrb[0].mxu0
    %v4861 = vpop.f32.mrb[0].mxu0
    %v4862 = vpop.f32.mrb[0].mxu0
    %4863 = vdwg.mxu0
    %v4864 = vmax.f32 %v4859, 0.0
    %v4865 = vpack.c.bf16 %v4864, %v4864
    %v4866 = vld [vmem:[#allocation16] sm:$0xf]
    %v4867 = vld [vmem:[#allocation16 + $0x4] sm:$0xf]
    %v4868 = vld [vmem:[#allocation16 + $0x8] sm:$0xf]
    %v4869 = vld [vmem:[#allocation16 + $0xc] sm:$0xf]
    %v4870 = vld [vmem:[#allocation16 + $0x10] sm:$0xf]
    %v4871 = vld [vmem:[#allocation16 + $0x14] sm:$0xf]
    %v4872 = vld [vmem:[#allocation16 + $0x18] sm:$0xf]
    %v4873 = vld [vmem:[#allocation16 + $0x1c] sm:$0xf]
    %v4874 = vld [vmem:[#allocation16 + $0x20] sm:$0xf]
    %v4875 = vld [vmem:[#allocation16 + $0x24] sm:$0xf]
    %v4876 = vld [vmem:[#allocation16 + $0x28] sm:$0xf]
    %v4877 = vld [vmem:[#allocation16 + $0x2c] sm:$0xf]
    %v4878 = vld [vmem:[#allocation16 + $0x30] sm:$0xf]
    %v4879 = vld [vmem:[#allocation16 + $0x34] sm:$0xf]
    %v4880 = vld [vmem:[#allocation16 + $0x38] sm:$0xf]
    %v4881 = vld [vmem:[#allocation16 + $0x3c] sm:$0xf]
    %v4882 = vld [vmem:[#allocation17] sm:$0x1]
    %v4884 = vlaneseq
    %v4885 = vshrl.u32 %v4884, 7
    %v4886 = vsub.s32 0, %v4885
    %v4887 = vrot.slane %v4882, %v4886
    %v4905 = vunpack.c.l.b16 %v4866
    %v4906 = vunpack.c.l.b16 %v4867
    %v4907 = vunpack.c.l.b16 %v4868
    %v4908 = vunpack.c.l.b16 %v4869
    %v4909 = vunpack.c.l.b16 %v4870
    %v4910 = vunpack.c.l.b16 %v4871
    %v4911 = vunpack.c.l.b16 %v4872
    %v4912 = vunpack.c.l.b16 %v4873
    %v4913 = vunpack.c.l.b16 %v4874
    %v4914 = vunpack.c.l.b16 %v4875
    %v4915 = vunpack.c.l.b16 %v4876
    %v4916 = vunpack.c.l.b16 %v4877
    %v4917 = vunpack.c.l.b16 %v4878
    %v4918 = vunpack.c.l.b16 %v4879
    %v4919 = vunpack.c.l.b16 %v4880
    %v4920 = vunpack.c.l.b16 %v4881
    %v4921 = vpack.c.b16 %v4906, %v4905
    %v4922 = vpack.c.b16 %v4908, %v4907
    %v4923 = vpack.c.b16 %v4910, %v4909
    %v4924 = vpack.c.b16 %v4912, %v4911
    %v4925 = vpack.c.b16 %v4914, %v4913
    %v4926 = vpack.c.b16 %v4916, %v4915
    %v4927 = vpack.c.b16 %v4918, %v4917
    %v4928 = vpack.c.b16 %v4920, %v4919
    %4937 = vmatprep.subr.bf16.mxu0 0
    %4938 = vmatpush1.bf16.msra.mxu0 %v4921
    %4939 = vmatprep.subr.bf16.mxu0 0
    %4940 = vmatpush1.bf16.msra.mxu0 %v4922
    %4941 = vmatprep.subr.bf16.mxu0 0
    %4942 = vmatpush1.bf16.msra.mxu0 %v4923
    %4943 = vmatprep.subr.bf16.mxu0 0
    %4944 = vmatpush1.bf16.msra.mxu0 %v4924
    %4945 = vmatprep.subr.bf16.mxu0 0
    %4946 = vmatpush1.bf16.msra.mxu0 %v4925
    %4947 = vmatprep.subr.bf16.mxu0 0
    %4948 = vmatpush1.bf16.msra.mxu0 %v4926
    %4949 = vmatprep.subr.bf16.mxu0 0
    %4950 = vmatpush1.bf16.msra.mxu0 %v4927
    %4951 = vmatprep.subr.bf16.mxu0 0
    %4952 = vmatpush1.bf16.msra.mxu0 %v4928
    %4953 = vmatprep.subr.bf16.mxu0 0
    %4954 = vmatpush1.bf16.msra.mxu0 0
    %4955 = vmatprep.subr.bf16.mxu0 0
    %4956 = vmatpush1.bf16.msra.mxu0 0
    %4957 = vmatprep.subr.bf16.mxu0 0
    %4958 = vmatpush1.bf16.msra.mxu0 0
    %4959 = vmatprep.subr.bf16.mxu0 0
    %4960 = vmatpush1.bf16.msra.mxu0 0
    %4961 = vmatprep.subr.bf16.mxu0 0
    %4962 = vmatpush1.bf16.msra.mxu0 0
    %4963 = vmatprep.subr.bf16.mxu0 0
    %4964 = vmatpush1.bf16.msra.mxu0 0
    %4965 = vmatprep.subr.bf16.mxu0 0
    %4966 = vmatpush1.bf16.msra.mxu0 0
    %4967 = vmatprep.subr.bf16.mxu0 0
    %4968 = vmatpush1.bf16.msra.mxu0 0
    %4969 = vmatprep.mubr.bf16.mxu0 0
    %4970 = vmatmul.mubr.bf16.gmra.mrb[0].mxu0 %v4865
    %v4971 = vpop.f32.mrb[0].mxu0
    %v4972 = vadd.f32 %v4887, %v4971
    %v4973 = vpop.f32.mrb[0].mxu0
    %v4974 = vpop.f32.mrb[0].mxu0
    %v4975 = vpop.f32.mrb[0].mxu0
    %4976 = vdwg.mxu0
    %4977 = vst [vmem:[#allocation19] sm:$0xff] %v4972
    // Predicated region
    $region82: #{tpu_custom_call.1} parent=1 // pred_check
      _
    $region83: #{tpu_custom_call.1} parent=1 // pred_check_branch
      %4979 = sbr.rel (0) target = $region85
    $region84: #{tpu_custom_call.1} parent=1 // pred_region
      %s4981 = ssub.s32 128, 128
      %4982 = vsyncadd [#allocation4], %s4981
      %s4984 = sshll.u32 [#allocation19], 4
      %s4985 = int_to_ptr.vmem [resolvable:$true] %s4984
      %4987 = dma.vmem_to_hbm [thread:$0]  %s4985, 128, %s10, [#allocation4]
    $region85: #{tpu_custom_call.1} parent=1 // pred_fallthru
      _
    // Predicated region
    $region86: #{tpu_custom_call.1} parent=1 // pred_check
      _
    $region87: #{tpu_custom_call.1} parent=1 // pred_check_branch
      %4989 = sbr.rel (0) target = $region89
    $region88: #{tpu_custom_call.1} parent=1 // pred_region
      %4990 = dma.done [#allocation4], 128
    $region89: #{tpu_custom_call.1} parent=1 // pred_fallthru
      _
    %4991 = vsyncpa [#allocation3], 1
    %4992 = vsyncpa [#allocation6], 1
    %4993 = vsyncpa [#allocation9], 1
    %4994 = vsyncpa [#allocation12], 1
    %4995 = vsyncpa [#allocation15], 1
    %4996 = vsyncpa [#allocation18], 1
    %4997 = vsyncpa [#allocation4], 1

</llo_original>
